<compile_context>
chip_gen: v6e
topology: v6e:2x2x1
jax: 0.10.0
libtpu: 0.0.40
codegen_flags: <defaults>
</compile_context>

<pallas_src>
import jax
import jax.numpy as jnp
from jax import lax
from jax.experimental import pallas as pl
from jax.experimental.pallas import tpu as pltpu
import numpy as np

LANE = 128      # lane tile (last dim)
SUBLANE = 8     # sublane tile (second-to-last dim)


def _round_up(x, m):
    return ((x + m - 1) // m) * m


def _sigmoid(x):
    # sigmoid(x) = 0.5*tanh(0.5*x) + 0.5 : a single EUP op instead of exp + reciprocal.
    return 0.5 * jnp.tanh(0.5 * x) + 0.5


def _build_kernel(T, TC, Bp, Hp, num_chunks, unroll):
    """Kernel closure over static shape/schedule constants."""
    H4 = 4 * Hp
    last_local = (T - 1) % TC    # row-block (within the last chunk) holding h2 at step T-1

    def kernel(x_ref,                       # (TC*Bp, Ip) bf16, time-major chunk
               wih1_ref, b1_ref,            # (Ip, 4Hp) bf16, (1, 4Hp) f32
               wbig_ref, b2_ref,            # (2Hp, 8Hp) bf16, (1, 4Hp) f32
               wfc_ref, bfc_ref,            # (Hp, Ip) bf16, (1, Ip) f32
               dec_ref, hlast_ref,          # (TC*Bp, Ip) f32, (Bp, Hp) f32
               xp_ref, h2a_ref,             # scratch (TC*Bp, 4Hp) f32, (TC*Bp, Hp) f32
               rec1_ref, c1_ref, h2s_ref, c2_ref):   # state carries (f32)
        chunk = pl.program_id(0)
        is_last_chunk = chunk == num_chunks - 1

        @pl.when(chunk == 0)
        def _():
            rec1_ref[...] = jnp.zeros_like(rec1_ref)
            c1_ref[...] = jnp.zeros_like(c1_ref)
            h2s_ref[...] = jnp.zeros_like(h2s_ref)
            c2_ref[...] = jnp.zeros_like(c2_ref)

        # ---- Pre-pass: layer-1 input projection (+ bias) for the whole chunk (one matmul) --
        xp_ref[...] = (jnp.dot(x_ref[...], wih1_ref[...],
                               preferred_element_type=jnp.float32) + b1_ref[...])

        # ---- Hoist loop-invariant weight load and bias broadcast out of the recurrence ----
        wbig = wbig_ref[...]
        b2b = jnp.broadcast_to(b2_ref[...], (Bp, H4))

        def gate_act(g, c):
            # PyTorch gate order i, f, g, o; Hp = 128 so every slice is whole vregs.
            i = _sigmoid(g[:, 0 * Hp:1 * Hp])
            f = _sigmoid(g[:, 1 * Hp:2 * Hp])
            gg = jnp.tanh(g[:, 2 * Hp:3 * Hp])
            o = _sigmoid(g[:, 3 * Hp:4 * Hp])
            c_new = f * c + i * gg
            return o * jnp.tanh(c_new), c_new

        def step(t, carry):
            rec1, c1, h2, c2 = carry
            r = pl.multiple_of(t * Bp, SUBLANE)
            # Layer 1: input proj precomputed; recurrent term precomputed at step t-1.
            g1 = xp_ref[pl.ds(r, Bp), :] + rec1
            h1, c1 = gate_act(g1, c1)
            # Skewed fused matmul: [h1(t) | h2(t-1)] @ [[Wih2, Whh1], [Whh2, 0]]
            #   columns [:4Hp]  -> layer-2 gate pre-activation (minus bias)
            #   columns [4Hp:]  -> Whh1 @ h1(t)   (layer-1 recurrence for step t+1)
            hin = jnp.concatenate([h1.astype(jnp.bfloat16),
                                   h2.astype(jnp.bfloat16)], axis=-1)
            big = jnp.dot(hin, wbig, preferred_element_type=jnp.float32)
            g2 = big[:, :H4] + b2b
            rec1_next = big[:, H4:]
            h2, c2 = gate_act(g2, c2)
            h2a_ref[pl.ds(r, Bp), :] = h2
            return (rec1_next, c1, h2, c2)

        carry0 = (rec1_ref[...], c1_ref[...], h2s_ref[...], c2_ref[...])
        rec1, c1, h2, c2 = lax.fori_loop(0, TC, step, carry0, unroll=unroll)
        rec1_ref[...] = rec1
        c1_ref[...] = c1
        h2s_ref[...] = h2
        c2_ref[...] = c2

        # hidden_state[-1] = h2 at the real last step (padded time steps are ignored).
        @pl.when(is_last_chunk)
        def _():
            hlast_ref[...] = h2a_ref[last_local * Bp:(last_local + 1) * Bp, :]

        # ---- Batched TimeDistributed FC: one matmul + one lane-dense store per chunk ----
        dec_ref[...] = (jnp.dot(h2a_ref[...].astype(jnp.bfloat16), wfc_ref[...],
                                preferred_element_type=jnp.float32) + bfc_ref[...])

    return kernel


def prepare_kernel_params(p, input_size, hidden_size):
    """PyTorch-layout params -> transposed, per-gate zero-padded, bf16 kernel params."""
    H, I = hidden_size, input_size
    Hp = _round_up(H, LANE)
    Ip = _round_up(I, LANE)

    def pad_gates_t(w, rows):            # torch (4H, in) -> (rows, 4Hp), per-gate padded
        in_dim = w.shape[1]
        out = jnp.zeros((rows, 4 * Hp), jnp.float32)
        for g in range(4):
            out = out.at[:in_dim, g * Hp:g * Hp + H].set(w[g * H:(g + 1) * H, :].T)
        return out

    def pad_gate_bias(b):                # (4H,) -> (1, 4Hp)
        out = jnp.zeros((1, 4 * Hp), jnp.float32)
        for g in range(4):
            out = out.at[0, g * Hp:g * Hp + H].set(b[g * H:(g + 1) * H])
        return out

    wih1 = pad_gates_t(p["w_ih_l0"], Ip)                      # (Ip, 4Hp)
    whh1 = pad_gates_t(p["w_hh_l0"], Hp)                      # (Hp, 4Hp)
    b1 = pad_gate_bias(p["b_ih_l0"] + p["b_hh_l0"])           # (1, 4Hp)

    wih2 = pad_gates_t(p["w_ih_l1"], Hp)                      # (Hp, 4Hp)
    whh2 = pad_gates_t(p["w_hh_l1"], Hp)                      # (Hp, 4Hp)
    b2 = pad_gate_bias(p["b_ih_l1"] + p["b_hh_l1"])           # (1, 4Hp)

    # Skew-fused per-step weight: [h1 | h2_prev] @ wbig -> [gates2_lin | Whh1 @ h1]
    wbig = jnp.zeros((2 * Hp, 8 * Hp), jnp.float32)
    wbig = wbig.at[:Hp, :4 * Hp].set(wih2)
    wbig = wbig.at[Hp:, :4 * Hp].set(whh2)
    wbig = wbig.at[:Hp, 4 * Hp:].set(whh1)

    wfc = jnp.zeros((Hp, Ip), jnp.float32).at[:H, :I].set(p["w_fc"].T)
    bfc = jnp.zeros((1, Ip), jnp.float32).at[0, :I].set(p["b_fc"])

    weights = [wih1.astype(jnp.bfloat16), b1,
               wbig.astype(jnp.bfloat16), b2,
               wfc.astype(jnp.bfloat16), bfc]
    return weights, Hp, Ip


def _pick_time_chunk(T, Bp, Ip, Hp, budget_bytes=12 * 1024 * 1024):
    """Timesteps per chunk so chunk-resident slabs stay inside a VMEM budget (v7x-safe)."""
    # per (timestep, padded batch row): x chunk (bf16, x2 buffers) + dec chunk (f32, x2)
    #                                   + xp scratch (f32, 4Hp) + h2a scratch (f32, Hp)
    per_step = Bp * (2 * Ip * 2 + 4 * Ip * 2 + 4 * Hp * 4 + Hp * 4)
    tc = max(1, budget_bytes // per_step)
    tc = min(tc, 256, T)
    if tc < T:
        tc = max(2, tc - (tc % 2))      # even chunk keeps the bf16 x block tile-friendly
    return tc


def lstm_ae_forward(x, torch_params):
    """x: (B, T, input_size) float32, batch_first like the PyTorch module.
    Returns (dec_out (B,T,I), hidden_state[-1] (B,H))."""
    B, T, I = x.shape
    H = torch_params["w_hh_l0"].shape[1]
    Bp = _round_up(B, SUBLANE)

    weights, Hp, Ip = prepare_kernel_params(torch_params, I, H)
    TC = _pick_time_chunk(T, Bp, Ip, Hp)
    Tpad = _round_up(T, TC)
    num_chunks = Tpad // TC
    chunk_rows = TC * Bp

    # Time-major; pad batch -> Bp (sublane tile), input -> Ip (lane-dense), time -> Tpad.
    x_tm = jnp.transpose(x, (1, 0, 2))                               # (T, B, I)
    x_tm = jnp.pad(x_tm, ((0, Tpad - T), (0, Bp - B), (0, Ip - I)))
    x2d = x_tm.reshape(Tpad * Bp, Ip).astype(jnp.bfloat16)           # (Tpad*Bp, Ip) bf16

    in_arrays = [x2d] + weights

    def resident(shape):
        nd = len(shape)
        return pl.BlockSpec(shape, lambda c, _nd=nd: (0,) * _nd)

    in_specs = ([pl.BlockSpec((chunk_rows, Ip), lambda c: (c, 0))] +
                [resident(w.shape) for w in weights])
    out_specs = [pl.BlockSpec((chunk_rows, Ip), lambda c: (c, 0)),
                 resident((Bp, Hp))]

    kernel = _build_kernel(T=T, TC=TC, Bp=Bp, Hp=Hp,
                           num_chunks=num_chunks, unroll=min(TC, 8))

    grid_spec = pltpu.PrefetchScalarGridSpec(
        num_scalar_prefetch=0,
        grid=(num_chunks,),                      # sequential recurrence over T-chunks
        in_specs=in_specs,
        out_specs=out_specs,
        scratch_shapes=[
            pltpu.VMEM((chunk_rows, 4 * Hp), jnp.float32),   # xp: layer-1 input projection
            pltpu.VMEM((chunk_rows, Hp), jnp.float32),       # h2a: all h2_t of the chunk
            pltpu.VMEM((Bp, 4 * Hp), jnp.float32),           # rec1 carry (Whh1 @ h1)
            pltpu.VMEM((Bp, Hp), jnp.float32),               # c1 carry
            pltpu.VMEM((Bp, Hp), jnp.float32),               # h2 carry
            pltpu.VMEM((Bp, Hp), jnp.float32),               # c2 carry
        ],
    )

    dec_p, hlast_p = pl.pallas_call(
        kernel,
        out_shape=(jax.ShapeDtypeStruct((Tpad * Bp, Ip), jnp.float32),
                   jax.ShapeDtypeStruct((Bp, Hp), jnp.float32)),
        grid_spec=grid_spec,
        compiler_params=pltpu.CompilerParams(
            dimension_semantics=("arbitrary",),
            vmem_limit_bytes=48 * 1024 * 1024,
        ),
    )(*in_arrays)

    dec = dec_p.reshape(Tpad, Bp, Ip)[:T, :B, :I]        # strip time/batch/lane padding
    dec_out = jnp.transpose(dec, (1, 0, 2))              # (B, T, I)
    h_last = hlast_p[:B, :H]                             # hidden_state[-1]
    return dec_out, h_last


def init_torch_params(key, input_size, hidden_size):
    """Deterministic synthetic init, PyTorch layout, uniform(-1/sqrt(H), 1/sqrt(H))."""
    H, I = hidden_size, input_size
    k = 1.0 / np.sqrt(H)
    ks = jax.random.split(key, 10)
    u = lambda kk, shape: jax.random.uniform(kk, shape, jnp.float32, -k, k)
    return {
        "w_ih_l0": u(ks[0], (4 * H, I)),
        "w_hh_l0": u(ks[1], (4 * H, H)),
        "b_ih_l0": u(ks[2], (4 * H,)),
        "b_hh_l0": u(ks[3], (4 * H,)),
        "w_ih_l1": u(ks[4], (4 * H, H)),
        "w_hh_l1": u(ks[5], (4 * H, H)),
        "b_ih_l1": u(ks[6], (4 * H,)),
        "b_hh_l1": u(ks[7], (4 * H,)),
        "w_fc":    u(ks[8], (I, H)),
        "b_fc":    u(ks[9], (I,)),
    }


def lstm_ae_reference(x, p):
    """Pure-JAX f32 reference (unpadded, PyTorch semantics) for correctness checking."""
    B, T, I = x.shape
    H = p["w_hh_l0"].shape[1]

    def cell(x_in, h, c, w_ih, w_hh, b_ih, b_hh):
        gates = x_in @ w_ih.T + h @ w_hh.T + b_ih + b_hh
        i = jax.nn.sigmoid(gates[:, 0 * H:1 * H])
        f = jax.nn.sigmoid(gates[:, 1 * H:2 * H])
        g = jnp.tanh(gates[:, 2 * H:3 * H])
        o = jax.nn.sigmoid(gates[:, 3 * H:4 * H])
        c_new = f * c + i * g
        return o * jnp.tanh(c_new), c_new

    def step(carry, x_t):
        h1, c1, h2, c2 = carry
        h1, c1 = cell(x_t, h1, c1, p["w_ih_l0"], p["w_hh_l0"], p["b_ih_l0"], p["b_hh_l0"])
        h2, c2 = cell(h1, h2, c2, p["w_ih_l1"], p["w_hh_l1"], p["b_ih_l1"], p["b_hh_l1"])
        y = h2 @ p["w_fc"].T + p["b_fc"]
        return (h1, c1, h2, c2), y

    zeros = jnp.zeros((B, H), jnp.float32)
    (h1, c1, h2, c2), ys = lax.scan(step, (zeros,) * 4, jnp.transpose(x, (1, 0, 2)))
    return jnp.transpose(ys, (1, 0, 2)), h2


if __name__ == "__main__":
    B, T, I, H = 2, 8, 16, 32   # batch, seq, input_size, hidden_size
    key = jax.random.PRNGKey(0)
    kx, kp = jax.random.split(key)
    x = jax.random.normal(kx, (B, T, I), jnp.float32)
    torch_params = init_torch_params(kp, I, H)

    fwd = jax.jit(lambda xx: lstm_ae_forward(xx, torch_params))
    dec_out, h_last = fwd(x)
    jax.block_until_ready((dec_out, h_last))

    ref_dec, ref_h = lstm_ae_reference(x, torch_params)
    assert dec_out.shape == (B, T, I) and h_last.shape == (B, H)
    # bf16 matmul operands => looser tolerance than the pure-f32 version.
    np.testing.assert_allclose(np.asarray(dec_out), np.asarray(ref_dec),
                               rtol=3e-2, atol=3e-2)
    np.testing.assert_allclose(np.asarray(h_last), np.asarray(ref_h),
                               rtol=3e-2, atol=3e-2)
    print("KERNEL_OK")
</pallas_src>

<mosaic_0001>
module attributes {stable_mosaic.version = 11 : i64} {
  func.func @kernel(%arg0: i32, %arg1: memref<64x128xbf16, #tpu.memory_space<vmem>>, %arg2: memref<128x512xbf16, #tpu.memory_space<vmem>>, %arg3: memref<1x512xf32, #tpu.memory_space<vmem>>, %arg4: memref<256x1024xbf16, #tpu.memory_space<vmem>>, %arg5: memref<1x512xf32, #tpu.memory_space<vmem>>, %arg6: memref<128x128xbf16, #tpu.memory_space<vmem>>, %arg7: memref<1x128xf32, #tpu.memory_space<vmem>>, %arg8: memref<64x128xf32, #tpu.memory_space<vmem>>, %arg9: memref<8x128xf32, #tpu.memory_space<vmem>>, %arg10: memref<64x512xf32, #tpu.memory_space<vmem>>, %arg11: memref<64x128xf32, #tpu.memory_space<vmem>>, %arg12: memref<8x512xf32, #tpu.memory_space<vmem>>, %arg13: memref<8x128xf32, #tpu.memory_space<vmem>>, %arg14: memref<8x128xf32, #tpu.memory_space<vmem>>, %arg15: memref<8x128xf32, #tpu.memory_space<vmem>>) attributes {dimension_semantics = [#tpu.dimension_semantics<arbitrary>], iteration_bounds = array<i64: 1>, scalar_prefetch = 0 : i64, scratch_operands = 6 : i64, tpu.core_type = #tpu.core_type<tc>, window_params = [{transform_indices = @transform_0, window_bounds = array<i64: 64, 128>}, {pipeline_mode = #tpu.pipeline_mode<synchronous>, transform_indices = @transform_1, window_bounds = array<i64: 128, 512>}, {pipeline_mode = #tpu.pipeline_mode<synchronous>, transform_indices = @transform_2, window_bounds = array<i64: 1, 512>}, {pipeline_mode = #tpu.pipeline_mode<synchronous>, transform_indices = @transform_3, window_bounds = array<i64: 256, 1024>}, {pipeline_mode = #tpu.pipeline_mode<synchronous>, transform_indices = @transform_4, window_bounds = array<i64: 1, 512>}, {pipeline_mode = #tpu.pipeline_mode<synchronous>, transform_indices = @transform_5, window_bounds = array<i64: 128, 128>}, {pipeline_mode = #tpu.pipeline_mode<synchronous>, transform_indices = @transform_6, window_bounds = array<i64: 1, 128>}, {transform_indices = @transform_7, window_bounds = array<i64: 64, 128>}, {pipeline_mode = #tpu.pipeline_mode<synchronous>, transform_indices = @transform_8, window_bounds = array<i64: 8, 128>}]} {
    %c0_i32 = arith.constant 0 : i32
    %0 = arith.cmpi eq, %arg0, %c0_i32 : i32
    %c0_i32_0 = arith.constant 0 : i32
    %1 = arith.cmpi eq, %arg0, %c0_i32_0 : i32
    %2 = arith.extui %1 : i1 to i32
    %c0_i32_1 = arith.constant 0 : i32
    %3 = arith.cmpi ne, %2, %c0_i32_1 : i32
    scf.if %3 {
      %cst_216 = arith.constant 0.000000e+00 : f32
      %641 = vector.broadcast %cst_216 : f32 to vector<8x512xf32>
      %c0_217 = arith.constant 0 : index
      %c0_218 = arith.constant 0 : index
      %642 = vector.load %arg12[%c0_217, %c0_218] : memref<8x512xf32, #tpu.memory_space<vmem>>, vector<8x512xf32>
      tpu.vector_store %arg12[%c0_217, %c0_218], %641 {strides = array<i32>} : memref<8x512xf32, #tpu.memory_space<vmem>>, vector<8x512xf32>,
      %cst_219 = arith.constant 0.000000e+00 : f32
      %643 = vector.broadcast %cst_219 : f32 to vector<8x128xf32>
      %c0_220 = arith.constant 0 : index
      %c0_221 = arith.constant 0 : index
      %644 = vector.load %arg13[%c0_220, %c0_221] : memref<8x128xf32, #tpu.memory_space<vmem>>, vector<8x128xf32>
      tpu.vector_store %arg13[%c0_220, %c0_221], %643 {strides = array<i32>} : memref<8x128xf32, #tpu.memory_space<vmem>>, vector<8x128xf32>,
      %cst_222 = arith.constant 0.000000e+00 : f32
      %645 = vector.broadcast %cst_222 : f32 to vector<8x128xf32>
      %c0_223 = arith.constant 0 : index
      %c0_224 = arith.constant 0 : index
      %646 = vector.load %arg14[%c0_223, %c0_224] : memref<8x128xf32, #tpu.memory_space<vmem>>, vector<8x128xf32>
      tpu.vector_store %arg14[%c0_223, %c0_224], %645 {strides = array<i32>} : memref<8x128xf32, #tpu.memory_space<vmem>>, vector<8x128xf32>,
      %cst_225 = arith.constant 0.000000e+00 : f32
      %647 = vector.broadcast %cst_225 : f32 to vector<8x128xf32>
      %c0_226 = arith.constant 0 : index
      %c0_227 = arith.constant 0 : index
      %648 = vector.load %arg15[%c0_226, %c0_227] : memref<8x128xf32, #tpu.memory_space<vmem>>, vector<8x128xf32>
      tpu.vector_store %arg15[%c0_226, %c0_227], %647 {strides = array<i32>} : memref<8x128xf32, #tpu.memory_space<vmem>>, vector<8x128xf32>,
    } else {
    }
    %c0 = arith.constant 0 : index
    %c0_2 = arith.constant 0 : index
    %4 = vector.load %arg1[%c0, %c0_2] : memref<64x128xbf16, #tpu.memory_space<vmem>>, vector<64x128xbf16>
    %c0_3 = arith.constant 0 : index
    %c0_4 = arith.constant 0 : index
    %5 = vector.load %arg2[%c0_3, %c0_4] : memref<128x512xbf16, #tpu.memory_space<vmem>>, vector<128x512xbf16>
    %cst = arith.constant dense<0.000000e+00> : vector<64x512xf32>
    %6 = tpu.matmul %4, %5, %cst {dimension_numbers = #tpu.dot_dimension_numbers<[1], [0], [0], [1], [0, 0, 1, 1], [], []>} : vector<64x128xbf16>, vector<128x512xbf16>, vector<64x512xf32> -> vector<64x512xf32>
    %c0_5 = arith.constant 0 : index
    %c0_6 = arith.constant 0 : index
    %7 = vector.load %arg3[%c0_5, %c0_6] : memref<1x512xf32, #tpu.memory_space<vmem>>, vector<1x512xf32>
    %8 = vector.broadcast %7 : vector<1x512xf32> to vector<64x512xf32>
    %9 = arith.addf %6, %8 : vector<64x512xf32>
    %c0_7 = arith.constant 0 : index
    %c0_8 = arith.constant 0 : index
    %10 = vector.load %arg10[%c0_7, %c0_8] : memref<64x512xf32, #tpu.memory_space<vmem>>, vector<64x512xf32>
    tpu.vector_store %arg10[%c0_7, %c0_8], %9 {strides = array<i32>} : memref<64x512xf32, #tpu.memory_space<vmem>>, vector<64x512xf32>,
    %c0_9 = arith.constant 0 : index
    %c0_10 = arith.constant 0 : index
    %11 = vector.load %arg4[%c0_9, %c0_10] : memref<256x1024xbf16, #tpu.memory_space<vmem>>, vector<256x1024xbf16>
    %c0_11 = arith.constant 0 : index
    %c0_12 = arith.constant 0 : index
    %12 = vector.load %arg5[%c0_11, %c0_12] : memref<1x512xf32, #tpu.memory_space<vmem>>, vector<1x512xf32>
    %13 = vector.shape_cast %12 : vector<1x512xf32> to vector<1x512xf32>
    %14 = vector.broadcast %13 : vector<1x512xf32> to vector<8x512xf32>
    %c0_13 = arith.constant 0 : index
    %c0_14 = arith.constant 0 : index
    %15 = vector.load %arg12[%c0_13, %c0_14] : memref<8x512xf32, #tpu.memory_space<vmem>>, vector<8x512xf32>
    %c0_15 = arith.constant 0 : index
    %c0_16 = arith.constant 0 : index
    %16 = vector.load %arg13[%c0_15, %c0_16] : memref<8x128xf32, #tpu.memory_space<vmem>>, vector<8x128xf32>
    %c0_17 = arith.constant 0 : index
    %c0_18 = arith.constant 0 : index
    %17 = vector.load %arg14[%c0_17, %c0_18] : memref<8x128xf32, #tpu.memory_space<vmem>>, vector<8x128xf32>
    %c0_19 = arith.constant 0 : index
    %c0_20 = arith.constant 0 : index
    %18 = vector.load %arg15[%c0_19, %c0_20] : memref<8x128xf32, #tpu.memory_space<vmem>>, vector<8x128xf32>
    %c0_i32_21 = arith.constant 0 : i32
    %c8_i32 = arith.constant 8 : i32
    %19 = arith.muli %c0_i32_21, %c8_i32 : i32
    %20 = tpu.assume_multiple %19, 8 : i32
    %21 = arith.index_cast %20 : i32 to index
    %c0_22 = arith.constant 0 : index
    %22 = vector.load %arg10[%21, %c0_22] : memref<64x512xf32, #tpu.memory_space<vmem>>, vector<8x512xf32>
    %23 = arith.addf %22, %15 : vector<8x512xf32>
    %24 = vector.extract_strided_slice %23 {offsets = [0, 0], sizes = [8, 128], strides = [1, 1]} : vector<8x512xf32> to vector<8x128xf32>
    %cst_23 = arith.constant 5.000000e-01 : f32
    %25 = vector.broadcast %cst_23 : f32 to vector<8x128xf32>
    %26 = arith.mulf %25, %24 : vector<8x128xf32>
    %27 = math.tanh %26 : vector<8x128xf32>
    %cst_24 = arith.constant 5.000000e-01 : f32
    %28 = vector.broadcast %cst_24 : f32 to vector<8x128xf32>
    %29 = arith.mulf %28, %27 : vector<8x128xf32>
    %cst_25 = arith.constant 5.000000e-01 : f32
    %30 = vector.broadcast %cst_25 : f32 to vector<8x128xf32>
    %31 = arith.addf %29, %30 : vector<8x128xf32>
    %32 = vector.extract_strided_slice %23 {offsets = [0, 128], sizes = [8, 128], strides = [1, 1]} : vector<8x512xf32> to vector<8x128xf32>
    %cst_26 = arith.constant 5.000000e-01 : f32
    %33 = vector.broadcast %cst_26 : f32 to vector<8x128xf32>
    %34 = arith.mulf %33, %32 : vector<8x128xf32>
    %35 = math.tanh %34 : vector<8x128xf32>
    %cst_27 = arith.constant 5.000000e-01 : f32
    %36 = vector.broadcast %cst_27 : f32 to vector<8x128xf32>
    %37 = arith.mulf %36, %35 : vector<8x128xf32>
    %cst_28 = arith.constant 5.000000e-01 : f32
    %38 = vector.broadcast %cst_28 : f32 to vector<8x128xf32>
    %39 = arith.addf %37, %38 : vector<8x128xf32>
    %40 = vector.extract_strided_slice %23 {offsets = [0, 256], sizes = [8, 128], strides = [1, 1]} : vector<8x512xf32> to vector<8x128xf32>
    %41 = math.tanh %40 : vector<8x128xf32>
    %42 = vector.extract_strided_slice %23 {offsets = [0, 384], sizes = [8, 128], strides = [1, 1]} : vector<8x512xf32> to vector<8x128xf32>
    %cst_29 = arith.constant 5.000000e-01 : f32
    %43 = vector.broadcast %cst_29 : f32 to vector<8x128xf32>
    %44 = arith.mulf %43, %42 : vector<8x128xf32>
    %45 = math.tanh %44 : vector<8x128xf32>
    %cst_30 = arith.constant 5.000000e-01 : f32
    %46 = vector.broadcast %cst_30 : f32 to vector<8x128xf32>
    %47 = arith.mulf %46, %45 : vector<8x128xf32>
    %cst_31 = arith.constant 5.000000e-01 : f32
    %48 = vector.broadcast %cst_31 : f32 to vector<8x128xf32>
    %49 = arith.addf %47, %48 : vector<8x128xf32>
    %50 = arith.mulf %39, %16 : vector<8x128xf32>
    %51 = arith.mulf %31, %41 : vector<8x128xf32>
    %52 = arith.addf %50, %51 : vector<8x128xf32>
    %53 = math.tanh %52 : vector<8x128xf32>
    %54 = arith.mulf %49, %53 : vector<8x128xf32>
    %55 = arith.truncf %54 : vector<8x128xf32> to vector<8x128xbf16>
    %56 = arith.truncf %17 : vector<8x128xf32> to vector<8x128xbf16>
    %57 = tpu.concatenate %55, %56 in 1 : vector<8x128xbf16>, vector<8x128xbf16> -> vector<8x256xbf16>
    %cst_32 = arith.constant dense<0.000000e+00> : vector<8x1024xf32>
    %58 = tpu.matmul %57, %11, %cst_32 {dimension_numbers = #tpu.dot_dimension_numbers<[1], [0], [0], [1], [0, 0, 1, 1], [], []>} : vector<8x256xbf16>, vector<256x1024xbf16>, vector<8x1024xf32> -> vector<8x1024xf32>
    %59 = vector.extract_strided_slice %58 {offsets = [0, 0], sizes = [8, 512], strides = [1, 1]} : vector<8x1024xf32> to vector<8x512xf32>
    %60 = arith.addf %59, %14 : vector<8x512xf32>
    %61 = vector.extract_strided_slice %58 {offsets = [0, 512], sizes = [8, 512], strides = [1, 1]} : vector<8x1024xf32> to vector<8x512xf32>
    %62 = vector.extract_strided_slice %60 {offsets = [0, 0], sizes = [8, 128], strides = [1, 1]} : vector<8x512xf32> to vector<8x128xf32>
    %cst_33 = arith.constant 5.000000e-01 : f32
    %63 = vector.broadcast %cst_33 : f32 to vector<8x128xf32>
    %64 = arith.mulf %63, %62 : vector<8x128xf32>
    %65 = math.tanh %64 : vector<8x128xf32>
    %cst_34 = arith.constant 5.000000e-01 : f32
    %66 = vector.broadcast %cst_34 : f32 to vector<8x128xf32>
    %67 = arith.mulf %66, %65 : vector<8x128xf32>
    %cst_35 = arith.constant 5.000000e-01 : f32
    %68 = vector.broadcast %cst_35 : f32 to vector<8x128xf32>
    %69 = arith.addf %67, %68 : vector<8x128xf32>
    %70 = vector.extract_strided_slice %60 {offsets = [0, 128], sizes = [8, 128], strides = [1, 1]} : vector<8x512xf32> to vector<8x128xf32>
    %cst_36 = arith.constant 5.000000e-01 : f32
    %71 = vector.broadcast %cst_36 : f32 to vector<8x128xf32>
    %72 = arith.mulf %71, %70 : vector<8x128xf32>
    %73 = math.tanh %72 : vector<8x128xf32>
    %cst_37 = arith.constant 5.000000e-01 : f32
    %74 = vector.broadcast %cst_37 : f32 to vector<8x128xf32>
    %75 = arith.mulf %74, %73 : vector<8x128xf32>
    %cst_38 = arith.constant 5.000000e-01 : f32
    %76 = vector.broadcast %cst_38 : f32 to vector<8x128xf32>
    %77 = arith.addf %75, %76 : vector<8x128xf32>
    %78 = vector.extract_strided_slice %60 {offsets = [0, 256], sizes = [8, 128], strides = [1, 1]} : vector<8x512xf32> to vector<8x128xf32>
    %79 = math.tanh %78 : vector<8x128xf32>
    %80 = vector.extract_strided_slice %60 {offsets = [0, 384], sizes = [8, 128], strides = [1, 1]} : vector<8x512xf32> to vector<8x128xf32>
    %cst_39 = arith.constant 5.000000e-01 : f32
    %81 = vector.broadcast %cst_39 : f32 to vector<8x128xf32>
    %82 = arith.mulf %81, %80 : vector<8x128xf32>
    %83 = math.tanh %82 : vector<8x128xf32>
    %cst_40 = arith.constant 5.000000e-01 : f32
    %84 = vector.broadcast %cst_40 : f32 to vector<8x128xf32>
    %85 = arith.mulf %84, %83 : vector<8x128xf32>
    %cst_41 = arith.constant 5.000000e-01 : f32
    %86 = vector.broadcast %cst_41 : f32 to vector<8x128xf32>
    %87 = arith.addf %85, %86 : vector<8x128xf32>
    %88 = arith.mulf %77, %18 : vector<8x128xf32>
    %89 = arith.mulf %69, %79 : vector<8x128xf32>
    %90 = arith.addf %88, %89 : vector<8x128xf32>
    %91 = math.tanh %90 : vector<8x128xf32>
    %92 = arith.mulf %87, %91 : vector<8x128xf32>
    %93 = arith.index_cast %20 : i32 to index
    %c0_42 = arith.constant 0 : index
    %94 = vector.load %arg11[%93, %c0_42] : memref<64x128xf32, #tpu.memory_space<vmem>>, vector<8x128xf32>
    tpu.vector_store %arg11[%93, %c0_42], %92 {strides = array<i32>} : memref<64x128xf32, #tpu.memory_space<vmem>>, vector<8x128xf32>,
    %c1_i32 = arith.constant 1 : i32
    %c8_i32_43 = arith.constant 8 : i32
    %95 = arith.muli %c1_i32, %c8_i32_43 : i32
    %96 = tpu.assume_multiple %95, 8 : i32
    %97 = arith.index_cast %96 : i32 to index
    %c0_44 = arith.constant 0 : index
    %98 = vector.load %arg10[%97, %c0_44] : memref<64x512xf32, #tpu.memory_space<vmem>>, vector<8x512xf32>
    %99 = arith.addf %98, %61 : vector<8x512xf32>
    %100 = vector.extract_strided_slice %99 {offsets = [0, 0], sizes = [8, 128], strides = [1, 1]} : vector<8x512xf32> to vector<8x128xf32>
    %cst_45 = arith.constant 5.000000e-01 : f32
    %101 = vector.broadcast %cst_45 : f32 to vector<8x128xf32>
    %102 = arith.mulf %101, %100 : vector<8x128xf32>
    %103 = math.tanh %102 : vector<8x128xf32>
    %cst_46 = arith.constant 5.000000e-01 : f32
    %104 = vector.broadcast %cst_46 : f32 to vector<8x128xf32>
    %105 = arith.mulf %104, %103 : vector<8x128xf32>
    %cst_47 = arith.constant 5.000000e-01 : f32
    %106 = vector.broadcast %cst_47 : f32 to vector<8x128xf32>
    %107 = arith.addf %105, %106 : vector<8x128xf32>
    %108 = vector.extract_strided_slice %99 {offsets = [0, 128], sizes = [8, 128], strides = [1, 1]} : vector<8x512xf32> to vector<8x128xf32>
    %cst_48 = arith.constant 5.000000e-01 : f32
    %109 = vector.broadcast %cst_48 : f32 to vector<8x128xf32>
    %110 = arith.mulf %109, %108 : vector<8x128xf32>
    %111 = math.tanh %110 : vector<8x128xf32>
    %cst_49 = arith.constant 5.000000e-01 : f32
    %112 = vector.broadcast %cst_49 : f32 to vector<8x128xf32>
    %113 = arith.mulf %112, %111 : vector<8x128xf32>
    %cst_50 = arith.constant 5.000000e-01 : f32
    %114 = vector.broadcast %cst_50 : f32 to vector<8x128xf32>
    %115 = arith.addf %113, %114 : vector<8x128xf32>
    %116 = vector.extract_strided_slice %99 {offsets = [0, 256], sizes = [8, 128], strides = [1, 1]} : vector<8x512xf32> to vector<8x128xf32>
    %117 = math.tanh %116 : vector<8x128xf32>
    %118 = vector.extract_strided_slice %99 {offsets = [0, 384], sizes = [8, 128], strides = [1, 1]} : vector<8x512xf32> to vector<8x128xf32>
    %cst_51 = arith.constant 5.000000e-01 : f32
    %119 = vector.broadcast %cst_51 : f32 to vector<8x128xf32>
    %120 = arith.mulf %119, %118 : vector<8x128xf32>
    %121 = math.tanh %120 : vector<8x128xf32>
    %cst_52 = arith.constant 5.000000e-01 : f32
    %122 = vector.broadcast %cst_52 : f32 to vector<8x128xf32>
    %123 = arith.mulf %122, %121 : vector<8x128xf32>
    %cst_53 = arith.constant 5.000000e-01 : f32
    %124 = vector.broadcast %cst_53 : f32 to vector<8x128xf32>
    %125 = arith.addf %123, %124 : vector<8x128xf32>
    %126 = arith.mulf %115, %52 : vector<8x128xf32>
    %127 = arith.mulf %107, %117 : vector<8x128xf32>
    %128 = arith.addf %126, %127 : vector<8x128xf32>
    %129 = math.tanh %128 : vector<8x128xf32>
    %130 = arith.mulf %125, %129 : vector<8x128xf32>
    %131 = arith.truncf %130 : vector<8x128xf32> to vector<8x128xbf16>
    %132 = arith.truncf %92 : vector<8x128xf32> to vector<8x128xbf16>
    %133 = tpu.concatenate %131, %132 in 1 : vector<8x128xbf16>, vector<8x128xbf16> -> vector<8x256xbf16>
    %cst_54 = arith.constant dense<0.000000e+00> : vector<8x1024xf32>
    %134 = tpu.matmul %133, %11, %cst_54 {dimension_numbers = #tpu.dot_dimension_numbers<[1], [0], [0], [1], [0, 0, 1, 1], [], []>} : vector<8x256xbf16>, vector<256x1024xbf16>, vector<8x1024xf32> -> vector<8x1024xf32>
    %135 = vector.extract_strided_slice %134 {offsets = [0, 0], sizes = [8, 512], strides = [1, 1]} : vector<8x1024xf32> to vector<8x512xf32>
    %136 = arith.addf %135, %14 : vector<8x512xf32>
    %137 = vector.extract_strided_slice %134 {offsets = [0, 512], sizes = [8, 512], strides = [1, 1]} : vector<8x1024xf32> to vector<8x512xf32>
    %138 = vector.extract_strided_slice %136 {offsets = [0, 0], sizes = [8, 128], strides = [1, 1]} : vector<8x512xf32> to vector<8x128xf32>
    %cst_55 = arith.constant 5.000000e-01 : f32
    %139 = vector.broadcast %cst_55 : f32 to vector<8x128xf32>
    %140 = arith.mulf %139, %138 : vector<8x128xf32>
    %141 = math.tanh %140 : vector<8x128xf32>
    %cst_56 = arith.constant 5.000000e-01 : f32
    %142 = vector.broadcast %cst_56 : f32 to vector<8x128xf32>
    %143 = arith.mulf %142, %141 : vector<8x128xf32>
    %cst_57 = arith.constant 5.000000e-01 : f32
    %144 = vector.broadcast %cst_57 : f32 to vector<8x128xf32>
    %145 = arith.addf %143, %144 : vector<8x128xf32>
    %146 = vector.extract_strided_slice %136 {offsets = [0, 128], sizes = [8, 128], strides = [1, 1]} : vector<8x512xf32> to vector<8x128xf32>
    %cst_58 = arith.constant 5.000000e-01 : f32
    %147 = vector.broadcast %cst_58 : f32 to vector<8x128xf32>
    %148 = arith.mulf %147, %146 : vector<8x128xf32>
    %149 = math.tanh %148 : vector<8x128xf32>
    %cst_59 = arith.constant 5.000000e-01 : f32
    %150 = vector.broadcast %cst_59 : f32 to vector<8x128xf32>
    %151 = arith.mulf %150, %149 : vector<8x128xf32>
    %cst_60 = arith.constant 5.000000e-01 : f32
    %152 = vector.broadcast %cst_60 : f32 to vector<8x128xf32>
    %153 = arith.addf %151, %152 : vector<8x128xf32>
    %154 = vector.extract_strided_slice %136 {offsets = [0, 256], sizes = [8, 128], strides = [1, 1]} : vector<8x512xf32> to vector<8x128xf32>
    %155 = math.tanh %154 : vector<8x128xf32>
    %156 = vector.extract_strided_slice %136 {offsets = [0, 384], sizes = [8, 128], strides = [1, 1]} : vector<8x512xf32> to vector<8x128xf32>
    %cst_61 = arith.constant 5.000000e-01 : f32
    %157 = vector.broadcast %cst_61 : f32 to vector<8x128xf32>
    %158 = arith.mulf %157, %156 : vector<8x128xf32>
    %159 = math.tanh %158 : vector<8x128xf32>
    %cst_62 = arith.constant 5.000000e-01 : f32
    %160 = vector.broadcast %cst_62 : f32 to vector<8x128xf32>
    %161 = arith.mulf %160, %159 : vector<8x128xf32>
    %cst_63 = arith.constant 5.000000e-01 : f32
    %162 = vector.broadcast %cst_63 : f32 to vector<8x128xf32>
    %163 = arith.addf %161, %162 : vector<8x128xf32>
    %164 = arith.mulf %153, %90 : vector<8x128xf32>
    %165 = arith.mulf %145, %155 : vector<8x128xf32>
    %166 = arith.addf %164, %165 : vector<8x128xf32>
    %167 = math.tanh %166 : vector<8x128xf32>
    %168 = arith.mulf %163, %167 : vector<8x128xf32>
    %169 = arith.index_cast %96 : i32 to index
    %c0_64 = arith.constant 0 : index
    %170 = vector.load %arg11[%169, %c0_64] : memref<64x128xf32, #tpu.memory_space<vmem>>, vector<8x128xf32>
    tpu.vector_store %arg11[%169, %c0_64], %168 {strides = array<i32>} : memref<64x128xf32, #tpu.memory_space<vmem>>, vector<8x128xf32>,
    %c2_i32 = arith.constant 2 : i32
    %c8_i32_65 = arith.constant 8 : i32
    %171 = arith.muli %c2_i32, %c8_i32_65 : i32
    %172 = tpu.assume_multiple %171, 8 : i32
    %173 = arith.index_cast %172 : i32 to index
    %c0_66 = arith.constant 0 : index
    %174 = vector.load %arg10[%173, %c0_66] : memref<64x512xf32, #tpu.memory_space<vmem>>, vector<8x512xf32>
    %175 = arith.addf %174, %137 : vector<8x512xf32>
    %176 = vector.extract_strided_slice %175 {offsets = [0, 0], sizes = [8, 128], strides = [1, 1]} : vector<8x512xf32> to vector<8x128xf32>
    %cst_67 = arith.constant 5.000000e-01 : f32
    %177 = vector.broadcast %cst_67 : f32 to vector<8x128xf32>
    %178 = arith.mulf %177, %176 : vector<8x128xf32>
    %179 = math.tanh %178 : vector<8x128xf32>
    %cst_68 = arith.constant 5.000000e-01 : f32
    %180 = vector.broadcast %cst_68 : f32 to vector<8x128xf32>
    %181 = arith.mulf %180, %179 : vector<8x128xf32>
    %cst_69 = arith.constant 5.000000e-01 : f32
    %182 = vector.broadcast %cst_69 : f32 to vector<8x128xf32>
    %183 = arith.addf %181, %182 : vector<8x128xf32>
    %184 = vector.extract_strided_slice %175 {offsets = [0, 128], sizes = [8, 128], strides = [1, 1]} : vector<8x512xf32> to vector<8x128xf32>
    %cst_70 = arith.constant 5.000000e-01 : f32
    %185 = vector.broadcast %cst_70 : f32 to vector<8x128xf32>
    %186 = arith.mulf %185, %184 : vector<8x128xf32>
    %187 = math.tanh %186 : vector<8x128xf32>
    %cst_71 = arith.constant 5.000000e-01 : f32
    %188 = vector.broadcast %cst_71 : f32 to vector<8x128xf32>
    %189 = arith.mulf %188, %187 : vector<8x128xf32>
    %cst_72 = arith.constant 5.000000e-01 : f32
    %190 = vector.broadcast %cst_72 : f32 to vector<8x128xf32>
    %191 = arith.addf %189, %190 : vector<8x128xf32>
    %192 = vector.extract_strided_slice %175 {offsets = [0, 256], sizes = [8, 128], strides = [1, 1]} : vector<8x512xf32> to vector<8x128xf32>
    %193 = math.tanh %192 : vector<8x128xf32>
    %194 = vector.extract_strided_slice %175 {offsets = [0, 384], sizes = [8, 128], strides = [1, 1]} : vector<8x512xf32> to vector<8x128xf32>
    %cst_73 = arith.constant 5.000000e-01 : f32
    %195 = vector.broadcast %cst_73 : f32 to vector<8x128xf32>
    %196 = arith.mulf %195, %194 : vector<8x128xf32>
    %197 = math.tanh %196 : vector<8x128xf32>
    %cst_74 = arith.constant 5.000000e-01 : f32
    %198 = vector.broadcast %cst_74 : f32 to vector<8x128xf32>
    %199 = arith.mulf %198, %197 : vector<8x128xf32>
    %cst_75 = arith.constant 5.000000e-01 : f32
    %200 = vector.broadcast %cst_75 : f32 to vector<8x128xf32>
    %201 = arith.addf %199, %200 : vector<8x128xf32>
    %202 = arith.mulf %191, %128 : vector<8x128xf32>
    %203 = arith.mulf %183, %193 : vector<8x128xf32>
    %204 = arith.addf %202, %203 : vector<8x128xf32>
    %205 = math.tanh %204 : vector<8x128xf32>
    %206 = arith.mulf %201, %205 : vector<8x128xf32>
    %207 = arith.truncf %206 : vector<8x128xf32> to vector<8x128xbf16>
    %208 = arith.truncf %168 : vector<8x128xf32> to vector<8x128xbf16>
    %209 = tpu.concatenate %207, %208 in 1 : vector<8x128xbf16>, vector<8x128xbf16> -> vector<8x256xbf16>
    %cst_76 = arith.constant dense<0.000000e+00> : vector<8x1024xf32>
    %210 = tpu.matmul %209, %11, %cst_76 {dimension_numbers = #tpu.dot_dimension_numbers<[1], [0], [0], [1], [0, 0, 1, 1], [], []>} : vector<8x256xbf16>, vector<256x1024xbf16>, vector<8x1024xf32> -> vector<8x1024xf32>
    %211 = vector.extract_strided_slice %210 {offsets = [0, 0], sizes = [8, 512], strides = [1, 1]} : vector<8x1024xf32> to vector<8x512xf32>
    %212 = arith.addf %211, %14 : vector<8x512xf32>
    %213 = vector.extract_strided_slice %210 {offsets = [0, 512], sizes = [8, 512], strides = [1, 1]} : vector<8x1024xf32> to vector<8x512xf32>
    %214 = vector.extract_strided_slice %212 {offsets = [0, 0], sizes = [8, 128], strides = [1, 1]} : vector<8x512xf32> to vector<8x128xf32>
    %cst_77 = arith.constant 5.000000e-01 : f32
    %215 = vector.broadcast %cst_77 : f32 to vector<8x128xf32>
    %216 = arith.mulf %215, %214 : vector<8x128xf32>
    %217 = math.tanh %216 : vector<8x128xf32>
    %cst_78 = arith.constant 5.000000e-01 : f32
    %218 = vector.broadcast %cst_78 : f32 to vector<8x128xf32>
    %219 = arith.mulf %218, %217 : vector<8x128xf32>
    %cst_79 = arith.constant 5.000000e-01 : f32
    %220 = vector.broadcast %cst_79 : f32 to vector<8x128xf32>
    %221 = arith.addf %219, %220 : vector<8x128xf32>
    %222 = vector.extract_strided_slice %212 {offsets = [0, 128], sizes = [8, 128], strides = [1, 1]} : vector<8x512xf32> to vector<8x128xf32>
    %cst_80 = arith.constant 5.000000e-01 : f32
    %223 = vector.broadcast %cst_80 : f32 to vector<8x128xf32>
    %224 = arith.mulf %223, %222 : vector<8x128xf32>
    %225 = math.tanh %224 : vector<8x128xf32>
    %cst_81 = arith.constant 5.000000e-01 : f32
    %226 = vector.broadcast %cst_81 : f32 to vector<8x128xf32>
    %227 = arith.mulf %226, %225 : vector<8x128xf32>
    %cst_82 = arith.constant 5.000000e-01 : f32
    %228 = vector.broadcast %cst_82 : f32 to vector<8x128xf32>
    %229 = arith.addf %227, %228 : vector<8x128xf32>
    %230 = vector.extract_strided_slice %212 {offsets = [0, 256], sizes = [8, 128], strides = [1, 1]} : vector<8x512xf32> to vector<8x128xf32>
    %231 = math.tanh %230 : vector<8x128xf32>
    %232 = vector.extract_strided_slice %212 {offsets = [0, 384], sizes = [8, 128], strides = [1, 1]} : vector<8x512xf32> to vector<8x128xf32>
    %cst_83 = arith.constant 5.000000e-01 : f32
    %233 = vector.broadcast %cst_83 : f32 to vector<8x128xf32>
    %234 = arith.mulf %233, %232 : vector<8x128xf32>
    %235 = math.tanh %234 : vector<8x128xf32>
    %cst_84 = arith.constant 5.000000e-01 : f32
    %236 = vector.broadcast %cst_84 : f32 to vector<8x128xf32>
    %237 = arith.mulf %236, %235 : vector<8x128xf32>
    %cst_85 = arith.constant 5.000000e-01 : f32
    %238 = vector.broadcast %cst_85 : f32 to vector<8x128xf32>
    %239 = arith.addf %237, %238 : vector<8x128xf32>
    %240 = arith.mulf %229, %166 : vector<8x128xf32>
    %241 = arith.mulf %221, %231 : vector<8x128xf32>
    %242 = arith.addf %240, %241 : vector<8x128xf32>
    %243 = math.tanh %242 : vector<8x128xf32>
    %244 = arith.mulf %239, %243 : vector<8x128xf32>
    %245 = arith.index_cast %172 : i32 to index
    %c0_86 = arith.constant 0 : index
    %246 = vector.load %arg11[%245, %c0_86] : memref<64x128xf32, #tpu.memory_space<vmem>>, vector<8x128xf32>
    tpu.vector_store %arg11[%245, %c0_86], %244 {strides = array<i32>} : memref<64x128xf32, #tpu.memory_space<vmem>>, vector<8x128xf32>,
    %c3_i32 = arith.constant 3 : i32
    %c8_i32_87 = arith.constant 8 : i32
    %247 = arith.muli %c3_i32, %c8_i32_87 : i32
    %248 = tpu.assume_multiple %247, 8 : i32
    %249 = arith.index_cast %248 : i32 to index
    %c0_88 = arith.constant 0 : index
    %250 = vector.load %arg10[%249, %c0_88] : memref<64x512xf32, #tpu.memory_space<vmem>>, vector<8x512xf32>
    %251 = arith.addf %250, %213 : vector<8x512xf32>
    %252 = vector.extract_strided_slice %251 {offsets = [0, 0], sizes = [8, 128], strides = [1, 1]} : vector<8x512xf32> to vector<8x128xf32>
    %cst_89 = arith.constant 5.000000e-01 : f32
    %253 = vector.broadcast %cst_89 : f32 to vector<8x128xf32>
    %254 = arith.mulf %253, %252 : vector<8x128xf32>
    %255 = math.tanh %254 : vector<8x128xf32>
    %cst_90 = arith.constant 5.000000e-01 : f32
    %256 = vector.broadcast %cst_90 : f32 to vector<8x128xf32>
    %257 = arith.mulf %256, %255 : vector<8x128xf32>
    %cst_91 = arith.constant 5.000000e-01 : f32
    %258 = vector.broadcast %cst_91 : f32 to vector<8x128xf32>
    %259 = arith.addf %257, %258 : vector<8x128xf32>
    %260 = vector.extract_strided_slice %251 {offsets = [0, 128], sizes = [8, 128], strides = [1, 1]} : vector<8x512xf32> to vector<8x128xf32>
    %cst_92 = arith.constant 5.000000e-01 : f32
    %261 = vector.broadcast %cst_92 : f32 to vector<8x128xf32>
    %262 = arith.mulf %261, %260 : vector<8x128xf32>
    %263 = math.tanh %262 : vector<8x128xf32>
    %cst_93 = arith.constant 5.000000e-01 : f32
    %264 = vector.broadcast %cst_93 : f32 to vector<8x128xf32>
    %265 = arith.mulf %264, %263 : vector<8x128xf32>
    %cst_94 = arith.constant 5.000000e-01 : f32
    %266 = vector.broadcast %cst_94 : f32 to vector<8x128xf32>
    %267 = arith.addf %265, %266 : vector<8x128xf32>
    %268 = vector.extract_strided_slice %251 {offsets = [0, 256], sizes = [8, 128], strides = [1, 1]} : vector<8x512xf32> to vector<8x128xf32>
    %269 = math.tanh %268 : vector<8x128xf32>
    %270 = vector.extract_strided_slice %251 {offsets = [0, 384], sizes = [8, 128], strides = [1, 1]} : vector<8x512xf32> to vector<8x128xf32>
    %cst_95 = arith.constant 5.000000e-01 : f32
    %271 = vector.broadcast %cst_95 : f32 to vector<8x128xf32>
    %272 = arith.mulf %271, %270 : vector<8x128xf32>
    %273 = math.tanh %272 : vector<8x128xf32>
    %cst_96 = arith.constant 5.000000e-01 : f32
    %274 = vector.broadcast %cst_96 : f32 to vector<8x128xf32>
    %275 = arith.mulf %274, %273 : vector<8x128xf32>
    %cst_97 = arith.constant 5.000000e-01 : f32
    %276 = vector.broadcast %cst_97 : f32 to vector<8x128xf32>
    %277 = arith.addf %275, %276 : vector<8x128xf32>
    %278 = arith.mulf %267, %204 : vector<8x128xf32>
    %279 = arith.mulf %259, %269 : vector<8x128xf32>
    %280 = arith.addf %278, %279 : vector<8x128xf32>
    %281 = math.tanh %280 : vector<8x128xf32>
    %282 = arith.mulf %277, %281 : vector<8x128xf32>
    %283 = arith.truncf %282 : vector<8x128xf32> to vector<8x128xbf16>
    %284 = arith.truncf %244 : vector<8x128xf32> to vector<8x128xbf16>
    %285 = tpu.concatenate %283, %284 in 1 : vector<8x128xbf16>, vector<8x128xbf16> -> vector<8x256xbf16>
    %cst_98 = arith.constant dense<0.000000e+00> : vector<8x1024xf32>
    %286 = tpu.matmul %285, %11, %cst_98 {dimension_numbers = #tpu.dot_dimension_numbers<[1], [0], [0], [1], [0, 0, 1, 1], [], []>} : vector<8x256xbf16>, vector<256x1024xbf16>, vector<8x1024xf32> -> vector<8x1024xf32>
    %287 = vector.extract_strided_slice %286 {offsets = [0, 0], sizes = [8, 512], strides = [1, 1]} : vector<8x1024xf32> to vector<8x512xf32>
    %288 = arith.addf %287, %14 : vector<8x512xf32>
    %289 = vector.extract_strided_slice %286 {offsets = [0, 512], sizes = [8, 512], strides = [1, 1]} : vector<8x1024xf32> to vector<8x512xf32>
    %290 = vector.extract_strided_slice %288 {offsets = [0, 0], sizes = [8, 128], strides = [1, 1]} : vector<8x512xf32> to vector<8x128xf32>
    %cst_99 = arith.constant 5.000000e-01 : f32
    %291 = vector.broadcast %cst_99 : f32 to vector<8x128xf32>
    %292 = arith.mulf %291, %290 : vector<8x128xf32>
    %293 = math.tanh %292 : vector<8x128xf32>
    %cst_100 = arith.constant 5.000000e-01 : f32
    %294 = vector.broadcast %cst_100 : f32 to vector<8x128xf32>
    %295 = arith.mulf %294, %293 : vector<8x128xf32>
    %cst_101 = arith.constant 5.000000e-01 : f32
    %296 = vector.broadcast %cst_101 : f32 to vector<8x128xf32>
    %297 = arith.addf %295, %296 : vector<8x128xf32>
    %298 = vector.extract_strided_slice %288 {offsets = [0, 128], sizes = [8, 128], strides = [1, 1]} : vector<8x512xf32> to vector<8x128xf32>
    %cst_102 = arith.constant 5.000000e-01 : f32
    %299 = vector.broadcast %cst_102 : f32 to vector<8x128xf32>
    %300 = arith.mulf %299, %298 : vector<8x128xf32>
    %301 = math.tanh %300 : vector<8x128xf32>
    %cst_103 = arith.constant 5.000000e-01 : f32
    %302 = vector.broadcast %cst_103 : f32 to vector<8x128xf32>
    %303 = arith.mulf %302, %301 : vector<8x128xf32>
    %cst_104 = arith.constant 5.000000e-01 : f32
    %304 = vector.broadcast %cst_104 : f32 to vector<8x128xf32>
    %305 = arith.addf %303, %304 : vector<8x128xf32>
    %306 = vector.extract_strided_slice %288 {offsets = [0, 256], sizes = [8, 128], strides = [1, 1]} : vector<8x512xf32> to vector<8x128xf32>
    %307 = math.tanh %306 : vector<8x128xf32>
    %308 = vector.extract_strided_slice %288 {offsets = [0, 384], sizes = [8, 128], strides = [1, 1]} : vector<8x512xf32> to vector<8x128xf32>
    %cst_105 = arith.constant 5.000000e-01 : f32
    %309 = vector.broadcast %cst_105 : f32 to vector<8x128xf32>
    %310 = arith.mulf %309, %308 : vector<8x128xf32>
    %311 = math.tanh %310 : vector<8x128xf32>
    %cst_106 = arith.constant 5.000000e-01 : f32
    %312 = vector.broadcast %cst_106 : f32 to vector<8x128xf32>
    %313 = arith.mulf %312, %311 : vector<8x128xf32>
    %cst_107 = arith.constant 5.000000e-01 : f32
    %314 = vector.broadcast %cst_107 : f32 to vector<8x128xf32>
    %315 = arith.addf %313, %314 : vector<8x128xf32>
    %316 = arith.mulf %305, %242 : vector<8x128xf32>
    %317 = arith.mulf %297, %307 : vector<8x128xf32>
    %318 = arith.addf %316, %317 : vector<8x128xf32>
    %319 = math.tanh %318 : vector<8x128xf32>
    %320 = arith.mulf %315, %319 : vector<8x128xf32>
    %321 = arith.index_cast %248 : i32 to index
    %c0_108 = arith.constant 0 : index
    %322 = vector.load %arg11[%321, %c0_108] : memref<64x128xf32, #tpu.memory_space<vmem>>, vector<8x128xf32>
    tpu.vector_store %arg11[%321, %c0_108], %320 {strides = array<i32>} : memref<64x128xf32, #tpu.memory_space<vmem>>, vector<8x128xf32>,
    %c4_i32 = arith.constant 4 : i32
    %c8_i32_109 = arith.constant 8 : i32
    %323 = arith.muli %c4_i32, %c8_i32_109 : i32
    %324 = tpu.assume_multiple %323, 8 : i32
    %325 = arith.index_cast %324 : i32 to index
    %c0_110 = arith.constant 0 : index
    %326 = vector.load %arg10[%325, %c0_110] : memref<64x512xf32, #tpu.memory_space<vmem>>, vector<8x512xf32>
    %327 = arith.addf %326, %289 : vector<8x512xf32>
    %328 = vector.extract_strided_slice %327 {offsets = [0, 0], sizes = [8, 128], strides = [1, 1]} : vector<8x512xf32> to vector<8x128xf32>
    %cst_111 = arith.constant 5.000000e-01 : f32
    %329 = vector.broadcast %cst_111 : f32 to vector<8x128xf32>
    %330 = arith.mulf %329, %328 : vector<8x128xf32>
    %331 = math.tanh %330 : vector<8x128xf32>
    %cst_112 = arith.constant 5.000000e-01 : f32
    %332 = vector.broadcast %cst_112 : f32 to vector<8x128xf32>
    %333 = arith.mulf %332, %331 : vector<8x128xf32>
    %cst_113 = arith.constant 5.000000e-01 : f32
    %334 = vector.broadcast %cst_113 : f32 to vector<8x128xf32>
    %335 = arith.addf %333, %334 : vector<8x128xf32>
    %336 = vector.extract_strided_slice %327 {offsets = [0, 128], sizes = [8, 128], strides = [1, 1]} : vector<8x512xf32> to vector<8x128xf32>
    %cst_114 = arith.constant 5.000000e-01 : f32
    %337 = vector.broadcast %cst_114 : f32 to vector<8x128xf32>
    %338 = arith.mulf %337, %336 : vector<8x128xf32>
    %339 = math.tanh %338 : vector<8x128xf32>
    %cst_115 = arith.constant 5.000000e-01 : f32
    %340 = vector.broadcast %cst_115 : f32 to vector<8x128xf32>
    %341 = arith.mulf %340, %339 : vector<8x128xf32>
    %cst_116 = arith.constant 5.000000e-01 : f32
    %342 = vector.broadcast %cst_116 : f32 to vector<8x128xf32>
    %343 = arith.addf %341, %342 : vector<8x128xf32>
    %344 = vector.extract_strided_slice %327 {offsets = [0, 256], sizes = [8, 128], strides = [1, 1]} : vector<8x512xf32> to vector<8x128xf32>
    %345 = math.tanh %344 : vector<8x128xf32>
    %346 = vector.extract_strided_slice %327 {offsets = [0, 384], sizes = [8, 128], strides = [1, 1]} : vector<8x512xf32> to vector<8x128xf32>
    %cst_117 = arith.constant 5.000000e-01 : f32
    %347 = vector.broadcast %cst_117 : f32 to vector<8x128xf32>
    %348 = arith.mulf %347, %346 : vector<8x128xf32>
    %349 = math.tanh %348 : vector<8x128xf32>
    %cst_118 = arith.constant 5.000000e-01 : f32
    %350 = vector.broadcast %cst_118 : f32 to vector<8x128xf32>
    %351 = arith.mulf %350, %349 : vector<8x128xf32>
    %cst_119 = arith.constant 5.000000e-01 : f32
    %352 = vector.broadcast %cst_119 : f32 to vector<8x128xf32>
    %353 = arith.addf %351, %352 : vector<8x128xf32>
    %354 = arith.mulf %343, %280 : vector<8x128xf32>
    %355 = arith.mulf %335, %345 : vector<8x128xf32>
    %356 = arith.addf %354, %355 : vector<8x128xf32>
    %357 = math.tanh %356 : vector<8x128xf32>
    %358 = arith.mulf %353, %357 : vector<8x128xf32>
    %359 = arith.truncf %358 : vector<8x128xf32> to vector<8x128xbf16>
    %360 = arith.truncf %320 : vector<8x128xf32> to vector<8x128xbf16>
    %361 = tpu.concatenate %359, %360 in 1 : vector<8x128xbf16>, vector<8x128xbf16> -> vector<8x256xbf16>
    %cst_120 = arith.constant dense<0.000000e+00> : vector<8x1024xf32>
    %362 = tpu.matmul %361, %11, %cst_120 {dimension_numbers = #tpu.dot_dimension_numbers<[1], [0], [0], [1], [0, 0, 1, 1], [], []>} : vector<8x256xbf16>, vector<256x1024xbf16>, vector<8x1024xf32> -> vector<8x1024xf32>
    %363 = vector.extract_strided_slice %362 {offsets = [0, 0], sizes = [8, 512], strides = [1, 1]} : vector<8x1024xf32> to vector<8x512xf32>
    %364 = arith.addf %363, %14 : vector<8x512xf32>
    %365 = vector.extract_strided_slice %362 {offsets = [0, 512], sizes = [8, 512], strides = [1, 1]} : vector<8x1024xf32> to vector<8x512xf32>
    %366 = vector.extract_strided_slice %364 {offsets = [0, 0], sizes = [8, 128], strides = [1, 1]} : vector<8x512xf32> to vector<8x128xf32>
    %cst_121 = arith.constant 5.000000e-01 : f32
    %367 = vector.broadcast %cst_121 : f32 to vector<8x128xf32>
    %368 = arith.mulf %367, %366 : vector<8x128xf32>
    %369 = math.tanh %368 : vector<8x128xf32>
    %cst_122 = arith.constant 5.000000e-01 : f32
    %370 = vector.broadcast %cst_122 : f32 to vector<8x128xf32>
    %371 = arith.mulf %370, %369 : vector<8x128xf32>
    %cst_123 = arith.constant 5.000000e-01 : f32
    %372 = vector.broadcast %cst_123 : f32 to vector<8x128xf32>
    %373 = arith.addf %371, %372 : vector<8x128xf32>
    %374 = vector.extract_strided_slice %364 {offsets = [0, 128], sizes = [8, 128], strides = [1, 1]} : vector<8x512xf32> to vector<8x128xf32>
    %cst_124 = arith.constant 5.000000e-01 : f32
    %375 = vector.broadcast %cst_124 : f32 to vector<8x128xf32>
    %376 = arith.mulf %375, %374 : vector<8x128xf32>
    %377 = math.tanh %376 : vector<8x128xf32>
    %cst_125 = arith.constant 5.000000e-01 : f32
    %378 = vector.broadcast %cst_125 : f32 to vector<8x128xf32>
    %379 = arith.mulf %378, %377 : vector<8x128xf32>
    %cst_126 = arith.constant 5.000000e-01 : f32
    %380 = vector.broadcast %cst_126 : f32 to vector<8x128xf32>
    %381 = arith.addf %379, %380 : vector<8x128xf32>
    %382 = vector.extract_strided_slice %364 {offsets = [0, 256], sizes = [8, 128], strides = [1, 1]} : vector<8x512xf32> to vector<8x128xf32>
    %383 = math.tanh %382 : vector<8x128xf32>
    %384 = vector.extract_strided_slice %364 {offsets = [0, 384], sizes = [8, 128], strides = [1, 1]} : vector<8x512xf32> to vector<8x128xf32>
    %cst_127 = arith.constant 5.000000e-01 : f32
    %385 = vector.broadcast %cst_127 : f32 to vector<8x128xf32>
    %386 = arith.mulf %385, %384 : vector<8x128xf32>
    %387 = math.tanh %386 : vector<8x128xf32>
    %cst_128 = arith.constant 5.000000e-01 : f32
    %388 = vector.broadcast %cst_128 : f32 to vector<8x128xf32>
    %389 = arith.mulf %388, %387 : vector<8x128xf32>
    %cst_129 = arith.constant 5.000000e-01 : f32
    %390 = vector.broadcast %cst_129 : f32 to vector<8x128xf32>
    %391 = arith.addf %389, %390 : vector<8x128xf32>
    %392 = arith.mulf %381, %318 : vector<8x128xf32>
    %393 = arith.mulf %373, %383 : vector<8x128xf32>
    %394 = arith.addf %392, %393 : vector<8x128xf32>
    %395 = math.tanh %394 : vector<8x128xf32>
    %396 = arith.mulf %391, %395 : vector<8x128xf32>
    %397 = arith.index_cast %324 : i32 to index
    %c0_130 = arith.constant 0 : index
    %398 = vector.load %arg11[%397, %c0_130] : memref<64x128xf32, #tpu.memory_space<vmem>>, vector<8x128xf32>
    tpu.vector_store %arg11[%397, %c0_130], %396 {strides = array<i32>} : memref<64x128xf32, #tpu.memory_space<vmem>>, vector<8x128xf32>,
    %c5_i32 = arith.constant 5 : i32
    %c8_i32_131 = arith.constant 8 : i32
    %399 = arith.muli %c5_i32, %c8_i32_131 : i32
    %400 = tpu.assume_multiple %399, 8 : i32
    %401 = arith.index_cast %400 : i32 to index
    %c0_132 = arith.constant 0 : index
    %402 = vector.load %arg10[%401, %c0_132] : memref<64x512xf32, #tpu.memory_space<vmem>>, vector<8x512xf32>
    %403 = arith.addf %402, %365 : vector<8x512xf32>
    %404 = vector.extract_strided_slice %403 {offsets = [0, 0], sizes = [8, 128], strides = [1, 1]} : vector<8x512xf32> to vector<8x128xf32>
    %cst_133 = arith.constant 5.000000e-01 : f32
    %405 = vector.broadcast %cst_133 : f32 to vector<8x128xf32>
    %406 = arith.mulf %405, %404 : vector<8x128xf32>
    %407 = math.tanh %406 : vector<8x128xf32>
    %cst_134 = arith.constant 5.000000e-01 : f32
    %408 = vector.broadcast %cst_134 : f32 to vector<8x128xf32>
    %409 = arith.mulf %408, %407 : vector<8x128xf32>
    %cst_135 = arith.constant 5.000000e-01 : f32
    %410 = vector.broadcast %cst_135 : f32 to vector<8x128xf32>
    %411 = arith.addf %409, %410 : vector<8x128xf32>
    %412 = vector.extract_strided_slice %403 {offsets = [0, 128], sizes = [8, 128], strides = [1, 1]} : vector<8x512xf32> to vector<8x128xf32>
    %cst_136 = arith.constant 5.000000e-01 : f32
    %413 = vector.broadcast %cst_136 : f32 to vector<8x128xf32>
    %414 = arith.mulf %413, %412 : vector<8x128xf32>
    %415 = math.tanh %414 : vector<8x128xf32>
    %cst_137 = arith.constant 5.000000e-01 : f32
    %416 = vector.broadcast %cst_137 : f32 to vector<8x128xf32>
    %417 = arith.mulf %416, %415 : vector<8x128xf32>
    %cst_138 = arith.constant 5.000000e-01 : f32
    %418 = vector.broadcast %cst_138 : f32 to vector<8x128xf32>
    %419 = arith.addf %417, %418 : vector<8x128xf32>
    %420 = vector.extract_strided_slice %403 {offsets = [0, 256], sizes = [8, 128], strides = [1, 1]} : vector<8x512xf32> to vector<8x128xf32>
    %421 = math.tanh %420 : vector<8x128xf32>
    %422 = vector.extract_strided_slice %403 {offsets = [0, 384], sizes = [8, 128], strides = [1, 1]} : vector<8x512xf32> to vector<8x128xf32>
    %cst_139 = arith.constant 5.000000e-01 : f32
    %423 = vector.broadcast %cst_139 : f32 to vector<8x128xf32>
    %424 = arith.mulf %423, %422 : vector<8x128xf32>
    %425 = math.tanh %424 : vector<8x128xf32>
    %cst_140 = arith.constant 5.000000e-01 : f32
    %426 = vector.broadcast %cst_140 : f32 to vector<8x128xf32>
    %427 = arith.mulf %426, %425 : vector<8x128xf32>
    %cst_141 = arith.constant 5.000000e-01 : f32
    %428 = vector.broadcast %cst_141 : f32 to vector<8x128xf32>
    %429 = arith.addf %427, %428 : vector<8x128xf32>
    %430 = arith.mulf %419, %356 : vector<8x128xf32>
    %431 = arith.mulf %411, %421 : vector<8x128xf32>
    %432 = arith.addf %430, %431 : vector<8x128xf32>
    %433 = math.tanh %432 : vector<8x128xf32>
    %434 = arith.mulf %429, %433 : vector<8x128xf32>
    %435 = arith.truncf %434 : vector<8x128xf32> to vector<8x128xbf16>
    %436 = arith.truncf %396 : vector<8x128xf32> to vector<8x128xbf16>
    %437 = tpu.concatenate %435, %436 in 1 : vector<8x128xbf16>, vector<8x128xbf16> -> vector<8x256xbf16>
    %cst_142 = arith.constant dense<0.000000e+00> : vector<8x1024xf32>
    %438 = tpu.matmul %437, %11, %cst_142 {dimension_numbers = #tpu.dot_dimension_numbers<[1], [0], [0], [1], [0, 0, 1, 1], [], []>} : vector<8x256xbf16>, vector<256x1024xbf16>, vector<8x1024xf32> -> vector<8x1024xf32>
    %439 = vector.extract_strided_slice %438 {offsets = [0, 0], sizes = [8, 512], strides = [1, 1]} : vector<8x1024xf32> to vector<8x512xf32>
    %440 = arith.addf %439, %14 : vector<8x512xf32>
    %441 = vector.extract_strided_slice %438 {offsets = [0, 512], sizes = [8, 512], strides = [1, 1]} : vector<8x1024xf32> to vector<8x512xf32>
    %442 = vector.extract_strided_slice %440 {offsets = [0, 0], sizes = [8, 128], strides = [1, 1]} : vector<8x512xf32> to vector<8x128xf32>
    %cst_143 = arith.constant 5.000000e-01 : f32
    %443 = vector.broadcast %cst_143 : f32 to vector<8x128xf32>
    %444 = arith.mulf %443, %442 : vector<8x128xf32>
    %445 = math.tanh %444 : vector<8x128xf32>
    %cst_144 = arith.constant 5.000000e-01 : f32
    %446 = vector.broadcast %cst_144 : f32 to vector<8x128xf32>
    %447 = arith.mulf %446, %445 : vector<8x128xf32>
    %cst_145 = arith.constant 5.000000e-01 : f32
    %448 = vector.broadcast %cst_145 : f32 to vector<8x128xf32>
    %449 = arith.addf %447, %448 : vector<8x128xf32>
    %450 = vector.extract_strided_slice %440 {offsets = [0, 128], sizes = [8, 128], strides = [1, 1]} : vector<8x512xf32> to vector<8x128xf32>
    %cst_146 = arith.constant 5.000000e-01 : f32
    %451 = vector.broadcast %cst_146 : f32 to vector<8x128xf32>
    %452 = arith.mulf %451, %450 : vector<8x128xf32>
    %453 = math.tanh %452 : vector<8x128xf32>
    %cst_147 = arith.constant 5.000000e-01 : f32
    %454 = vector.broadcast %cst_147 : f32 to vector<8x128xf32>
    %455 = arith.mulf %454, %453 : vector<8x128xf32>
    %cst_148 = arith.constant 5.000000e-01 : f32
    %456 = vector.broadcast %cst_148 : f32 to vector<8x128xf32>
    %457 = arith.addf %455, %456 : vector<8x128xf32>
    %458 = vector.extract_strided_slice %440 {offsets = [0, 256], sizes = [8, 128], strides = [1, 1]} : vector<8x512xf32> to vector<8x128xf32>
    %459 = math.tanh %458 : vector<8x128xf32>
    %460 = vector.extract_strided_slice %440 {offsets = [0, 384], sizes = [8, 128], strides = [1, 1]} : vector<8x512xf32> to vector<8x128xf32>
    %cst_149 = arith.constant 5.000000e-01 : f32
    %461 = vector.broadcast %cst_149 : f32 to vector<8x128xf32>
    %462 = arith.mulf %461, %460 : vector<8x128xf32>
    %463 = math.tanh %462 : vector<8x128xf32>
    %cst_150 = arith.constant 5.000000e-01 : f32
    %464 = vector.broadcast %cst_150 : f32 to vector<8x128xf32>
    %465 = arith.mulf %464, %463 : vector<8x128xf32>
    %cst_151 = arith.constant 5.000000e-01 : f32
    %466 = vector.broadcast %cst_151 : f32 to vector<8x128xf32>
    %467 = arith.addf %465, %466 : vector<8x128xf32>
    %468 = arith.mulf %457, %394 : vector<8x128xf32>
    %469 = arith.mulf %449, %459 : vector<8x128xf32>
    %470 = arith.addf %468, %469 : vector<8x128xf32>
    %471 = math.tanh %470 : vector<8x128xf32>
    %472 = arith.mulf %467, %471 : vector<8x128xf32>
    %473 = arith.index_cast %400 : i32 to index
    %c0_152 = arith.constant 0 : index
    %474 = vector.load %arg11[%473, %c0_152] : memref<64x128xf32, #tpu.memory_space<vmem>>, vector<8x128xf32>
    tpu.vector_store %arg11[%473, %c0_152], %472 {strides = array<i32>} : memref<64x128xf32, #tpu.memory_space<vmem>>, vector<8x128xf32>,
    %c6_i32 = arith.constant 6 : i32
    %c8_i32_153 = arith.constant 8 : i32
    %475 = arith.muli %c6_i32, %c8_i32_153 : i32
    %476 = tpu.assume_multiple %475, 8 : i32
    %477 = arith.index_cast %476 : i32 to index
    %c0_154 = arith.constant 0 : index
    %478 = vector.load %arg10[%477, %c0_154] : memref<64x512xf32, #tpu.memory_space<vmem>>, vector<8x512xf32>
    %479 = arith.addf %478, %441 : vector<8x512xf32>
    %480 = vector.extract_strided_slice %479 {offsets = [0, 0], sizes = [8, 128], strides = [1, 1]} : vector<8x512xf32> to vector<8x128xf32>
    %cst_155 = arith.constant 5.000000e-01 : f32
    %481 = vector.broadcast %cst_155 : f32 to vector<8x128xf32>
    %482 = arith.mulf %481, %480 : vector<8x128xf32>
    %483 = math.tanh %482 : vector<8x128xf32>
    %cst_156 = arith.constant 5.000000e-01 : f32
    %484 = vector.broadcast %cst_156 : f32 to vector<8x128xf32>
    %485 = arith.mulf %484, %483 : vector<8x128xf32>
    %cst_157 = arith.constant 5.000000e-01 : f32
    %486 = vector.broadcast %cst_157 : f32 to vector<8x128xf32>
    %487 = arith.addf %485, %486 : vector<8x128xf32>
    %488 = vector.extract_strided_slice %479 {offsets = [0, 128], sizes = [8, 128], strides = [1, 1]} : vector<8x512xf32> to vector<8x128xf32>
    %cst_158 = arith.constant 5.000000e-01 : f32
    %489 = vector.broadcast %cst_158 : f32 to vector<8x128xf32>
    %490 = arith.mulf %489, %488 : vector<8x128xf32>
    %491 = math.tanh %490 : vector<8x128xf32>
    %cst_159 = arith.constant 5.000000e-01 : f32
    %492 = vector.broadcast %cst_159 : f32 to vector<8x128xf32>
    %493 = arith.mulf %492, %491 : vector<8x128xf32>
    %cst_160 = arith.constant 5.000000e-01 : f32
    %494 = vector.broadcast %cst_160 : f32 to vector<8x128xf32>
    %495 = arith.addf %493, %494 : vector<8x128xf32>
    %496 = vector.extract_strided_slice %479 {offsets = [0, 256], sizes = [8, 128], strides = [1, 1]} : vector<8x512xf32> to vector<8x128xf32>
    %497 = math.tanh %496 : vector<8x128xf32>
    %498 = vector.extract_strided_slice %479 {offsets = [0, 384], sizes = [8, 128], strides = [1, 1]} : vector<8x512xf32> to vector<8x128xf32>
    %cst_161 = arith.constant 5.000000e-01 : f32
    %499 = vector.broadcast %cst_161 : f32 to vector<8x128xf32>
    %500 = arith.mulf %499, %498 : vector<8x128xf32>
    %501 = math.tanh %500 : vector<8x128xf32>
    %cst_162 = arith.constant 5.000000e-01 : f32
    %502 = vector.broadcast %cst_162 : f32 to vector<8x128xf32>
    %503 = arith.mulf %502, %501 : vector<8x128xf32>
    %cst_163 = arith.constant 5.000000e-01 : f32
    %504 = vector.broadcast %cst_163 : f32 to vector<8x128xf32>
    %505 = arith.addf %503, %504 : vector<8x128xf32>
    %506 = arith.mulf %495, %432 : vector<8x128xf32>
    %507 = arith.mulf %487, %497 : vector<8x128xf32>
    %508 = arith.addf %506, %507 : vector<8x128xf32>
    %509 = math.tanh %508 : vector<8x128xf32>
    %510 = arith.mulf %505, %509 : vector<8x128xf32>
    %511 = arith.truncf %510 : vector<8x128xf32> to vector<8x128xbf16>
    %512 = arith.truncf %472 : vector<8x128xf32> to vector<8x128xbf16>
    %513 = tpu.concatenate %511, %512 in 1 : vector<8x128xbf16>, vector<8x128xbf16> -> vector<8x256xbf16>
    %cst_164 = arith.constant dense<0.000000e+00> : vector<8x1024xf32>
    %514 = tpu.matmul %513, %11, %cst_164 {dimension_numbers = #tpu.dot_dimension_numbers<[1], [0], [0], [1], [0, 0, 1, 1], [], []>} : vector<8x256xbf16>, vector<256x1024xbf16>, vector<8x1024xf32> -> vector<8x1024xf32>
    %515 = vector.extract_strided_slice %514 {offsets = [0, 0], sizes = [8, 512], strides = [1, 1]} : vector<8x1024xf32> to vector<8x512xf32>
    %516 = arith.addf %515, %14 : vector<8x512xf32>
    %517 = vector.extract_strided_slice %514 {offsets = [0, 512], sizes = [8, 512], strides = [1, 1]} : vector<8x1024xf32> to vector<8x512xf32>
    %518 = vector.extract_strided_slice %516 {offsets = [0, 0], sizes = [8, 128], strides = [1, 1]} : vector<8x512xf32> to vector<8x128xf32>
    %cst_165 = arith.constant 5.000000e-01 : f32
    %519 = vector.broadcast %cst_165 : f32 to vector<8x128xf32>
    %520 = arith.mulf %519, %518 : vector<8x128xf32>
    %521 = math.tanh %520 : vector<8x128xf32>
    %cst_166 = arith.constant 5.000000e-01 : f32
    %522 = vector.broadcast %cst_166 : f32 to vector<8x128xf32>
    %523 = arith.mulf %522, %521 : vector<8x128xf32>
    %cst_167 = arith.constant 5.000000e-01 : f32
    %524 = vector.broadcast %cst_167 : f32 to vector<8x128xf32>
    %525 = arith.addf %523, %524 : vector<8x128xf32>
    %526 = vector.extract_strided_slice %516 {offsets = [0, 128], sizes = [8, 128], strides = [1, 1]} : vector<8x512xf32> to vector<8x128xf32>
    %cst_168 = arith.constant 5.000000e-01 : f32
    %527 = vector.broadcast %cst_168 : f32 to vector<8x128xf32>
    %528 = arith.mulf %527, %526 : vector<8x128xf32>
    %529 = math.tanh %528 : vector<8x128xf32>
    %cst_169 = arith.constant 5.000000e-01 : f32
    %530 = vector.broadcast %cst_169 : f32 to vector<8x128xf32>
    %531 = arith.mulf %530, %529 : vector<8x128xf32>
    %cst_170 = arith.constant 5.000000e-01 : f32
    %532 = vector.broadcast %cst_170 : f32 to vector<8x128xf32>
    %533 = arith.addf %531, %532 : vector<8x128xf32>
    %534 = vector.extract_strided_slice %516 {offsets = [0, 256], sizes = [8, 128], strides = [1, 1]} : vector<8x512xf32> to vector<8x128xf32>
    %535 = math.tanh %534 : vector<8x128xf32>
    %536 = vector.extract_strided_slice %516 {offsets = [0, 384], sizes = [8, 128], strides = [1, 1]} : vector<8x512xf32> to vector<8x128xf32>
    %cst_171 = arith.constant 5.000000e-01 : f32
    %537 = vector.broadcast %cst_171 : f32 to vector<8x128xf32>
    %538 = arith.mulf %537, %536 : vector<8x128xf32>
    %539 = math.tanh %538 : vector<8x128xf32>
    %cst_172 = arith.constant 5.000000e-01 : f32
    %540 = vector.broadcast %cst_172 : f32 to vector<8x128xf32>
    %541 = arith.mulf %540, %539 : vector<8x128xf32>
    %cst_173 = arith.constant 5.000000e-01 : f32
    %542 = vector.broadcast %cst_173 : f32 to vector<8x128xf32>
    %543 = arith.addf %541, %542 : vector<8x128xf32>
    %544 = arith.mulf %533, %470 : vector<8x128xf32>
    %545 = arith.mulf %525, %535 : vector<8x128xf32>
    %546 = arith.addf %544, %545 : vector<8x128xf32>
    %547 = math.tanh %546 : vector<8x128xf32>
    %548 = arith.mulf %543, %547 : vector<8x128xf32>
    %549 = arith.index_cast %476 : i32 to index
    %c0_174 = arith.constant 0 : index
    %550 = vector.load %arg11[%549, %c0_174] : memref<64x128xf32, #tpu.memory_space<vmem>>, vector<8x128xf32>
    tpu.vector_store %arg11[%549, %c0_174], %548 {strides = array<i32>} : memref<64x128xf32, #tpu.memory_space<vmem>>, vector<8x128xf32>,
    %c7_i32 = arith.constant 7 : i32
    %c8_i32_175 = arith.constant 8 : i32
    %551 = arith.muli %c7_i32, %c8_i32_175 : i32
    %552 = tpu.assume_multiple %551, 8 : i32
    %553 = arith.index_cast %552 : i32 to index
    %c0_176 = arith.constant 0 : index
    %554 = vector.load %arg10[%553, %c0_176] : memref<64x512xf32, #tpu.memory_space<vmem>>, vector<8x512xf32>
    %555 = arith.addf %554, %517 : vector<8x512xf32>
    %556 = vector.extract_strided_slice %555 {offsets = [0, 0], sizes = [8, 128], strides = [1, 1]} : vector<8x512xf32> to vector<8x128xf32>
    %cst_177 = arith.constant 5.000000e-01 : f32
    %557 = vector.broadcast %cst_177 : f32 to vector<8x128xf32>
    %558 = arith.mulf %557, %556 : vector<8x128xf32>
    %559 = math.tanh %558 : vector<8x128xf32>
    %cst_178 = arith.constant 5.000000e-01 : f32
    %560 = vector.broadcast %cst_178 : f32 to vector<8x128xf32>
    %561 = arith.mulf %560, %559 : vector<8x128xf32>
    %cst_179 = arith.constant 5.000000e-01 : f32
    %562 = vector.broadcast %cst_179 : f32 to vector<8x128xf32>
    %563 = arith.addf %561, %562 : vector<8x128xf32>
    %564 = vector.extract_strided_slice %555 {offsets = [0, 128], sizes = [8, 128], strides = [1, 1]} : vector<8x512xf32> to vector<8x128xf32>
    %cst_180 = arith.constant 5.000000e-01 : f32
    %565 = vector.broadcast %cst_180 : f32 to vector<8x128xf32>
    %566 = arith.mulf %565, %564 : vector<8x128xf32>
    %567 = math.tanh %566 : vector<8x128xf32>
    %cst_181 = arith.constant 5.000000e-01 : f32
    %568 = vector.broadcast %cst_181 : f32 to vector<8x128xf32>
    %569 = arith.mulf %568, %567 : vector<8x128xf32>
    %cst_182 = arith.constant 5.000000e-01 : f32
    %570 = vector.broadcast %cst_182 : f32 to vector<8x128xf32>
    %571 = arith.addf %569, %570 : vector<8x128xf32>
    %572 = vector.extract_strided_slice %555 {offsets = [0, 256], sizes = [8, 128], strides = [1, 1]} : vector<8x512xf32> to vector<8x128xf32>
    %573 = math.tanh %572 : vector<8x128xf32>
    %574 = vector.extract_strided_slice %555 {offsets = [0, 384], sizes = [8, 128], strides = [1, 1]} : vector<8x512xf32> to vector<8x128xf32>
    %cst_183 = arith.constant 5.000000e-01 : f32
    %575 = vector.broadcast %cst_183 : f32 to vector<8x128xf32>
    %576 = arith.mulf %575, %574 : vector<8x128xf32>
    %577 = math.tanh %576 : vector<8x128xf32>
    %cst_184 = arith.constant 5.000000e-01 : f32
    %578 = vector.broadcast %cst_184 : f32 to vector<8x128xf32>
    %579 = arith.mulf %578, %577 : vector<8x128xf32>
    %cst_185 = arith.constant 5.000000e-01 : f32
    %580 = vector.broadcast %cst_185 : f32 to vector<8x128xf32>
    %581 = arith.addf %579, %580 : vector<8x128xf32>
    %582 = arith.mulf %571, %508 : vector<8x128xf32>
    %583 = arith.mulf %563, %573 : vector<8x128xf32>
    %584 = arith.addf %582, %583 : vector<8x128xf32>
    %585 = math.tanh %584 : vector<8x128xf32>
    %586 = arith.mulf %581, %585 : vector<8x128xf32>
    %587 = arith.truncf %586 : vector<8x128xf32> to vector<8x128xbf16>
    %588 = arith.truncf %548 : vector<8x128xf32> to vector<8x128xbf16>
    %589 = tpu.concatenate %587, %588 in 1 : vector<8x128xbf16>, vector<8x128xbf16> -> vector<8x256xbf16>
    %cst_186 = arith.constant dense<0.000000e+00> : vector<8x1024xf32>
    %590 = tpu.matmul %589, %11, %cst_186 {dimension_numbers = #tpu.dot_dimension_numbers<[1], [0], [0], [1], [0, 0, 1, 1], [], []>} : vector<8x256xbf16>, vector<256x1024xbf16>, vector<8x1024xf32> -> vector<8x1024xf32>
    %591 = vector.extract_strided_slice %590 {offsets = [0, 0], sizes = [8, 512], strides = [1, 1]} : vector<8x1024xf32> to vector<8x512xf32>
    %592 = arith.addf %591, %14 : vector<8x512xf32>
    %593 = vector.extract_strided_slice %590 {offsets = [0, 512], sizes = [8, 512], strides = [1, 1]} : vector<8x1024xf32> to vector<8x512xf32>
    %594 = vector.extract_strided_slice %592 {offsets = [0, 0], sizes = [8, 128], strides = [1, 1]} : vector<8x512xf32> to vector<8x128xf32>
    %cst_187 = arith.constant 5.000000e-01 : f32
    %595 = vector.broadcast %cst_187 : f32 to vector<8x128xf32>
    %596 = arith.mulf %595, %594 : vector<8x128xf32>
    %597 = math.tanh %596 : vector<8x128xf32>
    %cst_188 = arith.constant 5.000000e-01 : f32
    %598 = vector.broadcast %cst_188 : f32 to vector<8x128xf32>
    %599 = arith.mulf %598, %597 : vector<8x128xf32>
    %cst_189 = arith.constant 5.000000e-01 : f32
    %600 = vector.broadcast %cst_189 : f32 to vector<8x128xf32>
    %601 = arith.addf %599, %600 : vector<8x128xf32>
    %602 = vector.extract_strided_slice %592 {offsets = [0, 128], sizes = [8, 128], strides = [1, 1]} : vector<8x512xf32> to vector<8x128xf32>
    %cst_190 = arith.constant 5.000000e-01 : f32
    %603 = vector.broadcast %cst_190 : f32 to vector<8x128xf32>
    %604 = arith.mulf %603, %602 : vector<8x128xf32>
    %605 = math.tanh %604 : vector<8x128xf32>
    %cst_191 = arith.constant 5.000000e-01 : f32
    %606 = vector.broadcast %cst_191 : f32 to vector<8x128xf32>
    %607 = arith.mulf %606, %605 : vector<8x128xf32>
    %cst_192 = arith.constant 5.000000e-01 : f32
    %608 = vector.broadcast %cst_192 : f32 to vector<8x128xf32>
    %609 = arith.addf %607, %608 : vector<8x128xf32>
    %610 = vector.extract_strided_slice %592 {offsets = [0, 256], sizes = [8, 128], strides = [1, 1]} : vector<8x512xf32> to vector<8x128xf32>
    %611 = math.tanh %610 : vector<8x128xf32>
    %612 = vector.extract_strided_slice %592 {offsets = [0, 384], sizes = [8, 128], strides = [1, 1]} : vector<8x512xf32> to vector<8x128xf32>
    %cst_193 = arith.constant 5.000000e-01 : f32
    %613 = vector.broadcast %cst_193 : f32 to vector<8x128xf32>
    %614 = arith.mulf %613, %612 : vector<8x128xf32>
    %615 = math.tanh %614 : vector<8x128xf32>
    %cst_194 = arith.constant 5.000000e-01 : f32
    %616 = vector.broadcast %cst_194 : f32 to vector<8x128xf32>
    %617 = arith.mulf %616, %615 : vector<8x128xf32>
    %cst_195 = arith.constant 5.000000e-01 : f32
    %618 = vector.broadcast %cst_195 : f32 to vector<8x128xf32>
    %619 = arith.addf %617, %618 : vector<8x128xf32>
    %620 = arith.mulf %609, %546 : vector<8x128xf32>
    %621 = arith.mulf %601, %611 : vector<8x128xf32>
    %622 = arith.addf %620, %621 : vector<8x128xf32>
    %623 = math.tanh %622 : vector<8x128xf32>
    %624 = arith.mulf %619, %623 : vector<8x128xf32>
    %625 = arith.index_cast %552 : i32 to index
    %c0_196 = arith.constant 0 : index
    %626 = vector.load %arg11[%625, %c0_196] : memref<64x128xf32, #tpu.memory_space<vmem>>, vector<8x128xf32>
    tpu.vector_store %arg11[%625, %c0_196], %624 {strides = array<i32>} : memref<64x128xf32, #tpu.memory_space<vmem>>, vector<8x128xf32>,
    %c8_i32_197 = arith.constant 8 : i32
    %c0_198 = arith.constant 0 : index
    %c0_199 = arith.constant 0 : index
    %627 = vector.load %arg12[%c0_198, %c0_199] : memref<8x512xf32, #tpu.memory_space<vmem>>, vector<8x512xf32>
    tpu.vector_store %arg12[%c0_198, %c0_199], %593 {strides = array<i32>} : memref<8x512xf32, #tpu.memory_space<vmem>>, vector<8x512xf32>,
    %c0_200 = arith.constant 0 : index
    %c0_201 = arith.constant 0 : index
    %628 = vector.load %arg13[%c0_200, %c0_201] : memref<8x128xf32, #tpu.memory_space<vmem>>, vector<8x128xf32>
    tpu.vector_store %arg13[%c0_200, %c0_201], %584 {strides = array<i32>} : memref<8x128xf32, #tpu.memory_space<vmem>>, vector<8x128xf32>,
    %c0_202 = arith.constant 0 : index
    %c0_203 = arith.constant 0 : index
    %629 = vector.load %arg14[%c0_202, %c0_203] : memref<8x128xf32, #tpu.memory_space<vmem>>, vector<8x128xf32>
    tpu.vector_store %arg14[%c0_202, %c0_203], %624 {strides = array<i32>} : memref<8x128xf32, #tpu.memory_space<vmem>>, vector<8x128xf32>,
    %c0_204 = arith.constant 0 : index
    %c0_205 = arith.constant 0 : index
    %630 = vector.load %arg15[%c0_204, %c0_205] : memref<8x128xf32, #tpu.memory_space<vmem>>, vector<8x128xf32>
    tpu.vector_store %arg15[%c0_204, %c0_205], %622 {strides = array<i32>} : memref<8x128xf32, #tpu.memory_space<vmem>>, vector<8x128xf32>,
    %631 = arith.extui %0 : i1 to i32
    %c0_i32_206 = arith.constant 0 : i32
    %632 = arith.cmpi ne, %631, %c0_i32_206 : i32
    scf.if %632 {
      %c56 = arith.constant 56 : index
      %c0_216 = arith.constant 0 : index
      %641 = vector.load %arg11[%c56, %c0_216] : memref<64x128xf32, #tpu.memory_space<vmem>>, vector<8x128xf32>
      %c0_217 = arith.constant 0 : index
      %c0_218 = arith.constant 0 : index
      %642 = vector.load %arg9[%c0_217, %c0_218] : memref<8x128xf32, #tpu.memory_space<vmem>>, vector<8x128xf32>
      tpu.vector_store %arg9[%c0_217, %c0_218], %641 {strides = array<i32>} : memref<8x128xf32, #tpu.memory_space<vmem>>, vector<8x128xf32>,
    } else {
    }
    %c0_207 = arith.constant 0 : index
    %c0_208 = arith.constant 0 : index
    %633 = vector.load %arg11[%c0_207, %c0_208] : memref<64x128xf32, #tpu.memory_space<vmem>>, vector<64x128xf32>
    %634 = arith.truncf %633 : vector<64x128xf32> to vector<64x128xbf16>
    %c0_209 = arith.constant 0 : index
    %c0_210 = arith.constant 0 : index
    %635 = vector.load %arg6[%c0_209, %c0_210] : memref<128x128xbf16, #tpu.memory_space<vmem>>, vector<128x128xbf16>
    %cst_211 = arith.constant dense<0.000000e+00> : vector<64x128xf32>
    %636 = tpu.matmul %634, %635, %cst_211 {dimension_numbers = #tpu.dot_dimension_numbers<[1], [0], [0], [1], [0, 0, 1, 1], [], []>} : vector<64x128xbf16>, vector<128x128xbf16>, vector<64x128xf32> -> vector<64x128xf32>
    %c0_212 = arith.constant 0 : index
    %c0_213 = arith.constant 0 : index
    %637 = vector.load %arg7[%c0_212, %c0_213] : memref<1x128xf32, #tpu.memory_space<vmem>>, vector<1x128xf32>
    %638 = vector.broadcast %637 : vector<1x128xf32> to vector<64x128xf32>
    %639 = arith.addf %636, %638 : vector<64x128xf32>
    %c0_214 = arith.constant 0 : index
    %c0_215 = arith.constant 0 : index
    %640 = vector.load %arg8[%c0_214, %c0_215] : memref<64x128xf32, #tpu.memory_space<vmem>>, vector<64x128xf32>
    tpu.vector_store %arg8[%c0_214, %c0_215], %639 {strides = array<i32>} : memref<64x128xf32, #tpu.memory_space<vmem>>, vector<64x128xf32>,
    return
  }
  func.func @transform_0(%arg0: i32) -> (i32, i32) {
    %c0_i32 = arith.constant 0 : i32
    %c0_i32_0 = arith.constant 0 : i32
    return %arg0, %c0_i32 : i32, i32
  }
  func.func @transform_1(%arg0: i32) -> (i32, i32) {
    %c0_i32 = arith.constant 0 : i32
    %c0_i32_0 = arith.constant 0 : i32
    %c0_i32_1 = arith.constant 0 : i32
    return %c0_i32, %c0_i32_0 : i32, i32
  }
  func.func @transform_2(%arg0: i32) -> (i32, i32) {
    %c0_i32 = arith.constant 0 : i32
    %c0_i32_0 = arith.constant 0 : i32
    %c0_i32_1 = arith.constant 0 : i32
    return %c0_i32, %c0_i32_0 : i32, i32
  }
  func.func @transform_3(%arg0: i32) -> (i32, i32) {
    %c0_i32 = arith.constant 0 : i32
    %c0_i32_0 = arith.constant 0 : i32
    %c0_i32_1 = arith.constant 0 : i32
    return %c0_i32, %c0_i32_0 : i32, i32
  }
  func.func @transform_4(%arg0: i32) -> (i32, i32) {
    %c0_i32 = arith.constant 0 : i32
    %c0_i32_0 = arith.constant 0 : i32
    %c0_i32_1 = arith.constant 0 : i32
    return %c0_i32, %c0_i32_0 : i32, i32
  }
  func.func @transform_5(%arg0: i32) -> (i32, i32) {
    %c0_i32 = arith.constant 0 : i32
    %c0_i32_0 = arith.constant 0 : i32
    %c0_i32_1 = arith.constant 0 : i32
    return %c0_i32, %c0_i32_0 : i32, i32
  }
  func.func @transform_6(%arg0: i32) -> (i32, i32) {
    %c0_i32 = arith.constant 0 : i32
    %c0_i32_0 = arith.constant 0 : i32
    %c0_i32_1 = arith.constant 0 : i32
    return %c0_i32, %c0_i32_0 : i32, i32
  }
  func.func @transform_7(%arg0: i32) -> (i32, i32) {
    %c0_i32 = arith.constant 0 : i32
    %c0_i32_0 = arith.constant 0 : i32
    return %arg0, %c0_i32 : i32, i32
  }
  func.func @transform_8(%arg0: i32) -> (i32, i32) {
    %c0_i32 = arith.constant 0 : i32
    %c0_i32_0 = arith.constant 0 : i32
    %c0_i32_1 = arith.constant 0 : i32
    return %c0_i32, %c0_i32_0 : i32, i32
  }
}

</mosaic_0001>

<llo_original>
// kernel: _lambda_.1
$region0: #{_lambda_.1}
  #allocation0 [shape = 'u32[]', space=smem, size = 0x4, offset = 0x4, fixed_abs, tag = 'smem constant byte address 0x4 - core index']
  #allocation1 [shape = 'u32[144,128]{1,0:T(1,128)}', space=vmem, size = 0x12000, scoped, tag = 'internal scratch']
  #allocation2 [shape = 'f32[64,512]{1,0:T(8,128)}', space=vmem, size = 0x20000, scoped, tag = 'scratch operand']
  #allocation3 [shape = 'f32[64,128]{1,0:T(8,128)}', space=vmem, size = 0x8000, scoped, tag = 'scratch operand']
  #allocation4 [shape = 'f32[8,512]{1,0:T(8,128)}', space=vmem, size = 0x4000, scoped, tag = 'scratch operand']
  #allocation5 [shape = 'f32[8,128]{1,0:T(8,128)}', space=vmem, size = 0x1000, scoped, tag = 'scratch operand']
  #allocation6 [shape = 'f32[8,128]{1,0:T(8,128)}', space=vmem, size = 0x1000, scoped, tag = 'scratch operand']
  #allocation7 [shape = 'f32[8,128]{1,0:T(8,128)}', space=vmem, size = 0x1000, scoped, tag = 'scratch operand']
  %s0 = inlined_call_operand.vmem [shape: bf16[64,128], index: 0, kind: input, shape index: {}]
  %s1 = inlined_call_operand.vmem [shape: bf16[128,512], index: 1, kind: input, shape index: {}]
  %s2 = inlined_call_operand.vmem [shape: f32[1,512], index: 2, kind: input, shape index: {}]
  %s3 = inlined_call_operand.vmem [shape: bf16[256,1024], index: 3, kind: input, shape index: {}]
  %s4 = inlined_call_operand.vmem [shape: f32[1,512], index: 4, kind: input, shape index: {}]
  %s5 = inlined_call_operand.vmem [shape: bf16[128,128], index: 5, kind: input, shape index: {}]
  %s6 = inlined_call_operand.vmem [shape: f32[1,128], index: 6, kind: input, shape index: {}]
  %s7 = inlined_call_operand.vmem [shape: f32[64,128], index: 7, kind: output, shape index: {0}]
  %s8 = inlined_call_operand.vmem [shape: f32[8,128], index: 8, kind: output, shape index: {1}]
  %9 = xla_tuple %s7, %s8
  %s10 = sld [smem:[#allocation0]]
  $region54: #{_lambda_.1} parent=0
    _
  %s12 = ssub.s32 1, %s10
  %s13 = scalar_select 0, %s12, %s10
  // Predicated region
  $region2: #{_lambda_.1} parent=0 // pred_check
    _
  $region3: #{_lambda_.1} parent=0 // pred_check_branch
    %15 = sbr.rel (0) target = $region5
  $region4: #{_lambda_.1} parent=0 // pred_region
    _
  $region5: #{_lambda_.1} parent=0 // pred_fallthru
    _
  // Predicated region
  $region6: #{_lambda_.1} parent=0 // pred_check
    _
  $region7: #{_lambda_.1} parent=0 // pred_check_branch
    %17 = sbr.rel (0) target = $region9
  $region8: #{_lambda_.1} parent=0 // pred_region
    _
  $region9: #{_lambda_.1} parent=0 // pred_fallthru
    _
  // Predicated region
  $region10: #{_lambda_.1} parent=0 // pred_check
    _
  $region11: #{_lambda_.1} parent=0 // pred_check_branch
    %19 = sbr.rel (0) target = $region13
  $region12: #{_lambda_.1} parent=0 // pred_region
    _
  $region13: #{_lambda_.1} parent=0 // pred_fallthru
    _
  // Predicated region
  $region14: #{_lambda_.1} parent=0 // pred_check
    _
  $region15: #{_lambda_.1} parent=0 // pred_check_branch
    %21 = sbr.rel (0) target = $region17
  $region16: #{_lambda_.1} parent=0 // pred_region
    _
  $region17: #{_lambda_.1} parent=0 // pred_fallthru
    _
  // Predicated region
  $region18: #{_lambda_.1} parent=0 // pred_check
    _
  $region19: #{_lambda_.1} parent=0 // pred_check_branch
    %23 = sbr.rel (0) target = $region21
  $region20: #{_lambda_.1} parent=0 // pred_region
    _
  $region21: #{_lambda_.1} parent=0 // pred_fallthru
    _
  // Predicated region
  $region22: #{_lambda_.1} parent=0 // pred_check
    _
  $region23: #{_lambda_.1} parent=0 // pred_check_branch
    %25 = sbr.rel (0) target = $region25
  $region24: #{_lambda_.1} parent=0 // pred_region
    _
  $region25: #{_lambda_.1} parent=0 // pred_fallthru
    _
  // Predicated region
  $region26: #{_lambda_.1} parent=0 // pred_check
    _
  $region27: #{_lambda_.1} parent=0 // pred_check_branch
    %27 = sbr.rel (0) target = $region29
  $region28: #{_lambda_.1} parent=0 // pred_region
    _
  $region29: #{_lambda_.1} parent=0 // pred_fallthru
    _
  %p29 = scmp.eq.s32.totalorder 0, 0
  // Predicated region
  $region30: #{_lambda_.1} parent=0 // pred_check
    %p30 = pneg %p29
  $region31: #{_lambda_.1} parent=0 // pred_check_branch
    %32 = sbr.rel (%p30) target = $region33
  $region32: #{_lambda_.1} parent=0 // pred_region
    %33 = vst [vmem:[#allocation4] sm:$0xff] 0.0
    %34 = vst [vmem:[#allocation4 + $0x8] sm:$0xff] 0.0
    %35 = vst [vmem:[#allocation4 + $0x10] sm:$0xff] 0.0
    %36 = vst [vmem:[#allocation4 + $0x18] sm:$0xff] 0.0
    %37 = vst [vmem:[#allocation5] sm:$0xff] 0.0
    %38 = vst [vmem:[#allocation6] sm:$0xff] 0.0
    %39 = vst [vmem:[#allocation7] sm:$0xff] 0.0
  $region33: #{_lambda_.1} parent=0 // pred_fallthru
    _
  %v40 = vld [vmem:[%s0] sm:$0xf]
  %v41 = vld [vmem:[%s0 + $0x4] sm:$0xf]
  %v42 = vld [vmem:[%s0 + $0x8] sm:$0xf]
  %v43 = vld [vmem:[%s0 + $0xc] sm:$0xf]
  %v44 = vld [vmem:[%s0 + $0x10] sm:$0xf]
  %v45 = vld [vmem:[%s0 + $0x14] sm:$0xf]
  %v46 = vld [vmem:[%s0 + $0x18] sm:$0xf]
  %v47 = vld [vmem:[%s0 + $0x1c] sm:$0xf]
  %v48 = vld [vmem:[%s1] sm:$0xff]
  %v49 = vld [vmem:[%s1 + $0x8] sm:$0xff]
  %v50 = vld [vmem:[%s1 + $0x10] sm:$0xff]
  %v51 = vld [vmem:[%s1 + $0x18] sm:$0xff]
  %v52 = vld [vmem:[%s1 + $0x20] sm:$0xff]
  %v53 = vld [vmem:[%s1 + $0x28] sm:$0xff]
  %v54 = vld [vmem:[%s1 + $0x30] sm:$0xff]
  %v55 = vld [vmem:[%s1 + $0x38] sm:$0xff]
  %v56 = vld [vmem:[%s1 + $0x40] sm:$0xff]
  %v57 = vld [vmem:[%s1 + $0x48] sm:$0xff]
  %v58 = vld [vmem:[%s1 + $0x50] sm:$0xff]
  %v59 = vld [vmem:[%s1 + $0x58] sm:$0xff]
  %v60 = vld [vmem:[%s1 + $0x60] sm:$0xff]
  %v61 = vld [vmem:[%s1 + $0x68] sm:$0xff]
  %v62 = vld [vmem:[%s1 + $0x70] sm:$0xff]
  %v63 = vld [vmem:[%s1 + $0x78] sm:$0xff]
  %v64 = vld [vmem:[%s1 + $0x80] sm:$0xff]
  %v65 = vld [vmem:[%s1 + $0x88] sm:$0xff]
  %v66 = vld [vmem:[%s1 + $0x90] sm:$0xff]
  %v67 = vld [vmem:[%s1 + $0x98] sm:$0xff]
  %v68 = vld [vmem:[%s1 + $0xa0] sm:$0xff]
  %v69 = vld [vmem:[%s1 + $0xa8] sm:$0xff]
  %v70 = vld [vmem:[%s1 + $0xb0] sm:$0xff]
  %v71 = vld [vmem:[%s1 + $0xb8] sm:$0xff]
  %v72 = vld [vmem:[%s1 + $0xc0] sm:$0xff]
  %v73 = vld [vmem:[%s1 + $0xc8] sm:$0xff]
  %v74 = vld [vmem:[%s1 + $0xd0] sm:$0xff]
  %v75 = vld [vmem:[%s1 + $0xd8] sm:$0xff]
  %v76 = vld [vmem:[%s1 + $0xe0] sm:$0xff]
  %v77 = vld [vmem:[%s1 + $0xe8] sm:$0xff]
  %v78 = vld [vmem:[%s1 + $0xf0] sm:$0xff]
  %v79 = vld [vmem:[%s1 + $0xf8] sm:$0xff]
  %v80 = vld [vmem:[%s2] sm:$0xf]
  %v82 = vlaneseq
  %v83 = vshrl.u32 %v82, 7
  %v84 = vsub.s32 0, %v83
  %v85 = vrot.slane %v80, %v84
  %v86 = vlaneseq
  %v87 = vshrl.u32 %v86, 7
  %v88 = vsub.s32 1, %v87
  %v89 = vrot.slane %v80, %v88
  %v90 = vlaneseq
  %v91 = vshrl.u32 %v90, 7
  %v92 = vsub.s32 2, %v91
  %v93 = vrot.slane %v80, %v92
  %v94 = vlaneseq
  %v95 = vshrl.u32 %v94, 7
  %v96 = vsub.s32 3, %v95
  %v97 = vrot.slane %v80, %v96
  %v110 = vunpack.c.l.b16 %v40
  %v111 = vunpack.c.l.b16 %v41
  %v112 = vunpack.c.l.b16 %v42
  %v113 = vunpack.c.l.b16 %v43
  %v114 = vunpack.c.l.b16 %v44
  %v115 = vunpack.c.l.b16 %v45
  %v116 = vunpack.c.l.b16 %v46
  %v117 = vunpack.c.l.b16 %v47
  %v118 = vpack.c.b16 %v111, %v110
  %v119 = vpack.c.b16 %v113, %v112
  %v120 = vpack.c.b16 %v115, %v114
  %v121 = vpack.c.b16 %v117, %v116
  %v158 = vunpack.c.l.b16 %v48
  %v159 = vunpack.c.h.b16 %v48
  %v160 = vunpack.c.l.b16 %v49
  %v161 = vunpack.c.h.b16 %v49
  %v162 = vunpack.c.l.b16 %v50
  %v163 = vunpack.c.h.b16 %v50
  %v164 = vunpack.c.l.b16 %v51
  %v165 = vunpack.c.h.b16 %v51
  %v166 = vunpack.c.l.b16 %v52
  %v167 = vunpack.c.h.b16 %v52
  %v168 = vunpack.c.l.b16 %v53
  %v169 = vunpack.c.h.b16 %v53
  %v170 = vunpack.c.l.b16 %v54
  %v171 = vunpack.c.h.b16 %v54
  %v172 = vunpack.c.l.b16 %v55
  %v173 = vunpack.c.h.b16 %v55
  %v174 = vunpack.c.l.b16 %v56
  %v175 = vunpack.c.h.b16 %v56
  %v176 = vunpack.c.l.b16 %v57
  %v177 = vunpack.c.h.b16 %v57
  %v178 = vunpack.c.l.b16 %v58
  %v179 = vunpack.c.h.b16 %v58
  %v180 = vunpack.c.l.b16 %v59
  %v181 = vunpack.c.h.b16 %v59
  %v182 = vunpack.c.l.b16 %v60
  %v183 = vunpack.c.h.b16 %v60
  %v184 = vunpack.c.l.b16 %v61
  %v185 = vunpack.c.h.b16 %v61
  %v186 = vunpack.c.l.b16 %v62
  %v187 = vunpack.c.h.b16 %v62
  %v188 = vunpack.c.l.b16 %v63
  %v189 = vunpack.c.h.b16 %v63
  %v190 = vunpack.c.l.b16 %v64
  %v191 = vunpack.c.h.b16 %v64
  %v192 = vunpack.c.l.b16 %v65
  %v193 = vunpack.c.h.b16 %v65
  %v194 = vunpack.c.l.b16 %v66
  %v195 = vunpack.c.h.b16 %v66
  %v196 = vunpack.c.l.b16 %v67
  %v197 = vunpack.c.h.b16 %v67
  %v198 = vunpack.c.l.b16 %v68
  %v199 = vunpack.c.h.b16 %v68
  %v200 = vunpack.c.l.b16 %v69
  %v201 = vunpack.c.h.b16 %v69
  %v202 = vunpack.c.l.b16 %v70
  %v203 = vunpack.c.h.b16 %v70
  %v204 = vunpack.c.l.b16 %v71
  %v205 = vunpack.c.h.b16 %v71
  %v206 = vunpack.c.l.b16 %v72
  %v207 = vunpack.c.h.b16 %v72
  %v208 = vunpack.c.l.b16 %v73
  %v209 = vunpack.c.h.b16 %v73
  %v210 = vunpack.c.l.b16 %v74
  %v211 = vunpack.c.h.b16 %v74
  %v212 = vunpack.c.l.b16 %v75
  %v213 = vunpack.c.h.b16 %v75
  %v214 = vunpack.c.l.b16 %v76
  %v215 = vunpack.c.h.b16 %v76
  %v216 = vunpack.c.l.b16 %v77
  %v217 = vunpack.c.h.b16 %v77
  %v218 = vunpack.c.l.b16 %v78
  %v219 = vunpack.c.h.b16 %v78
  %v220 = vunpack.c.l.b16 %v79
  %v221 = vunpack.c.h.b16 %v79
  %v222 = vpack.c.b16 %v162, %v158
  %v223 = vpack.c.b16 %v163, %v159
  %v224 = vpack.c.b16 %v164, %v160
  %v225 = vpack.c.b16 %v165, %v161
  %v226 = vpack.c.b16 %v170, %v166
  %v227 = vpack.c.b16 %v171, %v167
  %v228 = vpack.c.b16 %v172, %v168
  %v229 = vpack.c.b16 %v173, %v169
  %v230 = vpack.c.b16 %v178, %v174
  %v231 = vpack.c.b16 %v179, %v175
  %v232 = vpack.c.b16 %v180, %v176
  %v233 = vpack.c.b16 %v181, %v177
  %v234 = vpack.c.b16 %v186, %v182
  %v235 = vpack.c.b16 %v187, %v183
  %v236 = vpack.c.b16 %v188, %v184
  %v237 = vpack.c.b16 %v189, %v185
  %v238 = vpack.c.b16 %v194, %v190
  %v239 = vpack.c.b16 %v195, %v191
  %v240 = vpack.c.b16 %v196, %v192
  %v241 = vpack.c.b16 %v197, %v193
  %v242 = vpack.c.b16 %v202, %v198
  %v243 = vpack.c.b16 %v203, %v199
  %v244 = vpack.c.b16 %v204, %v200
  %v245 = vpack.c.b16 %v205, %v201
  %v246 = vpack.c.b16 %v210, %v206
  %v247 = vpack.c.b16 %v211, %v207
  %v248 = vpack.c.b16 %v212, %v208
  %v249 = vpack.c.b16 %v213, %v209
  %v250 = vpack.c.b16 %v218, %v214
  %v251 = vpack.c.b16 %v219, %v215
  %v252 = vpack.c.b16 %v220, %v216
  %v253 = vpack.c.b16 %v221, %v217
  %286 = vmatprep.subr.bf16.mxu0 %v251
  %287 = vmatpush1.bf16.msra.mxu0 %v250
  %288 = vmatprep.subr.bf16.mxu0 %v247
  %289 = vmatpush1.bf16.msra.mxu0 %v246
  %290 = vmatprep.subr.bf16.mxu0 %v243
  %291 = vmatpush1.bf16.msra.mxu0 %v242
  %292 = vmatprep.subr.bf16.mxu0 %v239
  %293 = vmatpush1.bf16.msra.mxu0 %v238
  %294 = vmatprep.subr.bf16.mxu0 %v235
  %295 = vmatpush1.bf16.msra.mxu0 %v234
  %296 = vmatprep.subr.bf16.mxu0 %v231
  %297 = vmatpush1.bf16.msra.mxu0 %v230
  %298 = vmatprep.subr.bf16.mxu0 %v227
  %299 = vmatpush1.bf16.msra.mxu0 %v226
  %300 = vmatprep.subr.bf16.mxu0 %v223
  %301 = vmatpush1.bf16.msra.mxu0 %v222
  %302 = vmatprep.subr.bf16.mxu0 0
  %303 = vmatpush2.bf16.msra.mxu0 0
  %304 = vmatprep.subr.bf16.mxu0 0
  %305 = vmatpush2.bf16.msra.mxu0 0
  %306 = vmatprep.subr.bf16.mxu0 0
  %307 = vmatpush2.bf16.msra.mxu0 0
  %308 = vmatprep.subr.bf16.mxu0 0
  %309 = vmatpush2.bf16.msra.mxu0 0
  %310 = vmatprep.subr.bf16.mxu0 0
  %311 = vmatpush2.bf16.msra.mxu0 0
  %312 = vmatprep.subr.bf16.mxu0 0
  %313 = vmatpush2.bf16.msra.mxu0 0
  %314 = vmatprep.subr.bf16.mxu0 0
  %315 = vmatpush2.bf16.msra.mxu0 0
  %316 = vmatprep.subr.bf16.mxu0 0
  %317 = vmatpush2.bf16.msra.mxu0 0
  %318 = vmatprep.mubr.bf16.mxu0 0
  %319 = vmatmul.mubr.bf16.gmra.mxu0 %v118
  %v320 = vpop.f32.mrf.mxu0
  %v321 = vadd.f32 %v85, %v320
  %v322 = vpop.f32.mrf.mxu0
  %v323 = vadd.f32 %v89, %v322
  %v324 = vpop.f32.mrf.mxu0
  %v325 = vadd.f32 %v85, %v324
  %v326 = vpop.f32.mrf.mxu0
  %v327 = vadd.f32 %v89, %v326
  %328 = vmatprep.mubr.bf16.mxu0 0
  %329 = vmatmul.mubr.bf16.gmra.mxu0 %v119
  %v330 = vpop.f32.mrf.mxu0
  %v331 = vadd.f32 %v85, %v330
  %v332 = vpop.f32.mrf.mxu0
  %v333 = vadd.f32 %v89, %v332
  %v334 = vpop.f32.mrf.mxu0
  %v335 = vadd.f32 %v85, %v334
  %v336 = vpop.f32.mrf.mxu0
  %v337 = vadd.f32 %v89, %v336
  %338 = vmatprep.mubr.bf16.mxu0 0
  %339 = vmatmul.mubr.bf16.gmra.mxu0 %v120
  %v340 = vpop.f32.mrf.mxu0
  %v341 = vadd.f32 %v85, %v340
  %v342 = vpop.f32.mrf.mxu0
  %v343 = vadd.f32 %v89, %v342
  %v344 = vpop.f32.mrf.mxu0
  %v345 = vadd.f32 %v85, %v344
  %v346 = vpop.f32.mrf.mxu0
  %v347 = vadd.f32 %v89, %v346
  %348 = vmatprep.mubr.bf16.mxu0 0
  %349 = vmatmul.mubr.bf16.gmra.mxu0 %v121
  %v350 = vpop.f32.mrf.mxu0
  %v351 = vadd.f32 %v85, %v350
  %v352 = vpop.f32.mrf.mxu0
  %v353 = vadd.f32 %v89, %v352
  %v354 = vpop.f32.mrf.mxu0
  %v355 = vadd.f32 %v85, %v354
  %v356 = vpop.f32.mrf.mxu0
  %v357 = vadd.f32 %v89, %v356
  %358 = vdwg.mxu0
  %359 = vmatprep.subr.bf16.mxu0 %v253
  %360 = vmatpush1.bf16.msra.mxu0 %v252
  %361 = vmatprep.subr.bf16.mxu0 %v249
  %362 = vmatpush1.bf16.msra.mxu0 %v248
  %363 = vmatprep.subr.bf16.mxu0 %v245
  %364 = vmatpush1.bf16.msra.mxu0 %v244
  %365 = vmatprep.subr.bf16.mxu0 %v241
  %366 = vmatpush1.bf16.msra.mxu0 %v240
  %367 = vmatprep.subr.bf16.mxu0 %v237
  %368 = vmatpush1.bf16.msra.mxu0 %v236
  %369 = vmatprep.subr.bf16.mxu0 %v233
  %370 = vmatpush1.bf16.msra.mxu0 %v232
  %371 = vmatprep.subr.bf16.mxu0 %v229
  %372 = vmatpush1.bf16.msra.mxu0 %v228
  %373 = vmatprep.subr.bf16.mxu0 %v225
  %374 = vmatpush1.bf16.msra.mxu0 %v224
  %375 = vmatprep.subr.bf16.mxu0 0
  %376 = vmatpush2.bf16.msra.mxu0 0
  %377 = vmatprep.subr.bf16.mxu0 0
  %378 = vmatpush2.bf16.msra.mxu0 0
  %379 = vmatprep.subr.bf16.mxu0 0
  %380 = vmatpush2.bf16.msra.mxu0 0
  %381 = vmatprep.subr.bf16.mxu0 0
  %382 = vmatpush2.bf16.msra.mxu0 0
  %383 = vmatprep.subr.bf16.mxu0 0
  %384 = vmatpush2.bf16.msra.mxu0 0
  %385 = vmatprep.subr.bf16.mxu0 0
  %386 = vmatpush2.bf16.msra.mxu0 0
  %387 = vmatprep.subr.bf16.mxu0 0
  %388 = vmatpush2.bf16.msra.mxu0 0
  %389 = vmatprep.subr.bf16.mxu0 0
  %390 = vmatpush2.bf16.msra.mxu0 0
  %391 = vmatprep.mubr.bf16.mxu0 0
  %392 = vmatmul.mubr.bf16.gmra.mxu0 %v118
  %v393 = vpop.f32.mrf.mxu0
  %v394 = vadd.f32 %v93, %v393
  %v395 = vpop.f32.mrf.mxu0
  %v396 = vadd.f32 %v97, %v395
  %v397 = vpop.f32.mrf.mxu0
  %v398 = vadd.f32 %v93, %v397
  %v399 = vpop.f32.mrf.mxu0
  %v400 = vadd.f32 %v97, %v399
  %401 = vmatprep.mubr.bf16.mxu0 0
  %402 = vmatmul.mubr.bf16.gmra.mxu0 %v119
  %v403 = vpop.f32.mrf.mxu0
  %v404 = vadd.f32 %v93, %v403
  %v405 = vpop.f32.mrf.mxu0
  %v406 = vadd.f32 %v97, %v405
  %v407 = vpop.f32.mrf.mxu0
  %v408 = vadd.f32 %v93, %v407
  %v409 = vpop.f32.mrf.mxu0
  %v410 = vadd.f32 %v97, %v409
  %411 = vmatprep.mubr.bf16.mxu0 0
  %412 = vmatmul.mubr.bf16.gmra.mxu0 %v120
  %v413 = vpop.f32.mrf.mxu0
  %v414 = vadd.f32 %v93, %v413
  %v415 = vpop.f32.mrf.mxu0
  %v416 = vadd.f32 %v97, %v415
  %v417 = vpop.f32.mrf.mxu0
  %v418 = vadd.f32 %v93, %v417
  %v419 = vpop.f32.mrf.mxu0
  %v420 = vadd.f32 %v97, %v419
  %421 = vmatprep.mubr.bf16.mxu0 0
  %422 = vmatmul.mubr.bf16.gmra.mxu0 %v121
  %v423 = vpop.f32.mrf.mxu0
  %v424 = vadd.f32 %v93, %v423
  %v425 = vpop.f32.mrf.mxu0
  %v426 = vadd.f32 %v97, %v425
  %v427 = vpop.f32.mrf.mxu0
  %v428 = vadd.f32 %v93, %v427
  %v429 = vpop.f32.mrf.mxu0
  %v430 = vadd.f32 %v97, %v429
  %431 = vdwg.mxu0
  %432 = vst [vmem:[#allocation2] sm:$0xff] %v321
  %433 = vst [vmem:[#allocation2 + $0x8] sm:$0xff] %v323
  %434 = vst [vmem:[#allocation2 + $0x10] sm:$0xff] %v394
  %435 = vst [vmem:[#allocation2 + $0x18] sm:$0xff] %v396
  %436 = vst [vmem:[#allocation2 + $0x20] sm:$0xff] %v325
  %437 = vst [vmem:[#allocation2 + $0x28] sm:$0xff] %v327
  %438 = vst [vmem:[#allocation2 + $0x30] sm:$0xff] %v398
  %439 = vst [vmem:[#allocation2 + $0x38] sm:$0xff] %v400
  %440 = vst [vmem:[#allocation2 + $0x40] sm:$0xff] %v331
  %441 = vst [vmem:[#allocation2 + $0x48] sm:$0xff] %v333
  %442 = vst [vmem:[#allocation2 + $0x50] sm:$0xff] %v404
  %443 = vst [vmem:[#allocation2 + $0x58] sm:$0xff] %v406
  %444 = vst [vmem:[#allocation2 + $0x60] sm:$0xff] %v335
  %445 = vst [vmem:[#allocation2 + $0x68] sm:$0xff] %v337
  %446 = vst [vmem:[#allocation2 + $0x70] sm:$0xff] %v408
  %447 = vst [vmem:[#allocation2 + $0x78] sm:$0xff] %v410
  %448 = vst [vmem:[#allocation2 + $0x80] sm:$0xff] %v341
  %449 = vst [vmem:[#allocation2 + $0x88] sm:$0xff] %v343
  %450 = vst [vmem:[#allocation2 + $0x90] sm:$0xff] %v414
  %451 = vst [vmem:[#allocation2 + $0x98] sm:$0xff] %v416
  %452 = vst [vmem:[#allocation2 + $0xa0] sm:$0xff] %v345
  %453 = vst [vmem:[#allocation2 + $0xa8] sm:$0xff] %v347
  %454 = vst [vmem:[#allocation2 + $0xb0] sm:$0xff] %v418
  %455 = vst [vmem:[#allocation2 + $0xb8] sm:$0xff] %v420
  %456 = vst [vmem:[#allocation2 + $0xc0] sm:$0xff] %v351
  %457 = vst [vmem:[#allocation2 + $0xc8] sm:$0xff] %v353
  %458 = vst [vmem:[#allocation2 + $0xd0] sm:$0xff] %v424
  %459 = vst [vmem:[#allocation2 + $0xd8] sm:$0xff] %v426
  %460 = vst [vmem:[#allocation2 + $0xe0] sm:$0xff] %v355
  %461 = vst [vmem:[#allocation2 + $0xe8] sm:$0xff] %v357
  %462 = vst [vmem:[#allocation2 + $0xf0] sm:$0xff] %v428
  %463 = vst [vmem:[#allocation2 + $0xf8] sm:$0xff] %v430
  %v464 = vld [vmem:[%s3] sm:$0xff]
  %v465 = vld [vmem:[%s3 + $0x8] sm:$0xff]
  %v466 = vld [vmem:[%s3 + $0x10] sm:$0xff]
  %v467 = vld [vmem:[%s3 + $0x18] sm:$0xff]
  %v468 = vld [vmem:[%s3 + $0x20] sm:$0xff]
  %v469 = vld [vmem:[%s3 + $0x28] sm:$0xff]
  %v470 = vld [vmem:[%s3 + $0x30] sm:$0xff]
  %v471 = vld [vmem:[%s3 + $0x38] sm:$0xff]
  %v472 = vld [vmem:[%s3 + $0x40] sm:$0xff]
  %v473 = vld [vmem:[%s3 + $0x48] sm:$0xff]
  %v474 = vld [vmem:[%s3 + $0x50] sm:$0xff]
  %v475 = vld [vmem:[%s3 + $0x58] sm:$0xff]
  %v476 = vld [vmem:[%s3 + $0x60] sm:$0xff]
  %v477 = vld [vmem:[%s3 + $0x68] sm:$0xff]
  %v478 = vld [vmem:[%s3 + $0x70] sm:$0xff]
  %v479 = vld [vmem:[%s3 + $0x78] sm:$0xff]
  %v480 = vld [vmem:[%s3 + $0x80] sm:$0xff]
  %v481 = vld [vmem:[%s3 + $0x88] sm:$0xff]
  %v482 = vld [vmem:[%s3 + $0x90] sm:$0xff]
  %v483 = vld [vmem:[%s3 + $0x98] sm:$0xff]
  %v484 = vld [vmem:[%s3 + $0xa0] sm:$0xff]
  %v485 = vld [vmem:[%s3 + $0xa8] sm:$0xff]
  %v486 = vld [vmem:[%s3 + $0xb0] sm:$0xff]
  %v487 = vld [vmem:[%s3 + $0xb8] sm:$0xff]
  %v488 = vld [vmem:[%s3 + $0xc0] sm:$0xff]
  %v489 = vld [vmem:[%s3 + $0xc8] sm:$0xff]
  %v490 = vld [vmem:[%s3 + $0xd0] sm:$0xff]
  %v491 = vld [vmem:[%s3 + $0xd8] sm:$0xff]
  %v492 = vld [vmem:[%s3 + $0xe0] sm:$0xff]
  %v493 = vld [vmem:[%s3 + $0xe8] sm:$0xff]
  %v494 = vld [vmem:[%s3 + $0xf0] sm:$0xff]
  %v495 = vld [vmem:[%s3 + $0xf8] sm:$0xff]
  %v496 = vld [vmem:[%s3 + $0x100] sm:$0xff]
  %v497 = vld [vmem:[%s3 + $0x108] sm:$0xff]
  %v498 = vld [vmem:[%s3 + $0x110] sm:$0xff]
  %v499 = vld [vmem:[%s3 + $0x118] sm:$0xff]
  %v500 = vld [vmem:[%s3 + $0x120] sm:$0xff]
  %v501 = vld [vmem:[%s3 + $0x128] sm:$0xff]
  %v502 = vld [vmem:[%s3 + $0x130] sm:$0xff]
  %v503 = vld [vmem:[%s3 + $0x138] sm:$0xff]
  %v504 = vld [vmem:[%s3 + $0x140] sm:$0xff]
  %v505 = vld [vmem:[%s3 + $0x148] sm:$0xff]
  %v506 = vld [vmem:[%s3 + $0x150] sm:$0xff]
  %v507 = vld [vmem:[%s3 + $0x158] sm:$0xff]
  %v508 = vld [vmem:[%s3 + $0x160] sm:$0xff]
  %v509 = vld [vmem:[%s3 + $0x168] sm:$0xff]
  %v510 = vld [vmem:[%s3 + $0x170] sm:$0xff]
  %v511 = vld [vmem:[%s3 + $0x178] sm:$0xff]
  %v512 = vld [vmem:[%s3 + $0x180] sm:$0xff]
  %v513 = vld [vmem:[%s3 + $0x188] sm:$0xff]
  %v514 = vld [vmem:[%s3 + $0x190] sm:$0xff]
  %v515 = vld [vmem:[%s3 + $0x198] sm:$0xff]
  %v516 = vld [vmem:[%s3 + $0x1a0] sm:$0xff]
  %v517 = vld [vmem:[%s3 + $0x1a8] sm:$0xff]
  %v518 = vld [vmem:[%s3 + $0x1b0] sm:$0xff]
  %v519 = vld [vmem:[%s3 + $0x1b8] sm:$0xff]
  %v520 = vld [vmem:[%s3 + $0x1c0] sm:$0xff]
  %v521 = vld [vmem:[%s3 + $0x1c8] sm:$0xff]
  %v522 = vld [vmem:[%s3 + $0x1d0] sm:$0xff]
  %v523 = vld [vmem:[%s3 + $0x1d8] sm:$0xff]
  %v524 = vld [vmem:[%s3 + $0x1e0] sm:$0xff]
  %v525 = vld [vmem:[%s3 + $0x1e8] sm:$0xff]
  %v526 = vld [vmem:[%s3 + $0x1f0] sm:$0xff]
  %v527 = vld [vmem:[%s3 + $0x1f8] sm:$0xff]
  %v528 = vld [vmem:[%s3 + $0x200] sm:$0xff]
  %v529 = vld [vmem:[%s3 + $0x208] sm:$0xff]
  %v530 = vld [vmem:[%s3 + $0x210] sm:$0xff]
  %v531 = vld [vmem:[%s3 + $0x218] sm:$0xff]
  %v532 = vld [vmem:[%s3 + $0x220] sm:$0xff]
  %v533 = vld [vmem:[%s3 + $0x228] sm:$0xff]
  %v534 = vld [vmem:[%s3 + $0x230] sm:$0xff]
  %v535 = vld [vmem:[%s3 + $0x238] sm:$0xff]
  %v536 = vld [vmem:[%s3 + $0x240] sm:$0xff]
  %v537 = vld [vmem:[%s3 + $0x248] sm:$0xff]
  %v538 = vld [vmem:[%s3 + $0x250] sm:$0xff]
  %v539 = vld [vmem:[%s3 + $0x258] sm:$0xff]
  %v540 = vld [vmem:[%s3 + $0x260] sm:$0xff]
  %v541 = vld [vmem:[%s3 + $0x268] sm:$0xff]
  %v542 = vld [vmem:[%s3 + $0x270] sm:$0xff]
  %v543 = vld [vmem:[%s3 + $0x278] sm:$0xff]
  %v544 = vld [vmem:[%s3 + $0x280] sm:$0xff]
  %v545 = vld [vmem:[%s3 + $0x288] sm:$0xff]
  %v546 = vld [vmem:[%s3 + $0x290] sm:$0xff]
  %v547 = vld [vmem:[%s3 + $0x298] sm:$0xff]
  %v548 = vld [vmem:[%s3 + $0x2a0] sm:$0xff]
  %v549 = vld [vmem:[%s3 + $0x2a8] sm:$0xff]
  %v550 = vld [vmem:[%s3 + $0x2b0] sm:$0xff]
  %v551 = vld [vmem:[%s3 + $0x2b8] sm:$0xff]
  %v552 = vld [vmem:[%s3 + $0x2c0] sm:$0xff]
  %v553 = vld [vmem:[%s3 + $0x2c8] sm:$0xff]
  %v554 = vld [vmem:[%s3 + $0x2d0] sm:$0xff]
  %v555 = vld [vmem:[%s3 + $0x2d8] sm:$0xff]
  %v556 = vld [vmem:[%s3 + $0x2e0] sm:$0xff]
  %v557 = vld [vmem:[%s3 + $0x2e8] sm:$0xff]
  %v558 = vld [vmem:[%s3 + $0x2f0] sm:$0xff]
  %v559 = vld [vmem:[%s3 + $0x2f8] sm:$0xff]
  %v560 = vld [vmem:[%s3 + $0x300] sm:$0xff]
  %v561 = vld [vmem:[%s3 + $0x308] sm:$0xff]
  %v562 = vld [vmem:[%s3 + $0x310] sm:$0xff]
  %v563 = vld [vmem:[%s3 + $0x318] sm:$0xff]
  %v564 = vld [vmem:[%s3 + $0x320] sm:$0xff]
  %v565 = vld [vmem:[%s3 + $0x328] sm:$0xff]
  %v566 = vld [vmem:[%s3 + $0x330] sm:$0xff]
  %v567 = vld [vmem:[%s3 + $0x338] sm:$0xff]
  %v568 = vld [vmem:[%s3 + $0x340] sm:$0xff]
  %v569 = vld [vmem:[%s3 + $0x348] sm:$0xff]
  %v570 = vld [vmem:[%s3 + $0x350] sm:$0xff]
  %v571 = vld [vmem:[%s3 + $0x358] sm:$0xff]
  %v572 = vld [vmem:[%s3 + $0x360] sm:$0xff]
  %v573 = vld [vmem:[%s3 + $0x368] sm:$0xff]
  %v574 = vld [vmem:[%s3 + $0x370] sm:$0xff]
  %v575 = vld [vmem:[%s3 + $0x378] sm:$0xff]
  %v576 = vld [vmem:[%s3 + $0x380] sm:$0xff]
  %v577 = vld [vmem:[%s3 + $0x388] sm:$0xff]
  %v578 = vld [vmem:[%s3 + $0x390] sm:$0xff]
  %v579 = vld [vmem:[%s3 + $0x398] sm:$0xff]
  %v580 = vld [vmem:[%s3 + $0x3a0] sm:$0xff]
  %v581 = vld [vmem:[%s3 + $0x3a8] sm:$0xff]
  %v582 = vld [vmem:[%s3 + $0x3b0] sm:$0xff]
  %v583 = vld [vmem:[%s3 + $0x3b8] sm:$0xff]
  %v584 = vld [vmem:[%s3 + $0x3c0] sm:$0xff]
  %v585 = vld [vmem:[%s3 + $0x3c8] sm:$0xff]
  %v586 = vld [vmem:[%s3 + $0x3d0] sm:$0xff]
  %v587 = vld [vmem:[%s3 + $0x3d8] sm:$0xff]
  %v588 = vld [vmem:[%s3 + $0x3e0] sm:$0xff]
  %v589 = vld [vmem:[%s3 + $0x3e8] sm:$0xff]
  %v590 = vld [vmem:[%s3 + $0x3f0] sm:$0xff]
  %v591 = vld [vmem:[%s3 + $0x3f8] sm:$0xff]
  %v592 = vld [vmem:[%s4] sm:$0xf]
  %v594 = vlaneseq
  %v595 = vshrl.u32 %v594, 7
  %v596 = vsub.s32 0, %v595
  %v597 = vrot.slane %v592, %v596
  %v598 = vlaneseq
  %v599 = vshrl.u32 %v598, 7
  %v600 = vsub.s32 1, %v599
  %v601 = vrot.slane %v592, %v600
  %v602 = vlaneseq
  %v603 = vshrl.u32 %v602, 7
  %v604 = vsub.s32 2, %v603
  %v605 = vrot.slane %v592, %v604
  %v606 = vlaneseq
  %v607 = vshrl.u32 %v606, 7
  %v608 = vsub.s32 3, %v607
  %v609 = vrot.slane %v592, %v608
  %v614 = vld [vmem:[#allocation4] sm:$0xff]
  %v615 = vld [vmem:[#allocation4 + $0x8] sm:$0xff]
  %v616 = vld [vmem:[#allocation4 + $0x10] sm:$0xff]
  %v617 = vld [vmem:[#allocation4 + $0x18] sm:$0xff]
  %v618 = vld [vmem:[#allocation5] sm:$0xff]
  %v619 = vld [vmem:[#allocation6] sm:$0xff]
  %v620 = vld [vmem:[#allocation7] sm:$0xff]
  %s621 = smul.u32 0, 4
  %s622 = smul.addr %s621, 8
  %s623 = scalar_lea.vmem [#allocation2], %s622
  %v624 = vld [vmem:[%s623] sm:$0xff]
  %v625 = vld [vmem:[%s623 + $0x8] sm:$0xff]
  %v626 = vld [vmem:[%s623 + $0x10] sm:$0xff]
  %v627 = vld [vmem:[%s623 + $0x18] sm:$0xff]
  %v628 = vadd.f32 %v624, %v614
  %v629 = vadd.f32 %v625, %v615
  %v630 = vadd.f32 %v626, %v616
  %v631 = vadd.f32 %v627, %v617
  %v632 = vmul.f32 %v628, 0.5
  %v633 = vtanh.pop %v632
  %v634 = vmul.f32 %v633, 0.5
  %v635 = vadd.f32 %v634, 0.5
  %v636 = vmul.f32 %v629, 0.5
  %v637 = vtanh.pop %v636
  %v638 = vmul.f32 %v637, 0.5
  %v639 = vadd.f32 %v638, 0.5
  %v640 = vtanh.pop %v630
  %v641 = vmul.f32 %v631, 0.5
  %v642 = vtanh.pop %v641
  %v643 = vmul.f32 %v642, 0.5
  %v644 = vadd.f32 %v643, 0.5
  %v645 = vmul.f32 %v639, %v618
  %v646 = vmul.f32 %v635, %v640
  %v647 = vadd.f32 %v645, %v646
  %v648 = vtanh.pop %v647
  %v649 = vmul.f32 %v644, %v648
  %v650 = vpack.c.bf16 %v649, %v649
  %v651 = vpack.c.bf16 %v619, %v619
  %v780 = vunpack.c.l.b16 %v464
  %v781 = vunpack.c.h.b16 %v464
  %v782 = vunpack.c.l.b16 %v465
  %v783 = vunpack.c.h.b16 %v465
  %v784 = vunpack.c.l.b16 %v466
  %v785 = vunpack.c.h.b16 %v466
  %v786 = vunpack.c.l.b16 %v467
  %v787 = vunpack.c.h.b16 %v467
  %v788 = vunpack.c.l.b16 %v468
  %v789 = vunpack.c.h.b16 %v468
  %v790 = vunpack.c.l.b16 %v469
  %v791 = vunpack.c.h.b16 %v469
  %v792 = vunpack.c.l.b16 %v470
  %v793 = vunpack.c.h.b16 %v470
  %v794 = vunpack.c.l.b16 %v471
  %v795 = vunpack.c.h.b16 %v471
  %v796 = vunpack.c.l.b16 %v472
  %v797 = vunpack.c.h.b16 %v472
  %v798 = vunpack.c.l.b16 %v473
  %v799 = vunpack.c.h.b16 %v473
  %v800 = vunpack.c.l.b16 %v474
  %v801 = vunpack.c.h.b16 %v474
  %v802 = vunpack.c.l.b16 %v475
  %v803 = vunpack.c.h.b16 %v475
  %v804 = vunpack.c.l.b16 %v476
  %v805 = vunpack.c.h.b16 %v476
  %v806 = vunpack.c.l.b16 %v477
  %v807 = vunpack.c.h.b16 %v477
  %v808 = vunpack.c.l.b16 %v478
  %v809 = vunpack.c.h.b16 %v478
  %v810 = vunpack.c.l.b16 %v479
  %v811 = vunpack.c.h.b16 %v479
  %v812 = vunpack.c.l.b16 %v480
  %v813 = vunpack.c.h.b16 %v480
  %v814 = vunpack.c.l.b16 %v481
  %v815 = vunpack.c.h.b16 %v481
  %v816 = vunpack.c.l.b16 %v482
  %v817 = vunpack.c.h.b16 %v482
  %v818 = vunpack.c.l.b16 %v483
  %v819 = vunpack.c.h.b16 %v483
  %v820 = vunpack.c.l.b16 %v484
  %v821 = vunpack.c.h.b16 %v484
  %v822 = vunpack.c.l.b16 %v485
  %v823 = vunpack.c.h.b16 %v485
  %v824 = vunpack.c.l.b16 %v486
  %v825 = vunpack.c.h.b16 %v486
  %v826 = vunpack.c.l.b16 %v487
  %v827 = vunpack.c.h.b16 %v487
  %v828 = vunpack.c.l.b16 %v488
  %v829 = vunpack.c.h.b16 %v488
  %v830 = vunpack.c.l.b16 %v489
  %v831 = vunpack.c.h.b16 %v489
  %v832 = vunpack.c.l.b16 %v490
  %v833 = vunpack.c.h.b16 %v490
  %v834 = vunpack.c.l.b16 %v491
  %v835 = vunpack.c.h.b16 %v491
  %v836 = vunpack.c.l.b16 %v492
  %v837 = vunpack.c.h.b16 %v492
  %v838 = vunpack.c.l.b16 %v493
  %v839 = vunpack.c.h.b16 %v493
  %v840 = vunpack.c.l.b16 %v494
  %v841 = vunpack.c.h.b16 %v494
  %v842 = vunpack.c.l.b16 %v495
  %v843 = vunpack.c.h.b16 %v495
  %v844 = vunpack.c.l.b16 %v496
  %v845 = vunpack.c.h.b16 %v496
  %v846 = vunpack.c.l.b16 %v497
  %v847 = vunpack.c.h.b16 %v497
  %v848 = vunpack.c.l.b16 %v498
  %v849 = vunpack.c.h.b16 %v498
  %v850 = vunpack.c.l.b16 %v499
  %v851 = vunpack.c.h.b16 %v499
  %v852 = vunpack.c.l.b16 %v500
  %v853 = vunpack.c.h.b16 %v500
  %v854 = vunpack.c.l.b16 %v501
  %v855 = vunpack.c.h.b16 %v501
  %v856 = vunpack.c.l.b16 %v502
  %v857 = vunpack.c.h.b16 %v502
  %v858 = vunpack.c.l.b16 %v503
  %v859 = vunpack.c.h.b16 %v503
  %v860 = vunpack.c.l.b16 %v504
  %v861 = vunpack.c.h.b16 %v504
  %v862 = vunpack.c.l.b16 %v505
  %v863 = vunpack.c.h.b16 %v505
  %v864 = vunpack.c.l.b16 %v506
  %v865 = vunpack.c.h.b16 %v506
  %v866 = vunpack.c.l.b16 %v507
  %v867 = vunpack.c.h.b16 %v507
  %v868 = vunpack.c.l.b16 %v508
  %v869 = vunpack.c.h.b16 %v508
  %v870 = vunpack.c.l.b16 %v509
  %v871 = vunpack.c.h.b16 %v509
  %v872 = vunpack.c.l.b16 %v510
  %v873 = vunpack.c.h.b16 %v510
  %v874 = vunpack.c.l.b16 %v511
  %v875 = vunpack.c.h.b16 %v511
  %v876 = vunpack.c.l.b16 %v512
  %v877 = vunpack.c.h.b16 %v512
  %v878 = vunpack.c.l.b16 %v513
  %v879 = vunpack.c.h.b16 %v513
  %v880 = vunpack.c.l.b16 %v514
  %v881 = vunpack.c.h.b16 %v514
  %v882 = vunpack.c.l.b16 %v515
  %v883 = vunpack.c.h.b16 %v515
  %v884 = vunpack.c.l.b16 %v516
  %v885 = vunpack.c.h.b16 %v516
  %v886 = vunpack.c.l.b16 %v517
  %v887 = vunpack.c.h.b16 %v517
  %v888 = vunpack.c.l.b16 %v518
  %v889 = vunpack.c.h.b16 %v518
  %v890 = vunpack.c.l.b16 %v519
  %v891 = vunpack.c.h.b16 %v519
  %v892 = vunpack.c.l.b16 %v520
  %v893 = vunpack.c.h.b16 %v520
  %v894 = vunpack.c.l.b16 %v521
  %v895 = vunpack.c.h.b16 %v521
  %v896 = vunpack.c.l.b16 %v522
  %v897 = vunpack.c.h.b16 %v522
  %v898 = vunpack.c.l.b16 %v523
  %v899 = vunpack.c.h.b16 %v523
  %v900 = vunpack.c.l.b16 %v524
  %v901 = vunpack.c.h.b16 %v524
  %v902 = vunpack.c.l.b16 %v525
  %v903 = vunpack.c.h.b16 %v525
  %v904 = vunpack.c.l.b16 %v526
  %v905 = vunpack.c.h.b16 %v526
  %v906 = vunpack.c.l.b16 %v527
  %v907 = vunpack.c.h.b16 %v527
  %v908 = vunpack.c.l.b16 %v528
  %v909 = vunpack.c.h.b16 %v528
  %v910 = vunpack.c.l.b16 %v529
  %v911 = vunpack.c.h.b16 %v529
  %v912 = vunpack.c.l.b16 %v530
  %v913 = vunpack.c.h.b16 %v530
  %v914 = vunpack.c.l.b16 %v531
  %v915 = vunpack.c.h.b16 %v531
  %v916 = vunpack.c.l.b16 %v532
  %v917 = vunpack.c.h.b16 %v532
  %v918 = vunpack.c.l.b16 %v533
  %v919 = vunpack.c.h.b16 %v533
  %v920 = vunpack.c.l.b16 %v534
  %v921 = vunpack.c.h.b16 %v534
  %v922 = vunpack.c.l.b16 %v535
  %v923 = vunpack.c.h.b16 %v535
  %v924 = vunpack.c.l.b16 %v536
  %v925 = vunpack.c.h.b16 %v536
  %v926 = vunpack.c.l.b16 %v537
  %v927 = vunpack.c.h.b16 %v537
  %v928 = vunpack.c.l.b16 %v538
  %v929 = vunpack.c.h.b16 %v538
  %v930 = vunpack.c.l.b16 %v539
  %v931 = vunpack.c.h.b16 %v539
  %v932 = vunpack.c.l.b16 %v540
  %v933 = vunpack.c.h.b16 %v540
  %v934 = vunpack.c.l.b16 %v541
  %v935 = vunpack.c.h.b16 %v541
  %v936 = vunpack.c.l.b16 %v542
  %v937 = vunpack.c.h.b16 %v542
  %v938 = vunpack.c.l.b16 %v543
  %v939 = vunpack.c.h.b16 %v543
  %v940 = vunpack.c.l.b16 %v544
  %v941 = vunpack.c.h.b16 %v544
  %v942 = vunpack.c.l.b16 %v545
  %v943 = vunpack.c.h.b16 %v545
  %v944 = vunpack.c.l.b16 %v546
  %v945 = vunpack.c.h.b16 %v546
  %v946 = vunpack.c.l.b16 %v547
  %v947 = vunpack.c.h.b16 %v547
  %v948 = vunpack.c.l.b16 %v548
  %v949 = vunpack.c.h.b16 %v548
  %v950 = vunpack.c.l.b16 %v549
  %v951 = vunpack.c.h.b16 %v549
  %v952 = vunpack.c.l.b16 %v550
  %v953 = vunpack.c.h.b16 %v550
  %v954 = vunpack.c.l.b16 %v551
  %v955 = vunpack.c.h.b16 %v551
  %v956 = vunpack.c.l.b16 %v552
  %v957 = vunpack.c.h.b16 %v552
  %v958 = vunpack.c.l.b16 %v553
  %v959 = vunpack.c.h.b16 %v553
  %v960 = vunpack.c.l.b16 %v554
  %v961 = vunpack.c.h.b16 %v554
  %v962 = vunpack.c.l.b16 %v555
  %v963 = vunpack.c.h.b16 %v555
  %v964 = vunpack.c.l.b16 %v556
  %v965 = vunpack.c.h.b16 %v556
  %v966 = vunpack.c.l.b16 %v557
  %v967 = vunpack.c.h.b16 %v557
  %v968 = vunpack.c.l.b16 %v558
  %v969 = vunpack.c.h.b16 %v558
  %v970 = vunpack.c.l.b16 %v559
  %v971 = vunpack.c.h.b16 %v559
  %v972 = vunpack.c.l.b16 %v560
  %v973 = vunpack.c.h.b16 %v560
  %v974 = vunpack.c.l.b16 %v561
  %v975 = vunpack.c.h.b16 %v561
  %v976 = vunpack.c.l.b16 %v562
  %v977 = vunpack.c.h.b16 %v562
  %v978 = vunpack.c.l.b16 %v563
  %v979 = vunpack.c.h.b16 %v563
  %v980 = vunpack.c.l.b16 %v564
  %v981 = vunpack.c.h.b16 %v564
  %v982 = vunpack.c.l.b16 %v565
  %v983 = vunpack.c.h.b16 %v565
  %v984 = vunpack.c.l.b16 %v566
  %v985 = vunpack.c.h.b16 %v566
  %v986 = vunpack.c.l.b16 %v567
  %v987 = vunpack.c.h.b16 %v567
  %v988 = vunpack.c.l.b16 %v568
  %v989 = vunpack.c.h.b16 %v568
  %v990 = vunpack.c.l.b16 %v569
  %v991 = vunpack.c.h.b16 %v569
  %v992 = vunpack.c.l.b16 %v570
  %v993 = vunpack.c.h.b16 %v570
  %v994 = vunpack.c.l.b16 %v571
  %v995 = vunpack.c.h.b16 %v571
  %v996 = vunpack.c.l.b16 %v572
  %v997 = vunpack.c.h.b16 %v572
  %v998 = vunpack.c.l.b16 %v573
  %v999 = vunpack.c.h.b16 %v573
  %v1000 = vunpack.c.l.b16 %v574
  %v1001 = vunpack.c.h.b16 %v574
  %v1002 = vunpack.c.l.b16 %v575
  %v1003 = vunpack.c.h.b16 %v575
  %v1004 = vunpack.c.l.b16 %v576
  %v1005 = vunpack.c.h.b16 %v576
  %v1006 = vunpack.c.l.b16 %v577
  %v1007 = vunpack.c.h.b16 %v577
  %v1008 = vunpack.c.l.b16 %v578
  %v1009 = vunpack.c.h.b16 %v578
  %v1010 = vunpack.c.l.b16 %v579
  %v1011 = vunpack.c.h.b16 %v579
  %v1012 = vunpack.c.l.b16 %v580
  %v1013 = vunpack.c.h.b16 %v580
  %v1014 = vunpack.c.l.b16 %v581
  %v1015 = vunpack.c.h.b16 %v581
  %v1016 = vunpack.c.l.b16 %v582
  %v1017 = vunpack.c.h.b16 %v582
  %v1018 = vunpack.c.l.b16 %v583
  %v1019 = vunpack.c.h.b16 %v583
  %v1020 = vunpack.c.l.b16 %v584
  %v1021 = vunpack.c.h.b16 %v584
  %v1022 = vunpack.c.l.b16 %v585
  %v1023 = vunpack.c.h.b16 %v585
  %v1024 = vunpack.c.l.b16 %v586
  %v1025 = vunpack.c.h.b16 %v586
  %v1026 = vunpack.c.l.b16 %v587
  %v1027 = vunpack.c.h.b16 %v587
  %v1028 = vunpack.c.l.b16 %v588
  %v1029 = vunpack.c.h.b16 %v588
  %v1030 = vunpack.c.l.b16 %v589
  %v1031 = vunpack.c.h.b16 %v589
  %v1032 = vunpack.c.l.b16 %v590
  %v1033 = vunpack.c.h.b16 %v590
  %v1034 = vunpack.c.l.b16 %v591
  %v1035 = vunpack.c.h.b16 %v591
  %v1036 = vpack.c.b16 %v788, %v780
  %v1037 = vpack.c.b16 %v789, %v781
  %v1038 = vpack.c.b16 %v790, %v782
  %v1039 = vpack.c.b16 %v791, %v783
  %v1040 = vpack.c.b16 %v792, %v784
  %v1041 = vpack.c.b16 %v793, %v785
  %v1042 = vpack.c.b16 %v794, %v786
  %v1043 = vpack.c.b16 %v795, %v787
  %v1044 = vpack.c.b16 %v804, %v796
  %v1045 = vpack.c.b16 %v805, %v797
  %v1046 = vpack.c.b16 %v806, %v798
  %v1047 = vpack.c.b16 %v807, %v799
  %v1048 = vpack.c.b16 %v808, %v800
  %v1049 = vpack.c.b16 %v809, %v801
  %v1050 = vpack.c.b16 %v810, %v802
  %v1051 = vpack.c.b16 %v811, %v803
  %v1052 = vpack.c.b16 %v820, %v812
  %v1053 = vpack.c.b16 %v821, %v813
  %v1054 = vpack.c.b16 %v822, %v814
  %v1055 = vpack.c.b16 %v823, %v815
  %v1056 = vpack.c.b16 %v824, %v816
  %v1057 = vpack.c.b16 %v825, %v817
  %v1058 = vpack.c.b16 %v826, %v818
  %v1059 = vpack.c.b16 %v827, %v819
  %v1060 = vpack.c.b16 %v836, %v828
  %v1061 = vpack.c.b16 %v837, %v829
  %v1062 = vpack.c.b16 %v838, %v830
  %v1063 = vpack.c.b16 %v839, %v831
  %v1064 = vpack.c.b16 %v840, %v832
  %v1065 = vpack.c.b16 %v841, %v833
  %v1066 = vpack.c.b16 %v842, %v834
  %v1067 = vpack.c.b16 %v843, %v835
  %v1068 = vpack.c.b16 %v852, %v844
  %v1069 = vpack.c.b16 %v853, %v845
  %v1070 = vpack.c.b16 %v854, %v846
  %v1071 = vpack.c.b16 %v855, %v847
  %v1072 = vpack.c.b16 %v856, %v848
  %v1073 = vpack.c.b16 %v857, %v849
  %v1074 = vpack.c.b16 %v858, %v850
  %v1075 = vpack.c.b16 %v859, %v851
  %v1076 = vpack.c.b16 %v868, %v860
  %v1077 = vpack.c.b16 %v869, %v861
  %v1078 = vpack.c.b16 %v870, %v862
  %v1079 = vpack.c.b16 %v871, %v863
  %v1080 = vpack.c.b16 %v872, %v864
  %v1081 = vpack.c.b16 %v873, %v865
  %v1082 = vpack.c.b16 %v874, %v866
  %v1083 = vpack.c.b16 %v875, %v867
  %v1084 = vpack.c.b16 %v884, %v876
  %v1085 = vpack.c.b16 %v885, %v877
  %v1086 = vpack.c.b16 %v886, %v878
  %v1087 = vpack.c.b16 %v887, %v879
  %v1088 = vpack.c.b16 %v888, %v880
  %v1089 = vpack.c.b16 %v889, %v881
  %v1090 = vpack.c.b16 %v890, %v882
  %v1091 = vpack.c.b16 %v891, %v883
  %v1092 = vpack.c.b16 %v900, %v892
  %v1093 = vpack.c.b16 %v901, %v893
  %v1094 = vpack.c.b16 %v902, %v894
  %v1095 = vpack.c.b16 %v903, %v895
  %v1096 = vpack.c.b16 %v904, %v896
  %v1097 = vpack.c.b16 %v905, %v897
  %v1098 = vpack.c.b16 %v906, %v898
  %v1099 = vpack.c.b16 %v907, %v899
  %v1100 = vpack.c.b16 %v916, %v908
  %v1101 = vpack.c.b16 %v917, %v909
  %v1102 = vpack.c.b16 %v918, %v910
  %v1103 = vpack.c.b16 %v919, %v911
  %v1104 = vpack.c.b16 %v920, %v912
  %v1105 = vpack.c.b16 %v921, %v913
  %v1106 = vpack.c.b16 %v922, %v914
  %v1107 = vpack.c.b16 %v923, %v915
  %v1108 = vpack.c.b16 %v932, %v924
  %v1109 = vpack.c.b16 %v933, %v925
  %v1110 = vpack.c.b16 %v934, %v926
  %v1111 = vpack.c.b16 %v935, %v927
  %v1112 = vpack.c.b16 %v936, %v928
  %v1113 = vpack.c.b16 %v937, %v929
  %v1114 = vpack.c.b16 %v938, %v930
  %v1115 = vpack.c.b16 %v939, %v931
  %v1116 = vpack.c.b16 %v948, %v940
  %v1117 = vpack.c.b16 %v949, %v941
  %v1118 = vpack.c.b16 %v950, %v942
  %v1119 = vpack.c.b16 %v951, %v943
  %v1120 = vpack.c.b16 %v952, %v944
  %v1121 = vpack.c.b16 %v953, %v945
  %v1122 = vpack.c.b16 %v954, %v946
  %v1123 = vpack.c.b16 %v955, %v947
  %v1124 = vpack.c.b16 %v964, %v956
  %v1125 = vpack.c.b16 %v965, %v957
  %v1126 = vpack.c.b16 %v966, %v958
  %v1127 = vpack.c.b16 %v967, %v959
  %v1128 = vpack.c.b16 %v968, %v960
  %v1129 = vpack.c.b16 %v969, %v961
  %v1130 = vpack.c.b16 %v970, %v962
  %v1131 = vpack.c.b16 %v971, %v963
  %v1132 = vpack.c.b16 %v980, %v972
  %v1133 = vpack.c.b16 %v981, %v973
  %v1134 = vpack.c.b16 %v982, %v974
  %v1135 = vpack.c.b16 %v983, %v975
  %v1136 = vpack.c.b16 %v984, %v976
  %v1137 = vpack.c.b16 %v985, %v977
  %v1138 = vpack.c.b16 %v986, %v978
  %v1139 = vpack.c.b16 %v987, %v979
  %v1140 = vpack.c.b16 %v996, %v988
  %v1141 = vpack.c.b16 %v997, %v989
  %v1142 = vpack.c.b16 %v998, %v990
  %v1143 = vpack.c.b16 %v999, %v991
  %v1144 = vpack.c.b16 %v1000, %v992
  %v1145 = vpack.c.b16 %v1001, %v993
  %v1146 = vpack.c.b16 %v1002, %v994
  %v1147 = vpack.c.b16 %v1003, %v995
  %v1148 = vpack.c.b16 %v1012, %v1004
  %v1149 = vpack.c.b16 %v1013, %v1005
  %v1150 = vpack.c.b16 %v1014, %v1006
  %v1151 = vpack.c.b16 %v1015, %v1007
  %v1152 = vpack.c.b16 %v1016, %v1008
  %v1153 = vpack.c.b16 %v1017, %v1009
  %v1154 = vpack.c.b16 %v1018, %v1010
  %v1155 = vpack.c.b16 %v1019, %v1011
  %v1156 = vpack.c.b16 %v1028, %v1020
  %v1157 = vpack.c.b16 %v1029, %v1021
  %v1158 = vpack.c.b16 %v1030, %v1022
  %v1159 = vpack.c.b16 %v1031, %v1023
  %v1160 = vpack.c.b16 %v1032, %v1024
  %v1161 = vpack.c.b16 %v1033, %v1025
  %v1162 = vpack.c.b16 %v1034, %v1026
  %v1163 = vpack.c.b16 %v1035, %v1027
  %1292 = vmatprep.subr.bf16.mxu0 %v1093
  %1293 = vmatpush1.bf16.msra.mxu0 %v1092
  %1294 = vmatprep.subr.bf16.mxu0 %v1085
  %1295 = vmatpush1.bf16.msra.mxu0 %v1084
  %1296 = vmatprep.subr.bf16.mxu0 %v1077
  %1297 = vmatpush1.bf16.msra.mxu0 %v1076
  %1298 = vmatprep.subr.bf16.mxu0 %v1069
  %1299 = vmatpush1.bf16.msra.mxu0 %v1068
  %1300 = vmatprep.subr.bf16.mxu0 %v1061
  %1301 = vmatpush1.bf16.msra.mxu0 %v1060
  %1302 = vmatprep.subr.bf16.mxu0 %v1053
  %1303 = vmatpush1.bf16.msra.mxu0 %v1052
  %1304 = vmatprep.subr.bf16.mxu0 %v1045
  %1305 = vmatpush1.bf16.msra.mxu0 %v1044
  %1306 = vmatprep.subr.bf16.mxu0 %v1037
  %1307 = vmatpush1.bf16.msra.mxu0 %v1036
  %1308 = vmatprep.subr.bf16.mxu0 %v1157
  %1309 = vmatpush2.bf16.msra.mxu0 %v1156
  %1310 = vmatprep.subr.bf16.mxu0 %v1149
  %1311 = vmatpush2.bf16.msra.mxu0 %v1148
  %1312 = vmatprep.subr.bf16.mxu0 %v1141
  %1313 = vmatpush2.bf16.msra.mxu0 %v1140
  %1314 = vmatprep.subr.bf16.mxu0 %v1133
  %1315 = vmatpush2.bf16.msra.mxu0 %v1132
  %1316 = vmatprep.subr.bf16.mxu0 %v1125
  %1317 = vmatpush2.bf16.msra.mxu0 %v1124
  %1318 = vmatprep.subr.bf16.mxu0 %v1117
  %1319 = vmatpush2.bf16.msra.mxu0 %v1116
  %1320 = vmatprep.subr.bf16.mxu0 %v1109
  %1321 = vmatpush2.bf16.msra.mxu0 %v1108
  %1322 = vmatprep.subr.bf16.mxu0 %v1101
  %1323 = vmatpush2.bf16.msra.mxu0 %v1100
  %1324 = vmatprep.mubr.bf16.mxu0 %v651
  %1325 = vmatmul.mubr.bf16.gmra.mxu0 %v650
  %v1326 = vpop.f32.mrf.mxu0
  %v1327 = vadd.f32 0.0, %v1326
  %v1328 = vpop.f32.mrf.mxu0
  %v1329 = vadd.f32 0.0, %v1328
  %v1330 = vpop.f32.mrf.mxu0
  %v1331 = vpop.f32.mrf.mxu0
  %1332 = vdwg.mxu0
  %1333 = vmatprep.subr.bf16.mxu0 %v1095
  %1334 = vmatpush1.bf16.msra.mxu0 %v1094
  %1335 = vmatprep.subr.bf16.mxu0 %v1087
  %1336 = vmatpush1.bf16.msra.mxu0 %v1086
  %1337 = vmatprep.subr.bf16.mxu0 %v1079
  %1338 = vmatpush1.bf16.msra.mxu0 %v1078
  %1339 = vmatprep.subr.bf16.mxu0 %v1071
  %1340 = vmatpush1.bf16.msra.mxu0 %v1070
  %1341 = vmatprep.subr.bf16.mxu0 %v1063
  %1342 = vmatpush1.bf16.msra.mxu0 %v1062
  %1343 = vmatprep.subr.bf16.mxu0 %v1055
  %1344 = vmatpush1.bf16.msra.mxu0 %v1054
  %1345 = vmatprep.subr.bf16.mxu0 %v1047
  %1346 = vmatpush1.bf16.msra.mxu0 %v1046
  %1347 = vmatprep.subr.bf16.mxu0 %v1039
  %1348 = vmatpush1.bf16.msra.mxu0 %v1038
  %1349 = vmatprep.subr.bf16.mxu0 %v1159
  %1350 = vmatpush2.bf16.msra.mxu0 %v1158
  %1351 = vmatprep.subr.bf16.mxu0 %v1151
  %1352 = vmatpush2.bf16.msra.mxu0 %v1150
  %1353 = vmatprep.subr.bf16.mxu0 %v1143
  %1354 = vmatpush2.bf16.msra.mxu0 %v1142
  %1355 = vmatprep.subr.bf16.mxu0 %v1135
  %1356 = vmatpush2.bf16.msra.mxu0 %v1134
  %1357 = vmatprep.subr.bf16.mxu0 %v1127
  %1358 = vmatpush2.bf16.msra.mxu0 %v1126
  %1359 = vmatprep.subr.bf16.mxu0 %v1119
  %1360 = vmatpush2.bf16.msra.mxu0 %v1118
  %1361 = vmatprep.subr.bf16.mxu0 %v1111
  %1362 = vmatpush2.bf16.msra.mxu0 %v1110
  %1363 = vmatprep.subr.bf16.mxu0 %v1103
  %1364 = vmatpush2.bf16.msra.mxu0 %v1102
  %1365 = vmatprep.mubr.bf16.mxu0 %v651
  %1366 = vmatmul.mubr.bf16.gmra.mxu0 %v650
  %v1367 = vpop.f32.mrf.mxu0
  %v1368 = vadd.f32 0.0, %v1367
  %v1369 = vpop.f32.mrf.mxu0
  %v1370 = vadd.f32 0.0, %v1369
  %v1371 = vpop.f32.mrf.mxu0
  %v1372 = vpop.f32.mrf.mxu0
  %1373 = vdwg.mxu0
  %1374 = vmatprep.subr.bf16.mxu0 %v1097
  %1375 = vmatpush1.bf16.msra.mxu0 %v1096
  %1376 = vmatprep.subr.bf16.mxu0 %v1089
  %1377 = vmatpush1.bf16.msra.mxu0 %v1088
  %1378 = vmatprep.subr.bf16.mxu0 %v1081
  %1379 = vmatpush1.bf16.msra.mxu0 %v1080
  %1380 = vmatprep.subr.bf16.mxu0 %v1073
  %1381 = vmatpush1.bf16.msra.mxu0 %v1072
  %1382 = vmatprep.subr.bf16.mxu0 %v1065
  %1383 = vmatpush1.bf16.msra.mxu0 %v1064
  %1384 = vmatprep.subr.bf16.mxu0 %v1057
  %1385 = vmatpush1.bf16.msra.mxu0 %v1056
  %1386 = vmatprep.subr.bf16.mxu0 %v1049
  %1387 = vmatpush1.bf16.msra.mxu0 %v1048
  %1388 = vmatprep.subr.bf16.mxu0 %v1041
  %1389 = vmatpush1.bf16.msra.mxu0 %v1040
  %1390 = vmatprep.subr.bf16.mxu0 %v1161
  %1391 = vmatpush2.bf16.msra.mxu0 %v1160
  %1392 = vmatprep.subr.bf16.mxu0 %v1153
  %1393 = vmatpush2.bf16.msra.mxu0 %v1152
  %1394 = vmatprep.subr.bf16.mxu0 %v1145
  %1395 = vmatpush2.bf16.msra.mxu0 %v1144
  %1396 = vmatprep.subr.bf16.mxu0 %v1137
  %1397 = vmatpush2.bf16.msra.mxu0 %v1136
  %1398 = vmatprep.subr.bf16.mxu0 %v1129
  %1399 = vmatpush2.bf16.msra.mxu0 %v1128
  %1400 = vmatprep.subr.bf16.mxu0 %v1121
  %1401 = vmatpush2.bf16.msra.mxu0 %v1120
  %1402 = vmatprep.subr.bf16.mxu0 %v1113
  %1403 = vmatpush2.bf16.msra.mxu0 %v1112
  %1404 = vmatprep.subr.bf16.mxu0 %v1105
  %1405 = vmatpush2.bf16.msra.mxu0 %v1104
  %1406 = vmatprep.mubr.bf16.mxu0 %v651
  %1407 = vmatmul.mubr.bf16.gmra.mxu0 %v650
  %v1408 = vpop.f32.mrf.mxu0
  %v1409 = vadd.f32 0.0, %v1408
  %v1410 = vpop.f32.mrf.mxu0
  %v1411 = vadd.f32 0.0, %v1410
  %v1412 = vpop.f32.mrf.mxu0
  %v1413 = vpop.f32.mrf.mxu0
  %1414 = vdwg.mxu0
  %1415 = vmatprep.subr.bf16.mxu0 %v1099
  %1416 = vmatpush1.bf16.msra.mxu0 %v1098
  %1417 = vmatprep.subr.bf16.mxu0 %v1091
  %1418 = vmatpush1.bf16.msra.mxu0 %v1090
  %1419 = vmatprep.subr.bf16.mxu0 %v1083
  %1420 = vmatpush1.bf16.msra.mxu0 %v1082
  %1421 = vmatprep.subr.bf16.mxu0 %v1075
  %1422 = vmatpush1.bf16.msra.mxu0 %v1074
  %1423 = vmatprep.subr.bf16.mxu0 %v1067
  %1424 = vmatpush1.bf16.msra.mxu0 %v1066
  %1425 = vmatprep.subr.bf16.mxu0 %v1059
  %1426 = vmatpush1.bf16.msra.mxu0 %v1058
  %1427 = vmatprep.subr.bf16.mxu0 %v1051
  %1428 = vmatpush1.bf16.msra.mxu0 %v1050
  %1429 = vmatprep.subr.bf16.mxu0 %v1043
  %1430 = vmatpush1.bf16.msra.mxu0 %v1042
  %1431 = vmatprep.subr.bf16.mxu0 %v1163
  %1432 = vmatpush2.bf16.msra.mxu0 %v1162
  %1433 = vmatprep.subr.bf16.mxu0 %v1155
  %1434 = vmatpush2.bf16.msra.mxu0 %v1154
  %1435 = vmatprep.subr.bf16.mxu0 %v1147
  %1436 = vmatpush2.bf16.msra.mxu0 %v1146
  %1437 = vmatprep.subr.bf16.mxu0 %v1139
  %1438 = vmatpush2.bf16.msra.mxu0 %v1138
  %1439 = vmatprep.subr.bf16.mxu0 %v1131
  %1440 = vmatpush2.bf16.msra.mxu0 %v1130
  %1441 = vmatprep.subr.bf16.mxu0 %v1123
  %1442 = vmatpush2.bf16.msra.mxu0 %v1122
  %1443 = vmatprep.subr.bf16.mxu0 %v1115
  %1444 = vmatpush2.bf16.msra.mxu0 %v1114
  %1445 = vmatprep.subr.bf16.mxu0 %v1107
  %1446 = vmatpush2.bf16.msra.mxu0 %v1106
  %1447 = vmatprep.mubr.bf16.mxu0 %v651
  %1448 = vmatmul.mubr.bf16.gmra.mxu0 %v650
  %v1449 = vpop.f32.mrf.mxu0
  %v1450 = vadd.f32 0.0, %v1449
  %v1451 = vpop.f32.mrf.mxu0
  %v1452 = vadd.f32 0.0, %v1451
  %v1453 = vpop.f32.mrf.mxu0
  %v1454 = vpop.f32.mrf.mxu0
  %1455 = vdwg.mxu0
  %v1456 = vadd.f32 %v1327, %v597
  %v1457 = vadd.f32 %v1329, %v601
  %v1458 = vadd.f32 %v1368, %v605
  %v1459 = vadd.f32 %v1370, %v609
  %v1460 = vmul.f32 %v1456, 0.5
  %v1461 = vtanh.pop %v1460
  %v1462 = vmul.f32 %v1461, 0.5
  %v1463 = vadd.f32 %v1462, 0.5
  %v1464 = vmul.f32 %v1457, 0.5
  %v1465 = vtanh.pop %v1464
  %v1466 = vmul.f32 %v1465, 0.5
  %v1467 = vadd.f32 %v1466, 0.5
  %v1468 = vtanh.pop %v1458
  %v1469 = vmul.f32 %v1459, 0.5
  %v1470 = vtanh.pop %v1469
  %v1471 = vmul.f32 %v1470, 0.5
  %v1472 = vadd.f32 %v1471, 0.5
  %v1473 = vmul.f32 %v1467, %v620
  %v1474 = vmul.f32 %v1463, %v1468
  %v1475 = vadd.f32 %v1473, %v1474
  %v1476 = vtanh.pop %v1475
  %v1477 = vmul.f32 %v1472, %v1476
  %1478 = vst [vmem:[#allocation3] sm:$0xff] %v1477
  %s1479 = smul.u32 1, 4
  %s1480 = smul.addr %s1479, 8
  %s1481 = scalar_lea.vmem [#allocation2], %s1480
  %v1482 = vld [vmem:[%s1481] sm:$0xff]
  %v1483 = vld [vmem:[%s1481 + $0x8] sm:$0xff]
  %v1484 = vld [vmem:[%s1481 + $0x10] sm:$0xff]
  %v1485 = vld [vmem:[%s1481 + $0x18] sm:$0xff]
  %v1486 = vadd.f32 %v1482, %v1409
  %v1487 = vadd.f32 %v1483, %v1411
  %v1488 = vadd.f32 %v1484, %v1450
  %v1489 = vadd.f32 %v1485, %v1452
  %v1490 = vmul.f32 %v1486, 0.5
  %v1491 = vtanh.pop %v1490
  %v1492 = vmul.f32 %v1491, 0.5
  %v1493 = vadd.f32 %v1492, 0.5
  %v1494 = vmul.f32 %v1487, 0.5
  %v1495 = vtanh.pop %v1494
  %v1496 = vmul.f32 %v1495, 0.5
  %v1497 = vadd.f32 %v1496, 0.5
  %v1498 = vtanh.pop %v1488
  %v1499 = vmul.f32 %v1489, 0.5
  %v1500 = vtanh.pop %v1499
  %v1501 = vmul.f32 %v1500, 0.5
  %v1502 = vadd.f32 %v1501, 0.5
  %v1503 = vmul.f32 %v1497, %v647
  %v1504 = vmul.f32 %v1493, %v1498
  %v1505 = vadd.f32 %v1503, %v1504
  %v1506 = vtanh.pop %v1505
  %v1507 = vmul.f32 %v1502, %v1506
  %v1508 = vpack.c.bf16 %v1507, %v1507
  %v1509 = vpack.c.bf16 %v1477, %v1477
  %1510 = vmatprep.subr.bf16.mxu0 %v1093
  %1511 = vmatpush1.bf16.msra.mxu0 %v1092
  %1512 = vmatprep.subr.bf16.mxu0 %v1085
  %1513 = vmatpush1.bf16.msra.mxu0 %v1084
  %1514 = vmatprep.subr.bf16.mxu0 %v1077
  %1515 = vmatpush1.bf16.msra.mxu0 %v1076
  %1516 = vmatprep.subr.bf16.mxu0 %v1069
  %1517 = vmatpush1.bf16.msra.mxu0 %v1068
  %1518 = vmatprep.subr.bf16.mxu0 %v1061
  %1519 = vmatpush1.bf16.msra.mxu0 %v1060
  %1520 = vmatprep.subr.bf16.mxu0 %v1053
  %1521 = vmatpush1.bf16.msra.mxu0 %v1052
  %1522 = vmatprep.subr.bf16.mxu0 %v1045
  %1523 = vmatpush1.bf16.msra.mxu0 %v1044
  %1524 = vmatprep.subr.bf16.mxu0 %v1037
  %1525 = vmatpush1.bf16.msra.mxu0 %v1036
  %1526 = vmatprep.subr.bf16.mxu0 %v1157
  %1527 = vmatpush2.bf16.msra.mxu0 %v1156
  %1528 = vmatprep.subr.bf16.mxu0 %v1149
  %1529 = vmatpush2.bf16.msra.mxu0 %v1148
  %1530 = vmatprep.subr.bf16.mxu0 %v1141
  %1531 = vmatpush2.bf16.msra.mxu0 %v1140
  %1532 = vmatprep.subr.bf16.mxu0 %v1133
  %1533 = vmatpush2.bf16.msra.mxu0 %v1132
  %1534 = vmatprep.subr.bf16.mxu0 %v1125
  %1535 = vmatpush2.bf16.msra.mxu0 %v1124
  %1536 = vmatprep.subr.bf16.mxu0 %v1117
  %1537 = vmatpush2.bf16.msra.mxu0 %v1116
  %1538 = vmatprep.subr.bf16.mxu0 %v1109
  %1539 = vmatpush2.bf16.msra.mxu0 %v1108
  %1540 = vmatprep.subr.bf16.mxu0 %v1101
  %1541 = vmatpush2.bf16.msra.mxu0 %v1100
  %1542 = vmatprep.mubr.bf16.mxu0 %v1509
  %1543 = vmatmul.mubr.bf16.gmra.mxu0 %v1508
  %v1544 = vpop.f32.mrf.mxu0
  %v1545 = vadd.f32 0.0, %v1544
  %v1546 = vpop.f32.mrf.mxu0
  %v1547 = vadd.f32 0.0, %v1546
  %v1548 = vpop.f32.mrf.mxu0
  %v1549 = vpop.f32.mrf.mxu0
  %1550 = vdwg.mxu0
  %1551 = vmatprep.subr.bf16.mxu0 %v1095
  %1552 = vmatpush1.bf16.msra.mxu0 %v1094
  %1553 = vmatprep.subr.bf16.mxu0 %v1087
  %1554 = vmatpush1.bf16.msra.mxu0 %v1086
  %1555 = vmatprep.subr.bf16.mxu0 %v1079
  %1556 = vmatpush1.bf16.msra.mxu0 %v1078
  %1557 = vmatprep.subr.bf16.mxu0 %v1071
  %1558 = vmatpush1.bf16.msra.mxu0 %v1070
  %1559 = vmatprep.subr.bf16.mxu0 %v1063
  %1560 = vmatpush1.bf16.msra.mxu0 %v1062
  %1561 = vmatprep.subr.bf16.mxu0 %v1055
  %1562 = vmatpush1.bf16.msra.mxu0 %v1054
  %1563 = vmatprep.subr.bf16.mxu0 %v1047
  %1564 = vmatpush1.bf16.msra.mxu0 %v1046
  %1565 = vmatprep.subr.bf16.mxu0 %v1039
  %1566 = vmatpush1.bf16.msra.mxu0 %v1038
  %1567 = vmatprep.subr.bf16.mxu0 %v1159
  %1568 = vmatpush2.bf16.msra.mxu0 %v1158
  %1569 = vmatprep.subr.bf16.mxu0 %v1151
  %1570 = vmatpush2.bf16.msra.mxu0 %v1150
  %1571 = vmatprep.subr.bf16.mxu0 %v1143
  %1572 = vmatpush2.bf16.msra.mxu0 %v1142
  %1573 = vmatprep.subr.bf16.mxu0 %v1135
  %1574 = vmatpush2.bf16.msra.mxu0 %v1134
  %1575 = vmatprep.subr.bf16.mxu0 %v1127
  %1576 = vmatpush2.bf16.msra.mxu0 %v1126
  %1577 = vmatprep.subr.bf16.mxu0 %v1119
  %1578 = vmatpush2.bf16.msra.mxu0 %v1118
  %1579 = vmatprep.subr.bf16.mxu0 %v1111
  %1580 = vmatpush2.bf16.msra.mxu0 %v1110
  %1581 = vmatprep.subr.bf16.mxu0 %v1103
  %1582 = vmatpush2.bf16.msra.mxu0 %v1102
  %1583 = vmatprep.mubr.bf16.mxu0 %v1509
  %1584 = vmatmul.mubr.bf16.gmra.mxu0 %v1508
  %v1585 = vpop.f32.mrf.mxu0
  %v1586 = vadd.f32 0.0, %v1585
  %v1587 = vpop.f32.mrf.mxu0
  %v1588 = vadd.f32 0.0, %v1587
  %v1589 = vpop.f32.mrf.mxu0
  %v1590 = vpop.f32.mrf.mxu0
  %1591 = vdwg.mxu0
  %1592 = vmatprep.subr.bf16.mxu0 %v1097
  %1593 = vmatpush1.bf16.msra.mxu0 %v1096
  %1594 = vmatprep.subr.bf16.mxu0 %v1089
  %1595 = vmatpush1.bf16.msra.mxu0 %v1088
  %1596 = vmatprep.subr.bf16.mxu0 %v1081
  %1597 = vmatpush1.bf16.msra.mxu0 %v1080
  %1598 = vmatprep.subr.bf16.mxu0 %v1073
  %1599 = vmatpush1.bf16.msra.mxu0 %v1072
  %1600 = vmatprep.subr.bf16.mxu0 %v1065
  %1601 = vmatpush1.bf16.msra.mxu0 %v1064
  %1602 = vmatprep.subr.bf16.mxu0 %v1057
  %1603 = vmatpush1.bf16.msra.mxu0 %v1056
  %1604 = vmatprep.subr.bf16.mxu0 %v1049
  %1605 = vmatpush1.bf16.msra.mxu0 %v1048
  %1606 = vmatprep.subr.bf16.mxu0 %v1041
  %1607 = vmatpush1.bf16.msra.mxu0 %v1040
  %1608 = vmatprep.subr.bf16.mxu0 %v1161
  %1609 = vmatpush2.bf16.msra.mxu0 %v1160
  %1610 = vmatprep.subr.bf16.mxu0 %v1153
  %1611 = vmatpush2.bf16.msra.mxu0 %v1152
  %1612 = vmatprep.subr.bf16.mxu0 %v1145
  %1613 = vmatpush2.bf16.msra.mxu0 %v1144
  %1614 = vmatprep.subr.bf16.mxu0 %v1137
  %1615 = vmatpush2.bf16.msra.mxu0 %v1136
  %1616 = vmatprep.subr.bf16.mxu0 %v1129
  %1617 = vmatpush2.bf16.msra.mxu0 %v1128
  %1618 = vmatprep.subr.bf16.mxu0 %v1121
  %1619 = vmatpush2.bf16.msra.mxu0 %v1120
  %1620 = vmatprep.subr.bf16.mxu0 %v1113
  %1621 = vmatpush2.bf16.msra.mxu0 %v1112
  %1622 = vmatprep.subr.bf16.mxu0 %v1105
  %1623 = vmatpush2.bf16.msra.mxu0 %v1104
  %1624 = vmatprep.mubr.bf16.mxu0 %v1509
  %1625 = vmatmul.mubr.bf16.gmra.mxu0 %v1508
  %v1626 = vpop.f32.mrf.mxu0
  %v1627 = vadd.f32 0.0, %v1626
  %v1628 = vpop.f32.mrf.mxu0
  %v1629 = vadd.f32 0.0, %v1628
  %v1630 = vpop.f32.mrf.mxu0
  %v1631 = vpop.f32.mrf.mxu0
  %1632 = vdwg.mxu0
  %1633 = vmatprep.subr.bf16.mxu0 %v1099
  %1634 = vmatpush1.bf16.msra.mxu0 %v1098
  %1635 = vmatprep.subr.bf16.mxu0 %v1091
  %1636 = vmatpush1.bf16.msra.mxu0 %v1090
  %1637 = vmatprep.subr.bf16.mxu0 %v1083
  %1638 = vmatpush1.bf16.msra.mxu0 %v1082
  %1639 = vmatprep.subr.bf16.mxu0 %v1075
  %1640 = vmatpush1.bf16.msra.mxu0 %v1074
  %1641 = vmatprep.subr.bf16.mxu0 %v1067
  %1642 = vmatpush1.bf16.msra.mxu0 %v1066
  %1643 = vmatprep.subr.bf16.mxu0 %v1059
  %1644 = vmatpush1.bf16.msra.mxu0 %v1058
  %1645 = vmatprep.subr.bf16.mxu0 %v1051
  %1646 = vmatpush1.bf16.msra.mxu0 %v1050
  %1647 = vmatprep.subr.bf16.mxu0 %v1043
  %1648 = vmatpush1.bf16.msra.mxu0 %v1042
  %1649 = vmatprep.subr.bf16.mxu0 %v1163
  %1650 = vmatpush2.bf16.msra.mxu0 %v1162
  %1651 = vmatprep.subr.bf16.mxu0 %v1155
  %1652 = vmatpush2.bf16.msra.mxu0 %v1154
  %1653 = vmatprep.subr.bf16.mxu0 %v1147
  %1654 = vmatpush2.bf16.msra.mxu0 %v1146
  %1655 = vmatprep.subr.bf16.mxu0 %v1139
  %1656 = vmatpush2.bf16.msra.mxu0 %v1138
  %1657 = vmatprep.subr.bf16.mxu0 %v1131
  %1658 = vmatpush2.bf16.msra.mxu0 %v1130
  %1659 = vmatprep.subr.bf16.mxu0 %v1123
  %1660 = vmatpush2.bf16.msra.mxu0 %v1122
  %1661 = vmatprep.subr.bf16.mxu0 %v1115
  %1662 = vmatpush2.bf16.msra.mxu0 %v1114
  %1663 = vmatprep.subr.bf16.mxu0 %v1107
  %1664 = vmatpush2.bf16.msra.mxu0 %v1106
  %1665 = vmatprep.mubr.bf16.mxu0 %v1509
  %1666 = vmatmul.mubr.bf16.gmra.mxu0 %v1508
  %v1667 = vpop.f32.mrf.mxu0
  %v1668 = vadd.f32 0.0, %v1667
  %v1669 = vpop.f32.mrf.mxu0
  %v1670 = vadd.f32 0.0, %v1669
  %v1671 = vpop.f32.mrf.mxu0
  %v1672 = vpop.f32.mrf.mxu0
  %1673 = vdwg.mxu0
  %v1674 = vadd.f32 %v1545, %v597
  %v1675 = vadd.f32 %v1547, %v601
  %v1676 = vadd.f32 %v1586, %v605
  %v1677 = vadd.f32 %v1588, %v609
  %v1678 = vmul.f32 %v1674, 0.5
  %v1679 = vtanh.pop %v1678
  %v1680 = vmul.f32 %v1679, 0.5
  %v1681 = vadd.f32 %v1680, 0.5
  %v1682 = vmul.f32 %v1675, 0.5
  %v1683 = vtanh.pop %v1682
  %v1684 = vmul.f32 %v1683, 0.5
  %v1685 = vadd.f32 %v1684, 0.5
  %v1686 = vtanh.pop %v1676
  %v1687 = vmul.f32 %v1677, 0.5
  %v1688 = vtanh.pop %v1687
  %v1689 = vmul.f32 %v1688, 0.5
  %v1690 = vadd.f32 %v1689, 0.5
  %v1691 = vmul.f32 %v1685, %v1475
  %v1692 = vmul.f32 %v1681, %v1686
  %v1693 = vadd.f32 %v1691, %v1692
  %v1694 = vtanh.pop %v1693
  %v1695 = vmul.f32 %v1690, %v1694
  %s1696 = scalar_lea.vmem [#allocation3], 8
  %1697 = vst [vmem:[%s1696] sm:$0xff] %v1695
  %s1698 = smul.u32 2, 4
  %s1699 = smul.addr %s1698, 8
  %s1700 = scalar_lea.vmem [#allocation2], %s1699
  %v1701 = vld [vmem:[%s1700] sm:$0xff]
  %v1702 = vld [vmem:[%s1700 + $0x8] sm:$0xff]
  %v1703 = vld [vmem:[%s1700 + $0x10] sm:$0xff]
  %v1704 = vld [vmem:[%s1700 + $0x18] sm:$0xff]
  %v1705 = vadd.f32 %v1701, %v1627
  %v1706 = vadd.f32 %v1702, %v1629
  %v1707 = vadd.f32 %v1703, %v1668
  %v1708 = vadd.f32 %v1704, %v1670
  %v1709 = vmul.f32 %v1705, 0.5
  %v1710 = vtanh.pop %v1709
  %v1711 = vmul.f32 %v1710, 0.5
  %v1712 = vadd.f32 %v1711, 0.5
  %v1713 = vmul.f32 %v1706, 0.5
  %v1714 = vtanh.pop %v1713
  %v1715 = vmul.f32 %v1714, 0.5
  %v1716 = vadd.f32 %v1715, 0.5
  %v1717 = vtanh.pop %v1707
  %v1718 = vmul.f32 %v1708, 0.5
  %v1719 = vtanh.pop %v1718
  %v1720 = vmul.f32 %v1719, 0.5
  %v1721 = vadd.f32 %v1720, 0.5
  %v1722 = vmul.f32 %v1716, %v1505
  %v1723 = vmul.f32 %v1712, %v1717
  %v1724 = vadd.f32 %v1722, %v1723
  %v1725 = vtanh.pop %v1724
  %v1726 = vmul.f32 %v1721, %v1725
  %v1727 = vpack.c.bf16 %v1726, %v1726
  %v1728 = vpack.c.bf16 %v1695, %v1695
  %1729 = vmatprep.subr.bf16.mxu0 %v1093
  %1730 = vmatpush1.bf16.msra.mxu0 %v1092
  %1731 = vmatprep.subr.bf16.mxu0 %v1085
  %1732 = vmatpush1.bf16.msra.mxu0 %v1084
  %1733 = vmatprep.subr.bf16.mxu0 %v1077
  %1734 = vmatpush1.bf16.msra.mxu0 %v1076
  %1735 = vmatprep.subr.bf16.mxu0 %v1069
  %1736 = vmatpush1.bf16.msra.mxu0 %v1068
  %1737 = vmatprep.subr.bf16.mxu0 %v1061
  %1738 = vmatpush1.bf16.msra.mxu0 %v1060
  %1739 = vmatprep.subr.bf16.mxu0 %v1053
  %1740 = vmatpush1.bf16.msra.mxu0 %v1052
  %1741 = vmatprep.subr.bf16.mxu0 %v1045
  %1742 = vmatpush1.bf16.msra.mxu0 %v1044
  %1743 = vmatprep.subr.bf16.mxu0 %v1037
  %1744 = vmatpush1.bf16.msra.mxu0 %v1036
  %1745 = vmatprep.subr.bf16.mxu0 %v1157
  %1746 = vmatpush2.bf16.msra.mxu0 %v1156
  %1747 = vmatprep.subr.bf16.mxu0 %v1149
  %1748 = vmatpush2.bf16.msra.mxu0 %v1148
  %1749 = vmatprep.subr.bf16.mxu0 %v1141
  %1750 = vmatpush2.bf16.msra.mxu0 %v1140
  %1751 = vmatprep.subr.bf16.mxu0 %v1133
  %1752 = vmatpush2.bf16.msra.mxu0 %v1132
  %1753 = vmatprep.subr.bf16.mxu0 %v1125
  %1754 = vmatpush2.bf16.msra.mxu0 %v1124
  %1755 = vmatprep.subr.bf16.mxu0 %v1117
  %1756 = vmatpush2.bf16.msra.mxu0 %v1116
  %1757 = vmatprep.subr.bf16.mxu0 %v1109
  %1758 = vmatpush2.bf16.msra.mxu0 %v1108
  %1759 = vmatprep.subr.bf16.mxu0 %v1101
  %1760 = vmatpush2.bf16.msra.mxu0 %v1100
  %1761 = vmatprep.mubr.bf16.mxu0 %v1728
  %1762 = vmatmul.mubr.bf16.gmra.mxu0 %v1727
  %v1763 = vpop.f32.mrf.mxu0
  %v1764 = vadd.f32 0.0, %v1763
  %v1765 = vpop.f32.mrf.mxu0
  %v1766 = vadd.f32 0.0, %v1765
  %v1767 = vpop.f32.mrf.mxu0
  %v1768 = vpop.f32.mrf.mxu0
  %1769 = vdwg.mxu0
  %1770 = vmatprep.subr.bf16.mxu0 %v1095
  %1771 = vmatpush1.bf16.msra.mxu0 %v1094
  %1772 = vmatprep.subr.bf16.mxu0 %v1087
  %1773 = vmatpush1.bf16.msra.mxu0 %v1086
  %1774 = vmatprep.subr.bf16.mxu0 %v1079
  %1775 = vmatpush1.bf16.msra.mxu0 %v1078
  %1776 = vmatprep.subr.bf16.mxu0 %v1071
  %1777 = vmatpush1.bf16.msra.mxu0 %v1070
  %1778 = vmatprep.subr.bf16.mxu0 %v1063
  %1779 = vmatpush1.bf16.msra.mxu0 %v1062
  %1780 = vmatprep.subr.bf16.mxu0 %v1055
  %1781 = vmatpush1.bf16.msra.mxu0 %v1054
  %1782 = vmatprep.subr.bf16.mxu0 %v1047
  %1783 = vmatpush1.bf16.msra.mxu0 %v1046
  %1784 = vmatprep.subr.bf16.mxu0 %v1039
  %1785 = vmatpush1.bf16.msra.mxu0 %v1038
  %1786 = vmatprep.subr.bf16.mxu0 %v1159
  %1787 = vmatpush2.bf16.msra.mxu0 %v1158
  %1788 = vmatprep.subr.bf16.mxu0 %v1151
  %1789 = vmatpush2.bf16.msra.mxu0 %v1150
  %1790 = vmatprep.subr.bf16.mxu0 %v1143
  %1791 = vmatpush2.bf16.msra.mxu0 %v1142
  %1792 = vmatprep.subr.bf16.mxu0 %v1135
  %1793 = vmatpush2.bf16.msra.mxu0 %v1134
  %1794 = vmatprep.subr.bf16.mxu0 %v1127
  %1795 = vmatpush2.bf16.msra.mxu0 %v1126
  %1796 = vmatprep.subr.bf16.mxu0 %v1119
  %1797 = vmatpush2.bf16.msra.mxu0 %v1118
  %1798 = vmatprep.subr.bf16.mxu0 %v1111
  %1799 = vmatpush2.bf16.msra.mxu0 %v1110
  %1800 = vmatprep.subr.bf16.mxu0 %v1103
  %1801 = vmatpush2.bf16.msra.mxu0 %v1102
  %1802 = vmatprep.mubr.bf16.mxu0 %v1728
  %1803 = vmatmul.mubr.bf16.gmra.mxu0 %v1727
  %v1804 = vpop.f32.mrf.mxu0
  %v1805 = vadd.f32 0.0, %v1804
  %v1806 = vpop.f32.mrf.mxu0
  %v1807 = vadd.f32 0.0, %v1806
  %v1808 = vpop.f32.mrf.mxu0
  %v1809 = vpop.f32.mrf.mxu0
  %1810 = vdwg.mxu0
  %1811 = vmatprep.subr.bf16.mxu0 %v1097
  %1812 = vmatpush1.bf16.msra.mxu0 %v1096
  %1813 = vmatprep.subr.bf16.mxu0 %v1089
  %1814 = vmatpush1.bf16.msra.mxu0 %v1088
  %1815 = vmatprep.subr.bf16.mxu0 %v1081
  %1816 = vmatpush1.bf16.msra.mxu0 %v1080
  %1817 = vmatprep.subr.bf16.mxu0 %v1073
  %1818 = vmatpush1.bf16.msra.mxu0 %v1072
  %1819 = vmatprep.subr.bf16.mxu0 %v1065
  %1820 = vmatpush1.bf16.msra.mxu0 %v1064
  %1821 = vmatprep.subr.bf16.mxu0 %v1057
  %1822 = vmatpush1.bf16.msra.mxu0 %v1056
  %1823 = vmatprep.subr.bf16.mxu0 %v1049
  %1824 = vmatpush1.bf16.msra.mxu0 %v1048
  %1825 = vmatprep.subr.bf16.mxu0 %v1041
  %1826 = vmatpush1.bf16.msra.mxu0 %v1040
  %1827 = vmatprep.subr.bf16.mxu0 %v1161
  %1828 = vmatpush2.bf16.msra.mxu0 %v1160
  %1829 = vmatprep.subr.bf16.mxu0 %v1153
  %1830 = vmatpush2.bf16.msra.mxu0 %v1152
  %1831 = vmatprep.subr.bf16.mxu0 %v1145
  %1832 = vmatpush2.bf16.msra.mxu0 %v1144
  %1833 = vmatprep.subr.bf16.mxu0 %v1137
  %1834 = vmatpush2.bf16.msra.mxu0 %v1136
  %1835 = vmatprep.subr.bf16.mxu0 %v1129
  %1836 = vmatpush2.bf16.msra.mxu0 %v1128
  %1837 = vmatprep.subr.bf16.mxu0 %v1121
  %1838 = vmatpush2.bf16.msra.mxu0 %v1120
  %1839 = vmatprep.subr.bf16.mxu0 %v1113
  %1840 = vmatpush2.bf16.msra.mxu0 %v1112
  %1841 = vmatprep.subr.bf16.mxu0 %v1105
  %1842 = vmatpush2.bf16.msra.mxu0 %v1104
  %1843 = vmatprep.mubr.bf16.mxu0 %v1728
  %1844 = vmatmul.mubr.bf16.gmra.mxu0 %v1727
  %v1845 = vpop.f32.mrf.mxu0
  %v1846 = vadd.f32 0.0, %v1845
  %v1847 = vpop.f32.mrf.mxu0
  %v1848 = vadd.f32 0.0, %v1847
  %v1849 = vpop.f32.mrf.mxu0
  %v1850 = vpop.f32.mrf.mxu0
  %1851 = vdwg.mxu0
  %1852 = vmatprep.subr.bf16.mxu0 %v1099
  %1853 = vmatpush1.bf16.msra.mxu0 %v1098
  %1854 = vmatprep.subr.bf16.mxu0 %v1091
  %1855 = vmatpush1.bf16.msra.mxu0 %v1090
  %1856 = vmatprep.subr.bf16.mxu0 %v1083
  %1857 = vmatpush1.bf16.msra.mxu0 %v1082
  %1858 = vmatprep.subr.bf16.mxu0 %v1075
  %1859 = vmatpush1.bf16.msra.mxu0 %v1074
  %1860 = vmatprep.subr.bf16.mxu0 %v1067
  %1861 = vmatpush1.bf16.msra.mxu0 %v1066
  %1862 = vmatprep.subr.bf16.mxu0 %v1059
  %1863 = vmatpush1.bf16.msra.mxu0 %v1058
  %1864 = vmatprep.subr.bf16.mxu0 %v1051
  %1865 = vmatpush1.bf16.msra.mxu0 %v1050
  %1866 = vmatprep.subr.bf16.mxu0 %v1043
  %1867 = vmatpush1.bf16.msra.mxu0 %v1042
  %1868 = vmatprep.subr.bf16.mxu0 %v1163
  %1869 = vmatpush2.bf16.msra.mxu0 %v1162
  %1870 = vmatprep.subr.bf16.mxu0 %v1155
  %1871 = vmatpush2.bf16.msra.mxu0 %v1154
  %1872 = vmatprep.subr.bf16.mxu0 %v1147
  %1873 = vmatpush2.bf16.msra.mxu0 %v1146
  %1874 = vmatprep.subr.bf16.mxu0 %v1139
  %1875 = vmatpush2.bf16.msra.mxu0 %v1138
  %1876 = vmatprep.subr.bf16.mxu0 %v1131
  %1877 = vmatpush2.bf16.msra.mxu0 %v1130
  %1878 = vmatprep.subr.bf16.mxu0 %v1123
  %1879 = vmatpush2.bf16.msra.mxu0 %v1122
  %1880 = vmatprep.subr.bf16.mxu0 %v1115
  %1881 = vmatpush2.bf16.msra.mxu0 %v1114
  %1882 = vmatprep.subr.bf16.mxu0 %v1107
  %1883 = vmatpush2.bf16.msra.mxu0 %v1106
  %1884 = vmatprep.mubr.bf16.mxu0 %v1728
  %1885 = vmatmul.mubr.bf16.gmra.mxu0 %v1727
  %v1886 = vpop.f32.mrf.mxu0
  %v1887 = vadd.f32 0.0, %v1886
  %v1888 = vpop.f32.mrf.mxu0
  %v1889 = vadd.f32 0.0, %v1888
  %v1890 = vpop.f32.mrf.mxu0
  %v1891 = vpop.f32.mrf.mxu0
  %1892 = vdwg.mxu0
  %v1893 = vadd.f32 %v1764, %v597
  %v1894 = vadd.f32 %v1766, %v601
  %v1895 = vadd.f32 %v1805, %v605
  %v1896 = vadd.f32 %v1807, %v609
  %v1897 = vmul.f32 %v1893, 0.5
  %v1898 = vtanh.pop %v1897
  %v1899 = vmul.f32 %v1898, 0.5
  %v1900 = vadd.f32 %v1899, 0.5
  %v1901 = vmul.f32 %v1894, 0.5
  %v1902 = vtanh.pop %v1901
  %v1903 = vmul.f32 %v1902, 0.5
  %v1904 = vadd.f32 %v1903, 0.5
  %v1905 = vtanh.pop %v1895
  %v1906 = vmul.f32 %v1896, 0.5
  %v1907 = vtanh.pop %v1906
  %v1908 = vmul.f32 %v1907, 0.5
  %v1909 = vadd.f32 %v1908, 0.5
  %v1910 = vmul.f32 %v1904, %v1693
  %v1911 = vmul.f32 %v1900, %v1905
  %v1912 = vadd.f32 %v1910, %v1911
  %v1913 = vtanh.pop %v1912
  %v1914 = vmul.f32 %v1909, %v1913
  %s1915 = scalar_lea.vmem [#allocation3], 16
  %1916 = vst [vmem:[%s1915] sm:$0xff] %v1914
  %s1917 = smul.u32 3, 4
  %s1918 = smul.addr %s1917, 8
  %s1919 = scalar_lea.vmem [#allocation2], %s1918
  %v1920 = vld [vmem:[%s1919] sm:$0xff]
  %v1921 = vld [vmem:[%s1919 + $0x8] sm:$0xff]
  %v1922 = vld [vmem:[%s1919 + $0x10] sm:$0xff]
  %v1923 = vld [vmem:[%s1919 + $0x18] sm:$0xff]
  %v1924 = vadd.f32 %v1920, %v1846
  %v1925 = vadd.f32 %v1921, %v1848
  %v1926 = vadd.f32 %v1922, %v1887
  %v1927 = vadd.f32 %v1923, %v1889
  %v1928 = vmul.f32 %v1924, 0.5
  %v1929 = vtanh.pop %v1928
  %v1930 = vmul.f32 %v1929, 0.5
  %v1931 = vadd.f32 %v1930, 0.5
  %v1932 = vmul.f32 %v1925, 0.5
  %v1933 = vtanh.pop %v1932
  %v1934 = vmul.f32 %v1933, 0.5
  %v1935 = vadd.f32 %v1934, 0.5
  %v1936 = vtanh.pop %v1926
  %v1937 = vmul.f32 %v1927, 0.5
  %v1938 = vtanh.pop %v1937
  %v1939 = vmul.f32 %v1938, 0.5
  %v1940 = vadd.f32 %v1939, 0.5
  %v1941 = vmul.f32 %v1935, %v1724
  %v1942 = vmul.f32 %v1931, %v1936
  %v1943 = vadd.f32 %v1941, %v1942
  %v1944 = vtanh.pop %v1943
  %v1945 = vmul.f32 %v1940, %v1944
  %v1946 = vpack.c.bf16 %v1945, %v1945
  %v1947 = vpack.c.bf16 %v1914, %v1914
  %1948 = vmatprep.subr.bf16.mxu0 %v1093
  %1949 = vmatpush1.bf16.msra.mxu0 %v1092
  %1950 = vmatprep.subr.bf16.mxu0 %v1085
  %1951 = vmatpush1.bf16.msra.mxu0 %v1084
  %1952 = vmatprep.subr.bf16.mxu0 %v1077
  %1953 = vmatpush1.bf16.msra.mxu0 %v1076
  %1954 = vmatprep.subr.bf16.mxu0 %v1069
  %1955 = vmatpush1.bf16.msra.mxu0 %v1068
  %1956 = vmatprep.subr.bf16.mxu0 %v1061
  %1957 = vmatpush1.bf16.msra.mxu0 %v1060
  %1958 = vmatprep.subr.bf16.mxu0 %v1053
  %1959 = vmatpush1.bf16.msra.mxu0 %v1052
  %1960 = vmatprep.subr.bf16.mxu0 %v1045
  %1961 = vmatpush1.bf16.msra.mxu0 %v1044
  %1962 = vmatprep.subr.bf16.mxu0 %v1037
  %1963 = vmatpush1.bf16.msra.mxu0 %v1036
  %1964 = vmatprep.subr.bf16.mxu0 %v1157
  %1965 = vmatpush2.bf16.msra.mxu0 %v1156
  %1966 = vmatprep.subr.bf16.mxu0 %v1149
  %1967 = vmatpush2.bf16.msra.mxu0 %v1148
  %1968 = vmatprep.subr.bf16.mxu0 %v1141
  %1969 = vmatpush2.bf16.msra.mxu0 %v1140
  %1970 = vmatprep.subr.bf16.mxu0 %v1133
  %1971 = vmatpush2.bf16.msra.mxu0 %v1132
  %1972 = vmatprep.subr.bf16.mxu0 %v1125
  %1973 = vmatpush2.bf16.msra.mxu0 %v1124
  %1974 = vmatprep.subr.bf16.mxu0 %v1117
  %1975 = vmatpush2.bf16.msra.mxu0 %v1116
  %1976 = vmatprep.subr.bf16.mxu0 %v1109
  %1977 = vmatpush2.bf16.msra.mxu0 %v1108
  %1978 = vmatprep.subr.bf16.mxu0 %v1101
  %1979 = vmatpush2.bf16.msra.mxu0 %v1100
  %1980 = vmatprep.mubr.bf16.mxu0 %v1947
  %1981 = vmatmul.mubr.bf16.gmra.mxu0 %v1946
  %v1982 = vpop.f32.mrf.mxu0
  %v1983 = vadd.f32 0.0, %v1982
  %v1984 = vpop.f32.mrf.mxu0
  %v1985 = vadd.f32 0.0, %v1984
  %v1986 = vpop.f32.mrf.mxu0
  %v1987 = vpop.f32.mrf.mxu0
  %1988 = vdwg.mxu0
  %1989 = vmatprep.subr.bf16.mxu0 %v1095
  %1990 = vmatpush1.bf16.msra.mxu0 %v1094
  %1991 = vmatprep.subr.bf16.mxu0 %v1087
  %1992 = vmatpush1.bf16.msra.mxu0 %v1086
  %1993 = vmatprep.subr.bf16.mxu0 %v1079
  %1994 = vmatpush1.bf16.msra.mxu0 %v1078
  %1995 = vmatprep.subr.bf16.mxu0 %v1071
  %1996 = vmatpush1.bf16.msra.mxu0 %v1070
  %1997 = vmatprep.subr.bf16.mxu0 %v1063
  %1998 = vmatpush1.bf16.msra.mxu0 %v1062
  %1999 = vmatprep.subr.bf16.mxu0 %v1055
  %2000 = vmatpush1.bf16.msra.mxu0 %v1054
  %2001 = vmatprep.subr.bf16.mxu0 %v1047
  %2002 = vmatpush1.bf16.msra.mxu0 %v1046
  %2003 = vmatprep.subr.bf16.mxu0 %v1039
  %2004 = vmatpush1.bf16.msra.mxu0 %v1038
  %2005 = vmatprep.subr.bf16.mxu0 %v1159
  %2006 = vmatpush2.bf16.msra.mxu0 %v1158
  %2007 = vmatprep.subr.bf16.mxu0 %v1151
  %2008 = vmatpush2.bf16.msra.mxu0 %v1150
  %2009 = vmatprep.subr.bf16.mxu0 %v1143
  %2010 = vmatpush2.bf16.msra.mxu0 %v1142
  %2011 = vmatprep.subr.bf16.mxu0 %v1135
  %2012 = vmatpush2.bf16.msra.mxu0 %v1134
  %2013 = vmatprep.subr.bf16.mxu0 %v1127
  %2014 = vmatpush2.bf16.msra.mxu0 %v1126
  %2015 = vmatprep.subr.bf16.mxu0 %v1119
  %2016 = vmatpush2.bf16.msra.mxu0 %v1118
  %2017 = vmatprep.subr.bf16.mxu0 %v1111
  %2018 = vmatpush2.bf16.msra.mxu0 %v1110
  %2019 = vmatprep.subr.bf16.mxu0 %v1103
  %2020 = vmatpush2.bf16.msra.mxu0 %v1102
  %2021 = vmatprep.mubr.bf16.mxu0 %v1947
  %2022 = vmatmul.mubr.bf16.gmra.mxu0 %v1946
  %v2023 = vpop.f32.mrf.mxu0
  %v2024 = vadd.f32 0.0, %v2023
  %v2025 = vpop.f32.mrf.mxu0
  %v2026 = vadd.f32 0.0, %v2025
  %v2027 = vpop.f32.mrf.mxu0
  %v2028 = vpop.f32.mrf.mxu0
  %2029 = vdwg.mxu0
  %2030 = vmatprep.subr.bf16.mxu0 %v1097
  %2031 = vmatpush1.bf16.msra.mxu0 %v1096
  %2032 = vmatprep.subr.bf16.mxu0 %v1089
  %2033 = vmatpush1.bf16.msra.mxu0 %v1088
  %2034 = vmatprep.subr.bf16.mxu0 %v1081
  %2035 = vmatpush1.bf16.msra.mxu0 %v1080
  %2036 = vmatprep.subr.bf16.mxu0 %v1073
  %2037 = vmatpush1.bf16.msra.mxu0 %v1072
  %2038 = vmatprep.subr.bf16.mxu0 %v1065
  %2039 = vmatpush1.bf16.msra.mxu0 %v1064
  %2040 = vmatprep.subr.bf16.mxu0 %v1057
  %2041 = vmatpush1.bf16.msra.mxu0 %v1056
  %2042 = vmatprep.subr.bf16.mxu0 %v1049
  %2043 = vmatpush1.bf16.msra.mxu0 %v1048
  %2044 = vmatprep.subr.bf16.mxu0 %v1041
  %2045 = vmatpush1.bf16.msra.mxu0 %v1040
  %2046 = vmatprep.subr.bf16.mxu0 %v1161
  %2047 = vmatpush2.bf16.msra.mxu0 %v1160
  %2048 = vmatprep.subr.bf16.mxu0 %v1153
  %2049 = vmatpush2.bf16.msra.mxu0 %v1152
  %2050 = vmatprep.subr.bf16.mxu0 %v1145
  %2051 = vmatpush2.bf16.msra.mxu0 %v1144
  %2052 = vmatprep.subr.bf16.mxu0 %v1137
  %2053 = vmatpush2.bf16.msra.mxu0 %v1136
  %2054 = vmatprep.subr.bf16.mxu0 %v1129
  %2055 = vmatpush2.bf16.msra.mxu0 %v1128
  %2056 = vmatprep.subr.bf16.mxu0 %v1121
  %2057 = vmatpush2.bf16.msra.mxu0 %v1120
  %2058 = vmatprep.subr.bf16.mxu0 %v1113
  %2059 = vmatpush2.bf16.msra.mxu0 %v1112
  %2060 = vmatprep.subr.bf16.mxu0 %v1105
  %2061 = vmatpush2.bf16.msra.mxu0 %v1104
  %2062 = vmatprep.mubr.bf16.mxu0 %v1947
  %2063 = vmatmul.mubr.bf16.gmra.mxu0 %v1946
  %v2064 = vpop.f32.mrf.mxu0
  %v2065 = vadd.f32 0.0, %v2064
  %v2066 = vpop.f32.mrf.mxu0
  %v2067 = vadd.f32 0.0, %v2066
  %v2068 = vpop.f32.mrf.mxu0
  %v2069 = vpop.f32.mrf.mxu0
  %2070 = vdwg.mxu0
  %2071 = vmatprep.subr.bf16.mxu0 %v1099
  %2072 = vmatpush1.bf16.msra.mxu0 %v1098
  %2073 = vmatprep.subr.bf16.mxu0 %v1091
  %2074 = vmatpush1.bf16.msra.mxu0 %v1090
  %2075 = vmatprep.subr.bf16.mxu0 %v1083
  %2076 = vmatpush1.bf16.msra.mxu0 %v1082
  %2077 = vmatprep.subr.bf16.mxu0 %v1075
  %2078 = vmatpush1.bf16.msra.mxu0 %v1074
  %2079 = vmatprep.subr.bf16.mxu0 %v1067
  %2080 = vmatpush1.bf16.msra.mxu0 %v1066
  %2081 = vmatprep.subr.bf16.mxu0 %v1059
  %2082 = vmatpush1.bf16.msra.mxu0 %v1058
  %2083 = vmatprep.subr.bf16.mxu0 %v1051
  %2084 = vmatpush1.bf16.msra.mxu0 %v1050
  %2085 = vmatprep.subr.bf16.mxu0 %v1043
  %2086 = vmatpush1.bf16.msra.mxu0 %v1042
  %2087 = vmatprep.subr.bf16.mxu0 %v1163
  %2088 = vmatpush2.bf16.msra.mxu0 %v1162
  %2089 = vmatprep.subr.bf16.mxu0 %v1155
  %2090 = vmatpush2.bf16.msra.mxu0 %v1154
  %2091 = vmatprep.subr.bf16.mxu0 %v1147
  %2092 = vmatpush2.bf16.msra.mxu0 %v1146
  %2093 = vmatprep.subr.bf16.mxu0 %v1139
  %2094 = vmatpush2.bf16.msra.mxu0 %v1138
  %2095 = vmatprep.subr.bf16.mxu0 %v1131
  %2096 = vmatpush2.bf16.msra.mxu0 %v1130
  %2097 = vmatprep.subr.bf16.mxu0 %v1123
  %2098 = vmatpush2.bf16.msra.mxu0 %v1122
  %2099 = vmatprep.subr.bf16.mxu0 %v1115
  %2100 = vmatpush2.bf16.msra.mxu0 %v1114
  %2101 = vmatprep.subr.bf16.mxu0 %v1107
  %2102 = vmatpush2.bf16.msra.mxu0 %v1106
  %2103 = vmatprep.mubr.bf16.mxu0 %v1947
  %2104 = vmatmul.mubr.bf16.gmra.mxu0 %v1946
  %v2105 = vpop.f32.mrf.mxu0
  %v2106 = vadd.f32 0.0, %v2105
  %v2107 = vpop.f32.mrf.mxu0
  %v2108 = vadd.f32 0.0, %v2107
  %v2109 = vpop.f32.mrf.mxu0
  %v2110 = vpop.f32.mrf.mxu0
  %2111 = vdwg.mxu0
  %v2112 = vadd.f32 %v1983, %v597
  %v2113 = vadd.f32 %v1985, %v601
  %v2114 = vadd.f32 %v2024, %v605
  %v2115 = vadd.f32 %v2026, %v609
  %v2116 = vmul.f32 %v2112, 0.5
  %v2117 = vtanh.pop %v2116
  %v2118 = vmul.f32 %v2117, 0.5
  %v2119 = vadd.f32 %v2118, 0.5
  %v2120 = vmul.f32 %v2113, 0.5
  %v2121 = vtanh.pop %v2120
  %v2122 = vmul.f32 %v2121, 0.5
  %v2123 = vadd.f32 %v2122, 0.5
  %v2124 = vtanh.pop %v2114
  %v2125 = vmul.f32 %v2115, 0.5
  %v2126 = vtanh.pop %v2125
  %v2127 = vmul.f32 %v2126, 0.5
  %v2128 = vadd.f32 %v2127, 0.5
  %v2129 = vmul.f32 %v2123, %v1912
  %v2130 = vmul.f32 %v2119, %v2124
  %v2131 = vadd.f32 %v2129, %v2130
  %v2132 = vtanh.pop %v2131
  %v2133 = vmul.f32 %v2128, %v2132
  %s2134 = scalar_lea.vmem [#allocation3], 24
  %2135 = vst [vmem:[%s2134] sm:$0xff] %v2133
  %s2136 = smul.u32 4, 4
  %s2137 = smul.addr %s2136, 8
  %s2138 = scalar_lea.vmem [#allocation2], %s2137
  %v2139 = vld [vmem:[%s2138] sm:$0xff]
  %v2140 = vld [vmem:[%s2138 + $0x8] sm:$0xff]
  %v2141 = vld [vmem:[%s2138 + $0x10] sm:$0xff]
  %v2142 = vld [vmem:[%s2138 + $0x18] sm:$0xff]
  %v2143 = vadd.f32 %v2139, %v2065
  %v2144 = vadd.f32 %v2140, %v2067
  %v2145 = vadd.f32 %v2141, %v2106
  %v2146 = vadd.f32 %v2142, %v2108
  %v2147 = vmul.f32 %v2143, 0.5
  %v2148 = vtanh.pop %v2147
  %v2149 = vmul.f32 %v2148, 0.5
  %v2150 = vadd.f32 %v2149, 0.5
  %v2151 = vmul.f32 %v2144, 0.5
  %v2152 = vtanh.pop %v2151
  %v2153 = vmul.f32 %v2152, 0.5
  %v2154 = vadd.f32 %v2153, 0.5
  %v2155 = vtanh.pop %v2145
  %v2156 = vmul.f32 %v2146, 0.5
  %v2157 = vtanh.pop %v2156
  %v2158 = vmul.f32 %v2157, 0.5
  %v2159 = vadd.f32 %v2158, 0.5
  %v2160 = vmul.f32 %v2154, %v1943
  %v2161 = vmul.f32 %v2150, %v2155
  %v2162 = vadd.f32 %v2160, %v2161
  %v2163 = vtanh.pop %v2162
  %v2164 = vmul.f32 %v2159, %v2163
  %v2165 = vpack.c.bf16 %v2164, %v2164
  %v2166 = vpack.c.bf16 %v2133, %v2133
  %2167 = vmatprep.subr.bf16.mxu0 %v1093
  %2168 = vmatpush1.bf16.msra.mxu0 %v1092
  %2169 = vmatprep.subr.bf16.mxu0 %v1085
  %2170 = vmatpush1.bf16.msra.mxu0 %v1084
  %2171 = vmatprep.subr.bf16.mxu0 %v1077
  %2172 = vmatpush1.bf16.msra.mxu0 %v1076
  %2173 = vmatprep.subr.bf16.mxu0 %v1069
  %2174 = vmatpush1.bf16.msra.mxu0 %v1068
  %2175 = vmatprep.subr.bf16.mxu0 %v1061
  %2176 = vmatpush1.bf16.msra.mxu0 %v1060
  %2177 = vmatprep.subr.bf16.mxu0 %v1053
  %2178 = vmatpush1.bf16.msra.mxu0 %v1052
  %2179 = vmatprep.subr.bf16.mxu0 %v1045
  %2180 = vmatpush1.bf16.msra.mxu0 %v1044
  %2181 = vmatprep.subr.bf16.mxu0 %v1037
  %2182 = vmatpush1.bf16.msra.mxu0 %v1036
  %2183 = vmatprep.subr.bf16.mxu0 %v1157
  %2184 = vmatpush2.bf16.msra.mxu0 %v1156
  %2185 = vmatprep.subr.bf16.mxu0 %v1149
  %2186 = vmatpush2.bf16.msra.mxu0 %v1148
  %2187 = vmatprep.subr.bf16.mxu0 %v1141
  %2188 = vmatpush2.bf16.msra.mxu0 %v1140
  %2189 = vmatprep.subr.bf16.mxu0 %v1133
  %2190 = vmatpush2.bf16.msra.mxu0 %v1132
  %2191 = vmatprep.subr.bf16.mxu0 %v1125
  %2192 = vmatpush2.bf16.msra.mxu0 %v1124
  %2193 = vmatprep.subr.bf16.mxu0 %v1117
  %2194 = vmatpush2.bf16.msra.mxu0 %v1116
  %2195 = vmatprep.subr.bf16.mxu0 %v1109
  %2196 = vmatpush2.bf16.msra.mxu0 %v1108
  %2197 = vmatprep.subr.bf16.mxu0 %v1101
  %2198 = vmatpush2.bf16.msra.mxu0 %v1100
  %2199 = vmatprep.mubr.bf16.mxu0 %v2166
  %2200 = vmatmul.mubr.bf16.gmra.mxu0 %v2165
  %v2201 = vpop.f32.mrf.mxu0
  %v2202 = vadd.f32 0.0, %v2201
  %v2203 = vpop.f32.mrf.mxu0
  %v2204 = vadd.f32 0.0, %v2203
  %v2205 = vpop.f32.mrf.mxu0
  %v2206 = vpop.f32.mrf.mxu0
  %2207 = vdwg.mxu0
  %2208 = vmatprep.subr.bf16.mxu0 %v1095
  %2209 = vmatpush1.bf16.msra.mxu0 %v1094
  %2210 = vmatprep.subr.bf16.mxu0 %v1087
  %2211 = vmatpush1.bf16.msra.mxu0 %v1086
  %2212 = vmatprep.subr.bf16.mxu0 %v1079
  %2213 = vmatpush1.bf16.msra.mxu0 %v1078
  %2214 = vmatprep.subr.bf16.mxu0 %v1071
  %2215 = vmatpush1.bf16.msra.mxu0 %v1070
  %2216 = vmatprep.subr.bf16.mxu0 %v1063
  %2217 = vmatpush1.bf16.msra.mxu0 %v1062
  %2218 = vmatprep.subr.bf16.mxu0 %v1055
  %2219 = vmatpush1.bf16.msra.mxu0 %v1054
  %2220 = vmatprep.subr.bf16.mxu0 %v1047
  %2221 = vmatpush1.bf16.msra.mxu0 %v1046
  %2222 = vmatprep.subr.bf16.mxu0 %v1039
  %2223 = vmatpush1.bf16.msra.mxu0 %v1038
  %2224 = vmatprep.subr.bf16.mxu0 %v1159
  %2225 = vmatpush2.bf16.msra.mxu0 %v1158
  %2226 = vmatprep.subr.bf16.mxu0 %v1151
  %2227 = vmatpush2.bf16.msra.mxu0 %v1150
  %2228 = vmatprep.subr.bf16.mxu0 %v1143
  %2229 = vmatpush2.bf16.msra.mxu0 %v1142
  %2230 = vmatprep.subr.bf16.mxu0 %v1135
  %2231 = vmatpush2.bf16.msra.mxu0 %v1134
  %2232 = vmatprep.subr.bf16.mxu0 %v1127
  %2233 = vmatpush2.bf16.msra.mxu0 %v1126
  %2234 = vmatprep.subr.bf16.mxu0 %v1119
  %2235 = vmatpush2.bf16.msra.mxu0 %v1118
  %2236 = vmatprep.subr.bf16.mxu0 %v1111
  %2237 = vmatpush2.bf16.msra.mxu0 %v1110
  %2238 = vmatprep.subr.bf16.mxu0 %v1103
  %2239 = vmatpush2.bf16.msra.mxu0 %v1102
  %2240 = vmatprep.mubr.bf16.mxu0 %v2166
  %2241 = vmatmul.mubr.bf16.gmra.mxu0 %v2165
  %v2242 = vpop.f32.mrf.mxu0
  %v2243 = vadd.f32 0.0, %v2242
  %v2244 = vpop.f32.mrf.mxu0
  %v2245 = vadd.f32 0.0, %v2244
  %v2246 = vpop.f32.mrf.mxu0
  %v2247 = vpop.f32.mrf.mxu0
  %2248 = vdwg.mxu0
  %2249 = vmatprep.subr.bf16.mxu0 %v1097
  %2250 = vmatpush1.bf16.msra.mxu0 %v1096
  %2251 = vmatprep.subr.bf16.mxu0 %v1089
  %2252 = vmatpush1.bf16.msra.mxu0 %v1088
  %2253 = vmatprep.subr.bf16.mxu0 %v1081
  %2254 = vmatpush1.bf16.msra.mxu0 %v1080
  %2255 = vmatprep.subr.bf16.mxu0 %v1073
  %2256 = vmatpush1.bf16.msra.mxu0 %v1072
  %2257 = vmatprep.subr.bf16.mxu0 %v1065
  %2258 = vmatpush1.bf16.msra.mxu0 %v1064
  %2259 = vmatprep.subr.bf16.mxu0 %v1057
  %2260 = vmatpush1.bf16.msra.mxu0 %v1056
  %2261 = vmatprep.subr.bf16.mxu0 %v1049
  %2262 = vmatpush1.bf16.msra.mxu0 %v1048
  %2263 = vmatprep.subr.bf16.mxu0 %v1041
  %2264 = vmatpush1.bf16.msra.mxu0 %v1040
  %2265 = vmatprep.subr.bf16.mxu0 %v1161
  %2266 = vmatpush2.bf16.msra.mxu0 %v1160
  %2267 = vmatprep.subr.bf16.mxu0 %v1153
  %2268 = vmatpush2.bf16.msra.mxu0 %v1152
  %2269 = vmatprep.subr.bf16.mxu0 %v1145
  %2270 = vmatpush2.bf16.msra.mxu0 %v1144
  %2271 = vmatprep.subr.bf16.mxu0 %v1137
  %2272 = vmatpush2.bf16.msra.mxu0 %v1136
  %2273 = vmatprep.subr.bf16.mxu0 %v1129
  %2274 = vmatpush2.bf16.msra.mxu0 %v1128
  %2275 = vmatprep.subr.bf16.mxu0 %v1121
  %2276 = vmatpush2.bf16.msra.mxu0 %v1120
  %2277 = vmatprep.subr.bf16.mxu0 %v1113
  %2278 = vmatpush2.bf16.msra.mxu0 %v1112
  %2279 = vmatprep.subr.bf16.mxu0 %v1105
  %2280 = vmatpush2.bf16.msra.mxu0 %v1104
  %2281 = vmatprep.mubr.bf16.mxu0 %v2166
  %2282 = vmatmul.mubr.bf16.gmra.mxu0 %v2165
  %v2283 = vpop.f32.mrf.mxu0
  %v2284 = vadd.f32 0.0, %v2283
  %v2285 = vpop.f32.mrf.mxu0
  %v2286 = vadd.f32 0.0, %v2285
  %v2287 = vpop.f32.mrf.mxu0
  %v2288 = vpop.f32.mrf.mxu0
  %2289 = vdwg.mxu0
  %2290 = vmatprep.subr.bf16.mxu0 %v1099
  %2291 = vmatpush1.bf16.msra.mxu0 %v1098
  %2292 = vmatprep.subr.bf16.mxu0 %v1091
  %2293 = vmatpush1.bf16.msra.mxu0 %v1090
  %2294 = vmatprep.subr.bf16.mxu0 %v1083
  %2295 = vmatpush1.bf16.msra.mxu0 %v1082
  %2296 = vmatprep.subr.bf16.mxu0 %v1075
  %2297 = vmatpush1.bf16.msra.mxu0 %v1074
  %2298 = vmatprep.subr.bf16.mxu0 %v1067
  %2299 = vmatpush1.bf16.msra.mxu0 %v1066
  %2300 = vmatprep.subr.bf16.mxu0 %v1059
  %2301 = vmatpush1.bf16.msra.mxu0 %v1058
  %2302 = vmatprep.subr.bf16.mxu0 %v1051
  %2303 = vmatpush1.bf16.msra.mxu0 %v1050
  %2304 = vmatprep.subr.bf16.mxu0 %v1043
  %2305 = vmatpush1.bf16.msra.mxu0 %v1042
  %2306 = vmatprep.subr.bf16.mxu0 %v1163
  %2307 = vmatpush2.bf16.msra.mxu0 %v1162
  %2308 = vmatprep.subr.bf16.mxu0 %v1155
  %2309 = vmatpush2.bf16.msra.mxu0 %v1154
  %2310 = vmatprep.subr.bf16.mxu0 %v1147
  %2311 = vmatpush2.bf16.msra.mxu0 %v1146
  %2312 = vmatprep.subr.bf16.mxu0 %v1139
  %2313 = vmatpush2.bf16.msra.mxu0 %v1138
  %2314 = vmatprep.subr.bf16.mxu0 %v1131
  %2315 = vmatpush2.bf16.msra.mxu0 %v1130
  %2316 = vmatprep.subr.bf16.mxu0 %v1123
  %2317 = vmatpush2.bf16.msra.mxu0 %v1122
  %2318 = vmatprep.subr.bf16.mxu0 %v1115
  %2319 = vmatpush2.bf16.msra.mxu0 %v1114
  %2320 = vmatprep.subr.bf16.mxu0 %v1107
  %2321 = vmatpush2.bf16.msra.mxu0 %v1106
  %2322 = vmatprep.mubr.bf16.mxu0 %v2166
  %2323 = vmatmul.mubr.bf16.gmra.mxu0 %v2165
  %v2324 = vpop.f32.mrf.mxu0
  %v2325 = vadd.f32 0.0, %v2324
  %v2326 = vpop.f32.mrf.mxu0
  %v2327 = vadd.f32 0.0, %v2326
  %v2328 = vpop.f32.mrf.mxu0
  %v2329 = vpop.f32.mrf.mxu0
  %2330 = vdwg.mxu0
  %v2331 = vadd.f32 %v2202, %v597
  %v2332 = vadd.f32 %v2204, %v601
  %v2333 = vadd.f32 %v2243, %v605
  %v2334 = vadd.f32 %v2245, %v609
  %v2335 = vmul.f32 %v2331, 0.5
  %v2336 = vtanh.pop %v2335
  %v2337 = vmul.f32 %v2336, 0.5
  %v2338 = vadd.f32 %v2337, 0.5
  %v2339 = vmul.f32 %v2332, 0.5
  %v2340 = vtanh.pop %v2339
  %v2341 = vmul.f32 %v2340, 0.5
  %v2342 = vadd.f32 %v2341, 0.5
  %v2343 = vtanh.pop %v2333
  %v2344 = vmul.f32 %v2334, 0.5
  %v2345 = vtanh.pop %v2344
  %v2346 = vmul.f32 %v2345, 0.5
  %v2347 = vadd.f32 %v2346, 0.5
  %v2348 = vmul.f32 %v2342, %v2131
  %v2349 = vmul.f32 %v2338, %v2343
  %v2350 = vadd.f32 %v2348, %v2349
  %v2351 = vtanh.pop %v2350
  %v2352 = vmul.f32 %v2347, %v2351
  %s2353 = scalar_lea.vmem [#allocation3], 32
  %2354 = vst [vmem:[%s2353] sm:$0xff] %v2352
  %s2355 = smul.u32 5, 4
  %s2356 = smul.addr %s2355, 8
  %s2357 = scalar_lea.vmem [#allocation2], %s2356
  %v2358 = vld [vmem:[%s2357] sm:$0xff]
  %v2359 = vld [vmem:[%s2357 + $0x8] sm:$0xff]
  %v2360 = vld [vmem:[%s2357 + $0x10] sm:$0xff]
  %v2361 = vld [vmem:[%s2357 + $0x18] sm:$0xff]
  %v2362 = vadd.f32 %v2358, %v2284
  %v2363 = vadd.f32 %v2359, %v2286
  %v2364 = vadd.f32 %v2360, %v2325
  %v2365 = vadd.f32 %v2361, %v2327
  %v2366 = vmul.f32 %v2362, 0.5
  %v2367 = vtanh.pop %v2366
  %v2368 = vmul.f32 %v2367, 0.5
  %v2369 = vadd.f32 %v2368, 0.5
  %v2370 = vmul.f32 %v2363, 0.5
  %v2371 = vtanh.pop %v2370
  %v2372 = vmul.f32 %v2371, 0.5
  %v2373 = vadd.f32 %v2372, 0.5
  %v2374 = vtanh.pop %v2364
  %v2375 = vmul.f32 %v2365, 0.5
  %v2376 = vtanh.pop %v2375
  %v2377 = vmul.f32 %v2376, 0.5
  %v2378 = vadd.f32 %v2377, 0.5
  %v2379 = vmul.f32 %v2373, %v2162
  %v2380 = vmul.f32 %v2369, %v2374
  %v2381 = vadd.f32 %v2379, %v2380
  %v2382 = vtanh.pop %v2381
  %v2383 = vmul.f32 %v2378, %v2382
  %v2384 = vpack.c.bf16 %v2383, %v2383
  %v2385 = vpack.c.bf16 %v2352, %v2352
  %2386 = vmatprep.subr.bf16.mxu0 %v1093
  %2387 = vmatpush1.bf16.msra.mxu0 %v1092
  %2388 = vmatprep.subr.bf16.mxu0 %v1085
  %2389 = vmatpush1.bf16.msra.mxu0 %v1084
  %2390 = vmatprep.subr.bf16.mxu0 %v1077
  %2391 = vmatpush1.bf16.msra.mxu0 %v1076
  %2392 = vmatprep.subr.bf16.mxu0 %v1069
  %2393 = vmatpush1.bf16.msra.mxu0 %v1068
  %2394 = vmatprep.subr.bf16.mxu0 %v1061
  %2395 = vmatpush1.bf16.msra.mxu0 %v1060
  %2396 = vmatprep.subr.bf16.mxu0 %v1053
  %2397 = vmatpush1.bf16.msra.mxu0 %v1052
  %2398 = vmatprep.subr.bf16.mxu0 %v1045
  %2399 = vmatpush1.bf16.msra.mxu0 %v1044
  %2400 = vmatprep.subr.bf16.mxu0 %v1037
  %2401 = vmatpush1.bf16.msra.mxu0 %v1036
  %2402 = vmatprep.subr.bf16.mxu0 %v1157
  %2403 = vmatpush2.bf16.msra.mxu0 %v1156
  %2404 = vmatprep.subr.bf16.mxu0 %v1149
  %2405 = vmatpush2.bf16.msra.mxu0 %v1148
  %2406 = vmatprep.subr.bf16.mxu0 %v1141
  %2407 = vmatpush2.bf16.msra.mxu0 %v1140
  %2408 = vmatprep.subr.bf16.mxu0 %v1133
  %2409 = vmatpush2.bf16.msra.mxu0 %v1132
  %2410 = vmatprep.subr.bf16.mxu0 %v1125
  %2411 = vmatpush2.bf16.msra.mxu0 %v1124
  %2412 = vmatprep.subr.bf16.mxu0 %v1117
  %2413 = vmatpush2.bf16.msra.mxu0 %v1116
  %2414 = vmatprep.subr.bf16.mxu0 %v1109
  %2415 = vmatpush2.bf16.msra.mxu0 %v1108
  %2416 = vmatprep.subr.bf16.mxu0 %v1101
  %2417 = vmatpush2.bf16.msra.mxu0 %v1100
  %2418 = vmatprep.mubr.bf16.mxu0 %v2385
  %2419 = vmatmul.mubr.bf16.gmra.mxu0 %v2384
  %v2420 = vpop.f32.mrf.mxu0
  %v2421 = vadd.f32 0.0, %v2420
  %v2422 = vpop.f32.mrf.mxu0
  %v2423 = vadd.f32 0.0, %v2422
  %v2424 = vpop.f32.mrf.mxu0
  %v2425 = vpop.f32.mrf.mxu0
  %2426 = vdwg.mxu0
  %2427 = vmatprep.subr.bf16.mxu0 %v1095
  %2428 = vmatpush1.bf16.msra.mxu0 %v1094
  %2429 = vmatprep.subr.bf16.mxu0 %v1087
  %2430 = vmatpush1.bf16.msra.mxu0 %v1086
  %2431 = vmatprep.subr.bf16.mxu0 %v1079
  %2432 = vmatpush1.bf16.msra.mxu0 %v1078
  %2433 = vmatprep.subr.bf16.mxu0 %v1071
  %2434 = vmatpush1.bf16.msra.mxu0 %v1070
  %2435 = vmatprep.subr.bf16.mxu0 %v1063
  %2436 = vmatpush1.bf16.msra.mxu0 %v1062
  %2437 = vmatprep.subr.bf16.mxu0 %v1055
  %2438 = vmatpush1.bf16.msra.mxu0 %v1054
  %2439 = vmatprep.subr.bf16.mxu0 %v1047
  %2440 = vmatpush1.bf16.msra.mxu0 %v1046
  %2441 = vmatprep.subr.bf16.mxu0 %v1039
  %2442 = vmatpush1.bf16.msra.mxu0 %v1038
  %2443 = vmatprep.subr.bf16.mxu0 %v1159
  %2444 = vmatpush2.bf16.msra.mxu0 %v1158
  %2445 = vmatprep.subr.bf16.mxu0 %v1151
  %2446 = vmatpush2.bf16.msra.mxu0 %v1150
  %2447 = vmatprep.subr.bf16.mxu0 %v1143
  %2448 = vmatpush2.bf16.msra.mxu0 %v1142
  %2449 = vmatprep.subr.bf16.mxu0 %v1135
  %2450 = vmatpush2.bf16.msra.mxu0 %v1134
  %2451 = vmatprep.subr.bf16.mxu0 %v1127
  %2452 = vmatpush2.bf16.msra.mxu0 %v1126
  %2453 = vmatprep.subr.bf16.mxu0 %v1119
  %2454 = vmatpush2.bf16.msra.mxu0 %v1118
  %2455 = vmatprep.subr.bf16.mxu0 %v1111
  %2456 = vmatpush2.bf16.msra.mxu0 %v1110
  %2457 = vmatprep.subr.bf16.mxu0 %v1103
  %2458 = vmatpush2.bf16.msra.mxu0 %v1102
  %2459 = vmatprep.mubr.bf16.mxu0 %v2385
  %2460 = vmatmul.mubr.bf16.gmra.mxu0 %v2384
  %v2461 = vpop.f32.mrf.mxu0
  %v2462 = vadd.f32 0.0, %v2461
  %v2463 = vpop.f32.mrf.mxu0
  %v2464 = vadd.f32 0.0, %v2463
  %v2465 = vpop.f32.mrf.mxu0
  %v2466 = vpop.f32.mrf.mxu0
  %2467 = vdwg.mxu0
  %2468 = vmatprep.subr.bf16.mxu0 %v1097
  %2469 = vmatpush1.bf16.msra.mxu0 %v1096
  %2470 = vmatprep.subr.bf16.mxu0 %v1089
  %2471 = vmatpush1.bf16.msra.mxu0 %v1088
  %2472 = vmatprep.subr.bf16.mxu0 %v1081
  %2473 = vmatpush1.bf16.msra.mxu0 %v1080
  %2474 = vmatprep.subr.bf16.mxu0 %v1073
  %2475 = vmatpush1.bf16.msra.mxu0 %v1072
  %2476 = vmatprep.subr.bf16.mxu0 %v1065
  %2477 = vmatpush1.bf16.msra.mxu0 %v1064
  %2478 = vmatprep.subr.bf16.mxu0 %v1057
  %2479 = vmatpush1.bf16.msra.mxu0 %v1056
  %2480 = vmatprep.subr.bf16.mxu0 %v1049
  %2481 = vmatpush1.bf16.msra.mxu0 %v1048
  %2482 = vmatprep.subr.bf16.mxu0 %v1041
  %2483 = vmatpush1.bf16.msra.mxu0 %v1040
  %2484 = vmatprep.subr.bf16.mxu0 %v1161
  %2485 = vmatpush2.bf16.msra.mxu0 %v1160
  %2486 = vmatprep.subr.bf16.mxu0 %v1153
  %2487 = vmatpush2.bf16.msra.mxu0 %v1152
  %2488 = vmatprep.subr.bf16.mxu0 %v1145
  %2489 = vmatpush2.bf16.msra.mxu0 %v1144
  %2490 = vmatprep.subr.bf16.mxu0 %v1137
  %2491 = vmatpush2.bf16.msra.mxu0 %v1136
  %2492 = vmatprep.subr.bf16.mxu0 %v1129
  %2493 = vmatpush2.bf16.msra.mxu0 %v1128
  %2494 = vmatprep.subr.bf16.mxu0 %v1121
  %2495 = vmatpush2.bf16.msra.mxu0 %v1120
  %2496 = vmatprep.subr.bf16.mxu0 %v1113
  %2497 = vmatpush2.bf16.msra.mxu0 %v1112
  %2498 = vmatprep.subr.bf16.mxu0 %v1105
  %2499 = vmatpush2.bf16.msra.mxu0 %v1104
  %2500 = vmatprep.mubr.bf16.mxu0 %v2385
  %2501 = vmatmul.mubr.bf16.gmra.mxu0 %v2384
  %v2502 = vpop.f32.mrf.mxu0
  %v2503 = vadd.f32 0.0, %v2502
  %v2504 = vpop.f32.mrf.mxu0
  %v2505 = vadd.f32 0.0, %v2504
  %v2506 = vpop.f32.mrf.mxu0
  %v2507 = vpop.f32.mrf.mxu0
  %2508 = vdwg.mxu0
  %2509 = vmatprep.subr.bf16.mxu0 %v1099
  %2510 = vmatpush1.bf16.msra.mxu0 %v1098
  %2511 = vmatprep.subr.bf16.mxu0 %v1091
  %2512 = vmatpush1.bf16.msra.mxu0 %v1090
  %2513 = vmatprep.subr.bf16.mxu0 %v1083
  %2514 = vmatpush1.bf16.msra.mxu0 %v1082
  %2515 = vmatprep.subr.bf16.mxu0 %v1075
  %2516 = vmatpush1.bf16.msra.mxu0 %v1074
  %2517 = vmatprep.subr.bf16.mxu0 %v1067
  %2518 = vmatpush1.bf16.msra.mxu0 %v1066
  %2519 = vmatprep.subr.bf16.mxu0 %v1059
  %2520 = vmatpush1.bf16.msra.mxu0 %v1058
  %2521 = vmatprep.subr.bf16.mxu0 %v1051
  %2522 = vmatpush1.bf16.msra.mxu0 %v1050
  %2523 = vmatprep.subr.bf16.mxu0 %v1043
  %2524 = vmatpush1.bf16.msra.mxu0 %v1042
  %2525 = vmatprep.subr.bf16.mxu0 %v1163
  %2526 = vmatpush2.bf16.msra.mxu0 %v1162
  %2527 = vmatprep.subr.bf16.mxu0 %v1155
  %2528 = vmatpush2.bf16.msra.mxu0 %v1154
  %2529 = vmatprep.subr.bf16.mxu0 %v1147
  %2530 = vmatpush2.bf16.msra.mxu0 %v1146
  %2531 = vmatprep.subr.bf16.mxu0 %v1139
  %2532 = vmatpush2.bf16.msra.mxu0 %v1138
  %2533 = vmatprep.subr.bf16.mxu0 %v1131
  %2534 = vmatpush2.bf16.msra.mxu0 %v1130
  %2535 = vmatprep.subr.bf16.mxu0 %v1123
  %2536 = vmatpush2.bf16.msra.mxu0 %v1122
  %2537 = vmatprep.subr.bf16.mxu0 %v1115
  %2538 = vmatpush2.bf16.msra.mxu0 %v1114
  %2539 = vmatprep.subr.bf16.mxu0 %v1107
  %2540 = vmatpush2.bf16.msra.mxu0 %v1106
  %2541 = vmatprep.mubr.bf16.mxu0 %v2385
  %2542 = vmatmul.mubr.bf16.gmra.mxu0 %v2384
  %v2543 = vpop.f32.mrf.mxu0
  %v2544 = vadd.f32 0.0, %v2543
  %v2545 = vpop.f32.mrf.mxu0
  %v2546 = vadd.f32 0.0, %v2545
  %v2547 = vpop.f32.mrf.mxu0
  %v2548 = vpop.f32.mrf.mxu0
  %2549 = vdwg.mxu0
  %v2550 = vadd.f32 %v2421, %v597
  %v2551 = vadd.f32 %v2423, %v601
  %v2552 = vadd.f32 %v2462, %v605
  %v2553 = vadd.f32 %v2464, %v609
  %v2554 = vmul.f32 %v2550, 0.5
  %v2555 = vtanh.pop %v2554
  %v2556 = vmul.f32 %v2555, 0.5
  %v2557 = vadd.f32 %v2556, 0.5
  %v2558 = vmul.f32 %v2551, 0.5
  %v2559 = vtanh.pop %v2558
  %v2560 = vmul.f32 %v2559, 0.5
  %v2561 = vadd.f32 %v2560, 0.5
  %v2562 = vtanh.pop %v2552
  %v2563 = vmul.f32 %v2553, 0.5
  %v2564 = vtanh.pop %v2563
  %v2565 = vmul.f32 %v2564, 0.5
  %v2566 = vadd.f32 %v2565, 0.5
  %v2567 = vmul.f32 %v2561, %v2350
  %v2568 = vmul.f32 %v2557, %v2562
  %v2569 = vadd.f32 %v2567, %v2568
  %v2570 = vtanh.pop %v2569
  %v2571 = vmul.f32 %v2566, %v2570
  %s2572 = scalar_lea.vmem [#allocation3], 40
  %2573 = vst [vmem:[%s2572] sm:$0xff] %v2571
  %s2574 = smul.u32 6, 4
  %s2575 = smul.addr %s2574, 8
  %s2576 = scalar_lea.vmem [#allocation2], %s2575
  %v2577 = vld [vmem:[%s2576] sm:$0xff]
  %v2578 = vld [vmem:[%s2576 + $0x8] sm:$0xff]
  %v2579 = vld [vmem:[%s2576 + $0x10] sm:$0xff]
  %v2580 = vld [vmem:[%s2576 + $0x18] sm:$0xff]
  %v2581 = vadd.f32 %v2577, %v2503
  %v2582 = vadd.f32 %v2578, %v2505
  %v2583 = vadd.f32 %v2579, %v2544
  %v2584 = vadd.f32 %v2580, %v2546
  %v2585 = vmul.f32 %v2581, 0.5
  %v2586 = vtanh.pop %v2585
  %v2587 = vmul.f32 %v2586, 0.5
  %v2588 = vadd.f32 %v2587, 0.5
  %v2589 = vmul.f32 %v2582, 0.5
  %v2590 = vtanh.pop %v2589
  %v2591 = vmul.f32 %v2590, 0.5
  %v2592 = vadd.f32 %v2591, 0.5
  %v2593 = vtanh.pop %v2583
  %v2594 = vmul.f32 %v2584, 0.5
  %v2595 = vtanh.pop %v2594
  %v2596 = vmul.f32 %v2595, 0.5
  %v2597 = vadd.f32 %v2596, 0.5
  %v2598 = vmul.f32 %v2592, %v2381
  %v2599 = vmul.f32 %v2588, %v2593
  %v2600 = vadd.f32 %v2598, %v2599
  %v2601 = vtanh.pop %v2600
  %v2602 = vmul.f32 %v2597, %v2601
  %v2603 = vpack.c.bf16 %v2602, %v2602
  %v2604 = vpack.c.bf16 %v2571, %v2571
  %2605 = vmatprep.subr.bf16.mxu0 %v1093
  %2606 = vmatpush1.bf16.msra.mxu0 %v1092
  %2607 = vmatprep.subr.bf16.mxu0 %v1085
  %2608 = vmatpush1.bf16.msra.mxu0 %v1084
  %2609 = vmatprep.subr.bf16.mxu0 %v1077
  %2610 = vmatpush1.bf16.msra.mxu0 %v1076
  %2611 = vmatprep.subr.bf16.mxu0 %v1069
  %2612 = vmatpush1.bf16.msra.mxu0 %v1068
  %2613 = vmatprep.subr.bf16.mxu0 %v1061
  %2614 = vmatpush1.bf16.msra.mxu0 %v1060
  %2615 = vmatprep.subr.bf16.mxu0 %v1053
  %2616 = vmatpush1.bf16.msra.mxu0 %v1052
  %2617 = vmatprep.subr.bf16.mxu0 %v1045
  %2618 = vmatpush1.bf16.msra.mxu0 %v1044
  %2619 = vmatprep.subr.bf16.mxu0 %v1037
  %2620 = vmatpush1.bf16.msra.mxu0 %v1036
  %2621 = vmatprep.subr.bf16.mxu0 %v1157
  %2622 = vmatpush2.bf16.msra.mxu0 %v1156
  %2623 = vmatprep.subr.bf16.mxu0 %v1149
  %2624 = vmatpush2.bf16.msra.mxu0 %v1148
  %2625 = vmatprep.subr.bf16.mxu0 %v1141
  %2626 = vmatpush2.bf16.msra.mxu0 %v1140
  %2627 = vmatprep.subr.bf16.mxu0 %v1133
  %2628 = vmatpush2.bf16.msra.mxu0 %v1132
  %2629 = vmatprep.subr.bf16.mxu0 %v1125
  %2630 = vmatpush2.bf16.msra.mxu0 %v1124
  %2631 = vmatprep.subr.bf16.mxu0 %v1117
  %2632 = vmatpush2.bf16.msra.mxu0 %v1116
  %2633 = vmatprep.subr.bf16.mxu0 %v1109
  %2634 = vmatpush2.bf16.msra.mxu0 %v1108
  %2635 = vmatprep.subr.bf16.mxu0 %v1101
  %2636 = vmatpush2.bf16.msra.mxu0 %v1100
  %2637 = vmatprep.mubr.bf16.mxu0 %v2604
  %2638 = vmatmul.mubr.bf16.gmra.mxu0 %v2603
  %v2639 = vpop.f32.mrf.mxu0
  %v2640 = vadd.f32 0.0, %v2639
  %v2641 = vpop.f32.mrf.mxu0
  %v2642 = vadd.f32 0.0, %v2641
  %v2643 = vpop.f32.mrf.mxu0
  %v2644 = vpop.f32.mrf.mxu0
  %2645 = vdwg.mxu0
  %2646 = vmatprep.subr.bf16.mxu0 %v1095
  %2647 = vmatpush1.bf16.msra.mxu0 %v1094
  %2648 = vmatprep.subr.bf16.mxu0 %v1087
  %2649 = vmatpush1.bf16.msra.mxu0 %v1086
  %2650 = vmatprep.subr.bf16.mxu0 %v1079
  %2651 = vmatpush1.bf16.msra.mxu0 %v1078
  %2652 = vmatprep.subr.bf16.mxu0 %v1071
  %2653 = vmatpush1.bf16.msra.mxu0 %v1070
  %2654 = vmatprep.subr.bf16.mxu0 %v1063
  %2655 = vmatpush1.bf16.msra.mxu0 %v1062
  %2656 = vmatprep.subr.bf16.mxu0 %v1055
  %2657 = vmatpush1.bf16.msra.mxu0 %v1054
  %2658 = vmatprep.subr.bf16.mxu0 %v1047
  %2659 = vmatpush1.bf16.msra.mxu0 %v1046
  %2660 = vmatprep.subr.bf16.mxu0 %v1039
  %2661 = vmatpush1.bf16.msra.mxu0 %v1038
  %2662 = vmatprep.subr.bf16.mxu0 %v1159
  %2663 = vmatpush2.bf16.msra.mxu0 %v1158
  %2664 = vmatprep.subr.bf16.mxu0 %v1151
  %2665 = vmatpush2.bf16.msra.mxu0 %v1150
  %2666 = vmatprep.subr.bf16.mxu0 %v1143
  %2667 = vmatpush2.bf16.msra.mxu0 %v1142
  %2668 = vmatprep.subr.bf16.mxu0 %v1135
  %2669 = vmatpush2.bf16.msra.mxu0 %v1134
  %2670 = vmatprep.subr.bf16.mxu0 %v1127
  %2671 = vmatpush2.bf16.msra.mxu0 %v1126
  %2672 = vmatprep.subr.bf16.mxu0 %v1119
  %2673 = vmatpush2.bf16.msra.mxu0 %v1118
  %2674 = vmatprep.subr.bf16.mxu0 %v1111
  %2675 = vmatpush2.bf16.msra.mxu0 %v1110
  %2676 = vmatprep.subr.bf16.mxu0 %v1103
  %2677 = vmatpush2.bf16.msra.mxu0 %v1102
  %2678 = vmatprep.mubr.bf16.mxu0 %v2604
  %2679 = vmatmul.mubr.bf16.gmra.mxu0 %v2603
  %v2680 = vpop.f32.mrf.mxu0
  %v2681 = vadd.f32 0.0, %v2680
  %v2682 = vpop.f32.mrf.mxu0
  %v2683 = vadd.f32 0.0, %v2682
  %v2684 = vpop.f32.mrf.mxu0
  %v2685 = vpop.f32.mrf.mxu0
  %2686 = vdwg.mxu0
  %2687 = vmatprep.subr.bf16.mxu0 %v1097
  %2688 = vmatpush1.bf16.msra.mxu0 %v1096
  %2689 = vmatprep.subr.bf16.mxu0 %v1089
  %2690 = vmatpush1.bf16.msra.mxu0 %v1088
  %2691 = vmatprep.subr.bf16.mxu0 %v1081
  %2692 = vmatpush1.bf16.msra.mxu0 %v1080
  %2693 = vmatprep.subr.bf16.mxu0 %v1073
  %2694 = vmatpush1.bf16.msra.mxu0 %v1072
  %2695 = vmatprep.subr.bf16.mxu0 %v1065
  %2696 = vmatpush1.bf16.msra.mxu0 %v1064
  %2697 = vmatprep.subr.bf16.mxu0 %v1057
  %2698 = vmatpush1.bf16.msra.mxu0 %v1056
  %2699 = vmatprep.subr.bf16.mxu0 %v1049
  %2700 = vmatpush1.bf16.msra.mxu0 %v1048
  %2701 = vmatprep.subr.bf16.mxu0 %v1041
  %2702 = vmatpush1.bf16.msra.mxu0 %v1040
  %2703 = vmatprep.subr.bf16.mxu0 %v1161
  %2704 = vmatpush2.bf16.msra.mxu0 %v1160
  %2705 = vmatprep.subr.bf16.mxu0 %v1153
  %2706 = vmatpush2.bf16.msra.mxu0 %v1152
  %2707 = vmatprep.subr.bf16.mxu0 %v1145
  %2708 = vmatpush2.bf16.msra.mxu0 %v1144
  %2709 = vmatprep.subr.bf16.mxu0 %v1137
  %2710 = vmatpush2.bf16.msra.mxu0 %v1136
  %2711 = vmatprep.subr.bf16.mxu0 %v1129
  %2712 = vmatpush2.bf16.msra.mxu0 %v1128
  %2713 = vmatprep.subr.bf16.mxu0 %v1121
  %2714 = vmatpush2.bf16.msra.mxu0 %v1120
  %2715 = vmatprep.subr.bf16.mxu0 %v1113
  %2716 = vmatpush2.bf16.msra.mxu0 %v1112
  %2717 = vmatprep.subr.bf16.mxu0 %v1105
  %2718 = vmatpush2.bf16.msra.mxu0 %v1104
  %2719 = vmatprep.mubr.bf16.mxu0 %v2604
  %2720 = vmatmul.mubr.bf16.gmra.mxu0 %v2603
  %v2721 = vpop.f32.mrf.mxu0
  %v2722 = vadd.f32 0.0, %v2721
  %v2723 = vpop.f32.mrf.mxu0
  %v2724 = vadd.f32 0.0, %v2723
  %v2725 = vpop.f32.mrf.mxu0
  %v2726 = vpop.f32.mrf.mxu0
  %2727 = vdwg.mxu0
  %2728 = vmatprep.subr.bf16.mxu0 %v1099
  %2729 = vmatpush1.bf16.msra.mxu0 %v1098
  %2730 = vmatprep.subr.bf16.mxu0 %v1091
  %2731 = vmatpush1.bf16.msra.mxu0 %v1090
  %2732 = vmatprep.subr.bf16.mxu0 %v1083
  %2733 = vmatpush1.bf16.msra.mxu0 %v1082
  %2734 = vmatprep.subr.bf16.mxu0 %v1075
  %2735 = vmatpush1.bf16.msra.mxu0 %v1074
  %2736 = vmatprep.subr.bf16.mxu0 %v1067
  %2737 = vmatpush1.bf16.msra.mxu0 %v1066
  %2738 = vmatprep.subr.bf16.mxu0 %v1059
  %2739 = vmatpush1.bf16.msra.mxu0 %v1058
  %2740 = vmatprep.subr.bf16.mxu0 %v1051
  %2741 = vmatpush1.bf16.msra.mxu0 %v1050
  %2742 = vmatprep.subr.bf16.mxu0 %v1043
  %2743 = vmatpush1.bf16.msra.mxu0 %v1042
  %2744 = vmatprep.subr.bf16.mxu0 %v1163
  %2745 = vmatpush2.bf16.msra.mxu0 %v1162
  %2746 = vmatprep.subr.bf16.mxu0 %v1155
  %2747 = vmatpush2.bf16.msra.mxu0 %v1154
  %2748 = vmatprep.subr.bf16.mxu0 %v1147
  %2749 = vmatpush2.bf16.msra.mxu0 %v1146
  %2750 = vmatprep.subr.bf16.mxu0 %v1139
  %2751 = vmatpush2.bf16.msra.mxu0 %v1138
  %2752 = vmatprep.subr.bf16.mxu0 %v1131
  %2753 = vmatpush2.bf16.msra.mxu0 %v1130
  %2754 = vmatprep.subr.bf16.mxu0 %v1123
  %2755 = vmatpush2.bf16.msra.mxu0 %v1122
  %2756 = vmatprep.subr.bf16.mxu0 %v1115
  %2757 = vmatpush2.bf16.msra.mxu0 %v1114
  %2758 = vmatprep.subr.bf16.mxu0 %v1107
  %2759 = vmatpush2.bf16.msra.mxu0 %v1106
  %2760 = vmatprep.mubr.bf16.mxu0 %v2604
  %2761 = vmatmul.mubr.bf16.gmra.mxu0 %v2603
  %v2762 = vpop.f32.mrf.mxu0
  %v2763 = vadd.f32 0.0, %v2762
  %v2764 = vpop.f32.mrf.mxu0
  %v2765 = vadd.f32 0.0, %v2764
  %v2766 = vpop.f32.mrf.mxu0
  %v2767 = vpop.f32.mrf.mxu0
  %2768 = vdwg.mxu0
  %v2769 = vadd.f32 %v2640, %v597
  %v2770 = vadd.f32 %v2642, %v601
  %v2771 = vadd.f32 %v2681, %v605
  %v2772 = vadd.f32 %v2683, %v609
  %v2773 = vmul.f32 %v2769, 0.5
  %v2774 = vtanh.pop %v2773
  %v2775 = vmul.f32 %v2774, 0.5
  %v2776 = vadd.f32 %v2775, 0.5
  %v2777 = vmul.f32 %v2770, 0.5
  %v2778 = vtanh.pop %v2777
  %v2779 = vmul.f32 %v2778, 0.5
  %v2780 = vadd.f32 %v2779, 0.5
  %v2781 = vtanh.pop %v2771
  %v2782 = vmul.f32 %v2772, 0.5
  %v2783 = vtanh.pop %v2782
  %v2784 = vmul.f32 %v2783, 0.5
  %v2785 = vadd.f32 %v2784, 0.5
  %v2786 = vmul.f32 %v2780, %v2569
  %v2787 = vmul.f32 %v2776, %v2781
  %v2788 = vadd.f32 %v2786, %v2787
  %v2789 = vtanh.pop %v2788
  %v2790 = vmul.f32 %v2785, %v2789
  %s2791 = scalar_lea.vmem [#allocation3], 48
  %2792 = vst [vmem:[%s2791] sm:$0xff] %v2790
  %s2793 = smul.u32 7, 4
  %s2794 = smul.addr %s2793, 8
  %s2795 = scalar_lea.vmem [#allocation2], %s2794
  %v2796 = vld [vmem:[%s2795] sm:$0xff]
  %v2797 = vld [vmem:[%s2795 + $0x8] sm:$0xff]
  %v2798 = vld [vmem:[%s2795 + $0x10] sm:$0xff]
  %v2799 = vld [vmem:[%s2795 + $0x18] sm:$0xff]
  %v2800 = vadd.f32 %v2796, %v2722
  %v2801 = vadd.f32 %v2797, %v2724
  %v2802 = vadd.f32 %v2798, %v2763
  %v2803 = vadd.f32 %v2799, %v2765
  %v2804 = vmul.f32 %v2800, 0.5
  %v2805 = vtanh.pop %v2804
  %v2806 = vmul.f32 %v2805, 0.5
  %v2807 = vadd.f32 %v2806, 0.5
  %v2808 = vmul.f32 %v2801, 0.5
  %v2809 = vtanh.pop %v2808
  %v2810 = vmul.f32 %v2809, 0.5
  %v2811 = vadd.f32 %v2810, 0.5
  %v2812 = vtanh.pop %v2802
  %v2813 = vmul.f32 %v2803, 0.5
  %v2814 = vtanh.pop %v2813
  %v2815 = vmul.f32 %v2814, 0.5
  %v2816 = vadd.f32 %v2815, 0.5
  %v2817 = vmul.f32 %v2811, %v2600
  %v2818 = vmul.f32 %v2807, %v2812
  %v2819 = vadd.f32 %v2817, %v2818
  %v2820 = vtanh.pop %v2819
  %v2821 = vmul.f32 %v2816, %v2820
  %v2822 = vpack.c.bf16 %v2821, %v2821
  %v2823 = vpack.c.bf16 %v2790, %v2790
  %2824 = vmatprep.subr.bf16.mxu0 %v1093
  %2825 = vmatpush1.bf16.msra.mxu0 %v1092
  %2826 = vmatprep.subr.bf16.mxu0 %v1085
  %2827 = vmatpush1.bf16.msra.mxu0 %v1084
  %2828 = vmatprep.subr.bf16.mxu0 %v1077
  %2829 = vmatpush1.bf16.msra.mxu0 %v1076
  %2830 = vmatprep.subr.bf16.mxu0 %v1069
  %2831 = vmatpush1.bf16.msra.mxu0 %v1068
  %2832 = vmatprep.subr.bf16.mxu0 %v1061
  %2833 = vmatpush1.bf16.msra.mxu0 %v1060
  %2834 = vmatprep.subr.bf16.mxu0 %v1053
  %2835 = vmatpush1.bf16.msra.mxu0 %v1052
  %2836 = vmatprep.subr.bf16.mxu0 %v1045
  %2837 = vmatpush1.bf16.msra.mxu0 %v1044
  %2838 = vmatprep.subr.bf16.mxu0 %v1037
  %2839 = vmatpush1.bf16.msra.mxu0 %v1036
  %2840 = vmatprep.subr.bf16.mxu0 %v1157
  %2841 = vmatpush2.bf16.msra.mxu0 %v1156
  %2842 = vmatprep.subr.bf16.mxu0 %v1149
  %2843 = vmatpush2.bf16.msra.mxu0 %v1148
  %2844 = vmatprep.subr.bf16.mxu0 %v1141
  %2845 = vmatpush2.bf16.msra.mxu0 %v1140
  %2846 = vmatprep.subr.bf16.mxu0 %v1133
  %2847 = vmatpush2.bf16.msra.mxu0 %v1132
  %2848 = vmatprep.subr.bf16.mxu0 %v1125
  %2849 = vmatpush2.bf16.msra.mxu0 %v1124
  %2850 = vmatprep.subr.bf16.mxu0 %v1117
  %2851 = vmatpush2.bf16.msra.mxu0 %v1116
  %2852 = vmatprep.subr.bf16.mxu0 %v1109
  %2853 = vmatpush2.bf16.msra.mxu0 %v1108
  %2854 = vmatprep.subr.bf16.mxu0 %v1101
  %2855 = vmatpush2.bf16.msra.mxu0 %v1100
  %2856 = vmatprep.mubr.bf16.mxu0 %v2823
  %2857 = vmatmul.mubr.bf16.gmra.mxu0 %v2822
  %v2858 = vpop.f32.mrf.mxu0
  %v2859 = vadd.f32 0.0, %v2858
  %v2860 = vpop.f32.mrf.mxu0
  %v2861 = vadd.f32 0.0, %v2860
  %v2862 = vpop.f32.mrf.mxu0
  %v2863 = vpop.f32.mrf.mxu0
  %2864 = vdwg.mxu0
  %2865 = vmatprep.subr.bf16.mxu0 %v1095
  %2866 = vmatpush1.bf16.msra.mxu0 %v1094
  %2867 = vmatprep.subr.bf16.mxu0 %v1087
  %2868 = vmatpush1.bf16.msra.mxu0 %v1086
  %2869 = vmatprep.subr.bf16.mxu0 %v1079
  %2870 = vmatpush1.bf16.msra.mxu0 %v1078
  %2871 = vmatprep.subr.bf16.mxu0 %v1071
  %2872 = vmatpush1.bf16.msra.mxu0 %v1070
  %2873 = vmatprep.subr.bf16.mxu0 %v1063
  %2874 = vmatpush1.bf16.msra.mxu0 %v1062
  %2875 = vmatprep.subr.bf16.mxu0 %v1055
  %2876 = vmatpush1.bf16.msra.mxu0 %v1054
  %2877 = vmatprep.subr.bf16.mxu0 %v1047
  %2878 = vmatpush1.bf16.msra.mxu0 %v1046
  %2879 = vmatprep.subr.bf16.mxu0 %v1039
  %2880 = vmatpush1.bf16.msra.mxu0 %v1038
  %2881 = vmatprep.subr.bf16.mxu0 %v1159
  %2882 = vmatpush2.bf16.msra.mxu0 %v1158
  %2883 = vmatprep.subr.bf16.mxu0 %v1151
  %2884 = vmatpush2.bf16.msra.mxu0 %v1150
  %2885 = vmatprep.subr.bf16.mxu0 %v1143
  %2886 = vmatpush2.bf16.msra.mxu0 %v1142
  %2887 = vmatprep.subr.bf16.mxu0 %v1135
  %2888 = vmatpush2.bf16.msra.mxu0 %v1134
  %2889 = vmatprep.subr.bf16.mxu0 %v1127
  %2890 = vmatpush2.bf16.msra.mxu0 %v1126
  %2891 = vmatprep.subr.bf16.mxu0 %v1119
  %2892 = vmatpush2.bf16.msra.mxu0 %v1118
  %2893 = vmatprep.subr.bf16.mxu0 %v1111
  %2894 = vmatpush2.bf16.msra.mxu0 %v1110
  %2895 = vmatprep.subr.bf16.mxu0 %v1103
  %2896 = vmatpush2.bf16.msra.mxu0 %v1102
  %2897 = vmatprep.mubr.bf16.mxu0 %v2823
  %2898 = vmatmul.mubr.bf16.gmra.mxu0 %v2822
  %v2899 = vpop.f32.mrf.mxu0
  %v2900 = vadd.f32 0.0, %v2899
  %v2901 = vpop.f32.mrf.mxu0
  %v2902 = vadd.f32 0.0, %v2901
  %v2903 = vpop.f32.mrf.mxu0
  %v2904 = vpop.f32.mrf.mxu0
  %2905 = vdwg.mxu0
  %2906 = vmatprep.subr.bf16.mxu0 %v1097
  %2907 = vmatpush1.bf16.msra.mxu0 %v1096
  %2908 = vmatprep.subr.bf16.mxu0 %v1089
  %2909 = vmatpush1.bf16.msra.mxu0 %v1088
  %2910 = vmatprep.subr.bf16.mxu0 %v1081
  %2911 = vmatpush1.bf16.msra.mxu0 %v1080
  %2912 = vmatprep.subr.bf16.mxu0 %v1073
  %2913 = vmatpush1.bf16.msra.mxu0 %v1072
  %2914 = vmatprep.subr.bf16.mxu0 %v1065
  %2915 = vmatpush1.bf16.msra.mxu0 %v1064
  %2916 = vmatprep.subr.bf16.mxu0 %v1057
  %2917 = vmatpush1.bf16.msra.mxu0 %v1056
  %2918 = vmatprep.subr.bf16.mxu0 %v1049
  %2919 = vmatpush1.bf16.msra.mxu0 %v1048
  %2920 = vmatprep.subr.bf16.mxu0 %v1041
  %2921 = vmatpush1.bf16.msra.mxu0 %v1040
  %2922 = vmatprep.subr.bf16.mxu0 %v1161
  %2923 = vmatpush2.bf16.msra.mxu0 %v1160
  %2924 = vmatprep.subr.bf16.mxu0 %v1153
  %2925 = vmatpush2.bf16.msra.mxu0 %v1152
  %2926 = vmatprep.subr.bf16.mxu0 %v1145
  %2927 = vmatpush2.bf16.msra.mxu0 %v1144
  %2928 = vmatprep.subr.bf16.mxu0 %v1137
  %2929 = vmatpush2.bf16.msra.mxu0 %v1136
  %2930 = vmatprep.subr.bf16.mxu0 %v1129
  %2931 = vmatpush2.bf16.msra.mxu0 %v1128
  %2932 = vmatprep.subr.bf16.mxu0 %v1121
  %2933 = vmatpush2.bf16.msra.mxu0 %v1120
  %2934 = vmatprep.subr.bf16.mxu0 %v1113
  %2935 = vmatpush2.bf16.msra.mxu0 %v1112
  %2936 = vmatprep.subr.bf16.mxu0 %v1105
  %2937 = vmatpush2.bf16.msra.mxu0 %v1104
  %2938 = vmatprep.mubr.bf16.mxu0 %v2823
  %2939 = vmatmul.mubr.bf16.gmra.mxu0 %v2822
  %v2940 = vpop.f32.mrf.mxu0
  %v2941 = vadd.f32 0.0, %v2940
  %v2942 = vpop.f32.mrf.mxu0
  %v2943 = vadd.f32 0.0, %v2942
  %v2944 = vpop.f32.mrf.mxu0
  %v2945 = vpop.f32.mrf.mxu0
  %2946 = vdwg.mxu0
  %2947 = vmatprep.subr.bf16.mxu0 %v1099
  %2948 = vmatpush1.bf16.msra.mxu0 %v1098
  %2949 = vmatprep.subr.bf16.mxu0 %v1091
  %2950 = vmatpush1.bf16.msra.mxu0 %v1090
  %2951 = vmatprep.subr.bf16.mxu0 %v1083
  %2952 = vmatpush1.bf16.msra.mxu0 %v1082
  %2953 = vmatprep.subr.bf16.mxu0 %v1075
  %2954 = vmatpush1.bf16.msra.mxu0 %v1074
  %2955 = vmatprep.subr.bf16.mxu0 %v1067
  %2956 = vmatpush1.bf16.msra.mxu0 %v1066
  %2957 = vmatprep.subr.bf16.mxu0 %v1059
  %2958 = vmatpush1.bf16.msra.mxu0 %v1058
  %2959 = vmatprep.subr.bf16.mxu0 %v1051
  %2960 = vmatpush1.bf16.msra.mxu0 %v1050
  %2961 = vmatprep.subr.bf16.mxu0 %v1043
  %2962 = vmatpush1.bf16.msra.mxu0 %v1042
  %2963 = vmatprep.subr.bf16.mxu0 %v1163
  %2964 = vmatpush2.bf16.msra.mxu0 %v1162
  %2965 = vmatprep.subr.bf16.mxu0 %v1155
  %2966 = vmatpush2.bf16.msra.mxu0 %v1154
  %2967 = vmatprep.subr.bf16.mxu0 %v1147
  %2968 = vmatpush2.bf16.msra.mxu0 %v1146
  %2969 = vmatprep.subr.bf16.mxu0 %v1139
  %2970 = vmatpush2.bf16.msra.mxu0 %v1138
  %2971 = vmatprep.subr.bf16.mxu0 %v1131
  %2972 = vmatpush2.bf16.msra.mxu0 %v1130
  %2973 = vmatprep.subr.bf16.mxu0 %v1123
  %2974 = vmatpush2.bf16.msra.mxu0 %v1122
  %2975 = vmatprep.subr.bf16.mxu0 %v1115
  %2976 = vmatpush2.bf16.msra.mxu0 %v1114
  %2977 = vmatprep.subr.bf16.mxu0 %v1107
  %2978 = vmatpush2.bf16.msra.mxu0 %v1106
  %2979 = vmatprep.mubr.bf16.mxu0 %v2823
  %2980 = vmatmul.mubr.bf16.gmra.mxu0 %v2822
  %v2981 = vpop.f32.mrf.mxu0
  %v2982 = vadd.f32 0.0, %v2981
  %v2983 = vpop.f32.mrf.mxu0
  %v2984 = vadd.f32 0.0, %v2983
  %v2985 = vpop.f32.mrf.mxu0
  %v2986 = vpop.f32.mrf.mxu0
  %2987 = vdwg.mxu0
  %v2988 = vadd.f32 %v2859, %v597
  %v2989 = vadd.f32 %v2861, %v601
  %v2990 = vadd.f32 %v2900, %v605
  %v2991 = vadd.f32 %v2902, %v609
  %v2992 = vmul.f32 %v2988, 0.5
  %v2993 = vtanh.pop %v2992
  %v2994 = vmul.f32 %v2993, 0.5
  %v2995 = vadd.f32 %v2994, 0.5
  %v2996 = vmul.f32 %v2989, 0.5
  %v2997 = vtanh.pop %v2996
  %v2998 = vmul.f32 %v2997, 0.5
  %v2999 = vadd.f32 %v2998, 0.5
  %v3000 = vtanh.pop %v2990
  %v3001 = vmul.f32 %v2991, 0.5
  %v3002 = vtanh.pop %v3001
  %v3003 = vmul.f32 %v3002, 0.5
  %v3004 = vadd.f32 %v3003, 0.5
  %v3005 = vmul.f32 %v2999, %v2788
  %v3006 = vmul.f32 %v2995, %v3000
  %v3007 = vadd.f32 %v3005, %v3006
  %v3008 = vtanh.pop %v3007
  %v3009 = vmul.f32 %v3004, %v3008
  %s3010 = scalar_lea.vmem [#allocation3], 56
  %3011 = vst [vmem:[%s3010] sm:$0xff] %v3009
  %3012 = vst [vmem:[#allocation4] sm:$0xff] %v2941
  %3013 = vst [vmem:[#allocation4 + $0x8] sm:$0xff] %v2943
  %3014 = vst [vmem:[#allocation4 + $0x10] sm:$0xff] %v2982
  %3015 = vst [vmem:[#allocation4 + $0x18] sm:$0xff] %v2984
  %3016 = vst [vmem:[#allocation5] sm:$0xff] %v2819
  %3017 = vst [vmem:[#allocation6] sm:$0xff] %v3009
  %3018 = vst [vmem:[#allocation7] sm:$0xff] %v3007
  // Predicated region
  $region34: #{_lambda_.1} parent=0 // pred_check
    %p3019 = pneg %p29
  $region35: #{_lambda_.1} parent=0 // pred_check_branch
    %3021 = sbr.rel (%p3019) target = $region37
  $region36: #{_lambda_.1} parent=0 // pred_region
    %v3022 = vld [vmem:[#allocation3 + $0x38] sm:$0xff]
    %3023 = vst [vmem:[%s8] sm:$0xff] %v3022
  $region37: #{_lambda_.1} parent=0 // pred_fallthru
    _
  %v3024 = vld [vmem:[#allocation3] sm:$0xff]
  %v3025 = vld [vmem:[#allocation3 + $0x8] sm:$0xff]
  %v3026 = vld [vmem:[#allocation3 + $0x10] sm:$0xff]
  %v3027 = vld [vmem:[#allocation3 + $0x18] sm:$0xff]
  %v3028 = vld [vmem:[#allocation3 + $0x20] sm:$0xff]
  %v3029 = vld [vmem:[#allocation3 + $0x28] sm:$0xff]
  %v3030 = vld [vmem:[#allocation3 + $0x30] sm:$0xff]
  %v3031 = vld [vmem:[#allocation3 + $0x38] sm:$0xff]
  %v3032 = vpack.c.bf16 %v3025, %v3024
  %v3033 = vpack.c.bf16 %v3027, %v3026
  %v3034 = vpack.c.bf16 %v3029, %v3028
  %v3035 = vpack.c.bf16 %v3031, %v3030
  %v3036 = vld [vmem:[%s5] sm:$0xf]
  %v3037 = vld [vmem:[%s5 + $0x4] sm:$0xf]
  %v3038 = vld [vmem:[%s5 + $0x8] sm:$0xf]
  %v3039 = vld [vmem:[%s5 + $0xc] sm:$0xf]
  %v3040 = vld [vmem:[%s5 + $0x10] sm:$0xf]
  %v3041 = vld [vmem:[%s5 + $0x14] sm:$0xf]
  %v3042 = vld [vmem:[%s5 + $0x18] sm:$0xf]
  %v3043 = vld [vmem:[%s5 + $0x1c] sm:$0xf]
  %v3044 = vld [vmem:[%s5 + $0x20] sm:$0xf]
  %v3045 = vld [vmem:[%s5 + $0x24] sm:$0xf]
  %v3046 = vld [vmem:[%s5 + $0x28] sm:$0xf]
  %v3047 = vld [vmem:[%s5 + $0x2c] sm:$0xf]
  %v3048 = vld [vmem:[%s5 + $0x30] sm:$0xf]
  %v3049 = vld [vmem:[%s5 + $0x34] sm:$0xf]
  %v3050 = vld [vmem:[%s5 + $0x38] sm:$0xf]
  %v3051 = vld [vmem:[%s5 + $0x3c] sm:$0xf]
  %v3052 = vld [vmem:[%s6] sm:$0x1]
  %v3054 = vlaneseq
  %v3055 = vshrl.u32 %v3054, 7
  %v3056 = vsub.s32 0, %v3055
  %v3057 = vrot.slane %v3052, %v3056
  %v3075 = vunpack.c.l.b16 %v3036
  %v3076 = vunpack.c.l.b16 %v3037
  %v3077 = vunpack.c.l.b16 %v3038
  %v3078 = vunpack.c.l.b16 %v3039
  %v3079 = vunpack.c.l.b16 %v3040
  %v3080 = vunpack.c.l.b16 %v3041
  %v3081 = vunpack.c.l.b16 %v3042
  %v3082 = vunpack.c.l.b16 %v3043
  %v3083 = vunpack.c.l.b16 %v3044
  %v3084 = vunpack.c.l.b16 %v3045
  %v3085 = vunpack.c.l.b16 %v3046
  %v3086 = vunpack.c.l.b16 %v3047
  %v3087 = vunpack.c.l.b16 %v3048
  %v3088 = vunpack.c.l.b16 %v3049
  %v3089 = vunpack.c.l.b16 %v3050
  %v3090 = vunpack.c.l.b16 %v3051
  %v3091 = vpack.c.b16 %v3076, %v3075
  %v3092 = vpack.c.b16 %v3078, %v3077
  %v3093 = vpack.c.b16 %v3080, %v3079
  %v3094 = vpack.c.b16 %v3082, %v3081
  %v3095 = vpack.c.b16 %v3084, %v3083
  %v3096 = vpack.c.b16 %v3086, %v3085
  %v3097 = vpack.c.b16 %v3088, %v3087
  %v3098 = vpack.c.b16 %v3090, %v3089
  %3107 = vmatprep.subr.bf16.mxu0 0
  %3108 = vmatpush1.bf16.msra.mxu0 %v3098
  %3109 = vmatprep.subr.bf16.mxu0 0
  %3110 = vmatpush1.bf16.msra.mxu0 %v3097
  %3111 = vmatprep.subr.bf16.mxu0 0
  %3112 = vmatpush1.bf16.msra.mxu0 %v3096
  %3113 = vmatprep.subr.bf16.mxu0 0
  %3114 = vmatpush1.bf16.msra.mxu0 %v3095
  %3115 = vmatprep.subr.bf16.mxu0 0
  %3116 = vmatpush1.bf16.msra.mxu0 %v3094
  %3117 = vmatprep.subr.bf16.mxu0 0
  %3118 = vmatpush1.bf16.msra.mxu0 %v3093
  %3119 = vmatprep.subr.bf16.mxu0 0
  %3120 = vmatpush1.bf16.msra.mxu0 %v3092
  %3121 = vmatprep.subr.bf16.mxu0 0
  %3122 = vmatpush1.bf16.msra.mxu0 %v3091
  %3123 = vmatprep.subr.bf16.mxu0 0
  %3124 = vmatpush2.bf16.msra.mxu0 0
  %3125 = vmatprep.subr.bf16.mxu0 0
  %3126 = vmatpush2.bf16.msra.mxu0 0
  %3127 = vmatprep.subr.bf16.mxu0 0
  %3128 = vmatpush2.bf16.msra.mxu0 0
  %3129 = vmatprep.subr.bf16.mxu0 0
  %3130 = vmatpush2.bf16.msra.mxu0 0
  %3131 = vmatprep.subr.bf16.mxu0 0
  %3132 = vmatpush2.bf16.msra.mxu0 0
  %3133 = vmatprep.subr.bf16.mxu0 0
  %3134 = vmatpush2.bf16.msra.mxu0 0
  %3135 = vmatprep.subr.bf16.mxu0 0
  %3136 = vmatpush2.bf16.msra.mxu0 0
  %3137 = vmatprep.subr.bf16.mxu0 0
  %3138 = vmatpush2.bf16.msra.mxu0 0
  %3139 = vmatprep.mubr.bf16.mxu0 0
  %3140 = vmatmul.mubr.bf16.gmra.mxu0 %v3032
  %v3141 = vpop.f32.mrf.mxu0
  %v3142 = vadd.f32 %v3057, %v3141
  %v3143 = vpop.f32.mrf.mxu0
  %v3144 = vpop.f32.mrf.mxu0
  %v3145 = vadd.f32 %v3057, %v3144
  %v3146 = vpop.f32.mrf.mxu0
  %3147 = vmatprep.mubr.bf16.mxu0 0
  %3148 = vmatmul.mubr.bf16.gmra.mxu0 %v3033
  %v3149 = vpop.f32.mrf.mxu0
  %v3150 = vadd.f32 %v3057, %v3149
  %v3151 = vpop.f32.mrf.mxu0
  %v3152 = vpop.f32.mrf.mxu0
  %v3153 = vadd.f32 %v3057, %v3152
  %v3154 = vpop.f32.mrf.mxu0
  %3155 = vmatprep.mubr.bf16.mxu0 0
  %3156 = vmatmul.mubr.bf16.gmra.mxu0 %v3034
  %v3157 = vpop.f32.mrf.mxu0
  %v3158 = vadd.f32 %v3057, %v3157
  %v3159 = vpop.f32.mrf.mxu0
  %v3160 = vpop.f32.mrf.mxu0
  %v3161 = vadd.f32 %v3057, %v3160
  %v3162 = vpop.f32.mrf.mxu0
  %3163 = vmatprep.mubr.bf16.mxu0 0
  %3164 = vmatmul.mubr.bf16.gmra.mxu0 %v3035
  %v3165 = vpop.f32.mrf.mxu0
  %v3166 = vadd.f32 %v3057, %v3165
  %v3167 = vpop.f32.mrf.mxu0
  %v3168 = vpop.f32.mrf.mxu0
  %v3169 = vadd.f32 %v3057, %v3168
  %v3170 = vpop.f32.mrf.mxu0
  %3171 = vdwg.mxu0
  %3172 = vst [vmem:[%s7] sm:$0xff] %v3142
  %3173 = vst [vmem:[%s7 + $0x8] sm:$0xff] %v3145
  %3174 = vst [vmem:[%s7 + $0x10] sm:$0xff] %v3150
  %3175 = vst [vmem:[%s7 + $0x18] sm:$0xff] %v3153
  %3176 = vst [vmem:[%s7 + $0x20] sm:$0xff] %v3158
  %3177 = vst [vmem:[%s7 + $0x28] sm:$0xff] %v3161
  %3178 = vst [vmem:[%s7 + $0x30] sm:$0xff] %v3166
  %3179 = vst [vmem:[%s7 + $0x38] sm:$0xff] %v3169
  // Predicated region
  $region38: #{_lambda_.1} parent=0 // pred_check
    _
  $region39: #{_lambda_.1} parent=0 // pred_check_branch
    %3181 = sbr.rel (0) target = $region41
  $region40: #{_lambda_.1} parent=0 // pred_region
    _
  $region41: #{_lambda_.1} parent=0 // pred_fallthru
    _
  // Predicated region
  $region42: #{_lambda_.1} parent=0 // pred_check
    _
  $region43: #{_lambda_.1} parent=0 // pred_check_branch
    %3183 = sbr.rel (0) target = $region45
  $region44: #{_lambda_.1} parent=0 // pred_region
    _
  $region45: #{_lambda_.1} parent=0 // pred_fallthru
    _
  // Predicated region
  $region46: #{_lambda_.1} parent=0 // pred_check
    _
  $region47: #{_lambda_.1} parent=0 // pred_check_branch
    %3185 = sbr.rel (0) target = $region49
  $region48: #{_lambda_.1} parent=0 // pred_region
    _
  $region49: #{_lambda_.1} parent=0 // pred_fallthru
    _
  // Predicated region
  $region50: #{_lambda_.1} parent=0 // pred_check
    _
  $region51: #{_lambda_.1} parent=0 // pred_check_branch
    %3187 = sbr.rel (0) target = $region53
  $region52: #{_lambda_.1} parent=0 // pred_region
    _
  $region53: #{_lambda_.1} parent=0 // pred_fallthru
    _

</llo_original>
